<compile_context>
chip_gen: v7x
topology: tpu7x:2x2x1
jax: 0.10.0
libtpu: 0.0.40
codegen_flags: <defaults>
</compile_context>

<pallas_src>
import jax
import jax.numpy as jnp
from jax.experimental import pallas as pl
from jax.experimental.pallas import tpu as pltpu


B_TILE = 8          # images per grid step (M≈252 for conv1: good on v5e/v6e/v7x)


# ---------------------------------------------------------------------------
# Pallas kernel (one grid step == B_TILE images, batch folded into matmul M)
# ---------------------------------------------------------------------------
def _dot(a, b):
    return jnp.dot(a, b, preferred_element_type=jnp.float32)


def _lenet5_kernel(x_ref,
                   w1_ref, b1_ref, pw1_ref, ph1b_ref,
                   w2_ref, b2_ref, pw2_ref, ph2f_ref,
                   w3_ref, b3_ref,
                   wf1_ref, bf1_ref, wf2_ref, bf2_ref,
                   o_ref,
                   t1_ref, t2_ref, f_ref, h1_ref, g_ref):
    # ---- block 1: Conv(3,6,5) -> Tanh -> AvgPool(2,2) ----------------------
    wc1 = x_ref.shape[1]                       # W*Cin  (96)
    m1 = t1_ref.shape[0]                       # B*H - (kh-1) (252)
    kh1 = t1_ref.shape[1] // wc1               # 5
    for di in range(kh1):                      # tap-fused K assembly: 5 contiguous slabs
        t1_ref[:, di * wc1:(di + 1) * wc1] = x_ref[di:di + m1, :]
    a1 = jnp.tanh(_dot(t1_ref[...], w1_ref[...]) + b1_ref[...])       # (m1, 28*6)
    # column (width) pool then per-image row pool (block selection matrix)
    h1_ref[...] = _dot(ph1b_ref[...], _dot(a1, pw1_ref[...]))         # (B*14, 14*6)

    # ---- block 2: Conv(6,16,5) -> Tanh -> AvgPool(2,2) ---------------------
    wc2 = h1_ref.shape[1]                      # 14*6 (84)
    m2 = t2_ref.shape[0]                       # B*14 - (kh-1) (108)
    kh2 = t2_ref.shape[1] // wc2               # 5
    for di in range(kh2):
        t2_ref[:, di * wc2:(di + 1) * wc2] = h1_ref[di:di + m2, :]
    a2 = jnp.tanh(_dot(t2_ref[...], w2_ref[...]) + b2_ref[...])       # (m2, 10*16)
    # column pool + row pool fused with the per-image flatten selector
    g_ref[...] = _dot(ph2f_ref[...], _dot(a2, pw2_ref[...]))          # (5*B, 5*16)

    # ---- head: Conv(16,120,5)->Tanh->Flatten->FC(120,84)->Tanh->FC(84,10) --
    b_tile = f_ref.shape[0]
    wc3 = g_ref.shape[1]                       # 5*16 (80)
    kh3 = f_ref.shape[1] // wc3                # 5
    for r in range(kh3):                       # finish per-image flatten: (B, 400)
        f_ref[:, r * wc3:(r + 1) * wc3] = g_ref[r * b_tile:(r + 1) * b_tile, :]
    a3 = jnp.tanh(_dot(f_ref[...], w3_ref[...]) + b3_ref[...])        # (B, 120)
    a4 = jnp.tanh(_dot(a3, wf1_ref[...]) + bf1_ref[...])              # (B, 84)
    o_ref[...] = (_dot(a4, wf2_ref[...]) + bf2_ref[...]).astype(o_ref.dtype)


# ---------------------------------------------------------------------------
# One-time weight preprocessing (plain JAX, outside the kernel)
# ---------------------------------------------------------------------------
def _fused_band_weights(w, w_in):
    """PyTorch OIHW conv weight -> (kh*w_in*Cin, Wo*Cout) tap-fused band matrix."""
    co_n, ci_n, kh, kw = w.shape
    wo = w_in - kw + 1
    di, dj, ci, co, ow = jnp.meshgrid(
        jnp.arange(kh), jnp.arange(kw), jnp.arange(ci_n),
        jnp.arange(co_n), jnp.arange(wo), indexing="ij")
    band = jnp.zeros((kh * w_in * ci_n, wo * co_n), w.dtype)
    return band.at[di * (w_in * ci_n) + (ow + dj) * ci_n + ci,
                   ow * co_n + co].set(w[co, ci, di, dj])


def _col_pool_mat(w_in, c, dtype=jnp.float32):
    """Right matmul implementing the width half of AvgPool2d(2,2) on (., W*C)."""
    wo = w_in // 2
    owg, cg = jnp.meshgrid(jnp.arange(wo), jnp.arange(c), indexing="ij")
    pw = (jnp.zeros((w_in * c, wo * c), dtype)
          .at[2 * owg * c + cg, owg * c + cg].set(0.5)
          .at[(2 * owg + 1) * c + cg, owg * c + cg].set(0.5))
    return pw


def _row_pool_block(b_tile, h_out, src_stride, src_rows, dtype=jnp.float32):
    """(b_tile*h_out, src_rows) left matmul: per-image height pooling.

    Row b*h_out+p averages source rows b*src_stride + 2p and +2p+1; rows of the
    (batch-folded, stride src_stride) source that are never referenced are the
    cross-image garbage rows produced by the tap-slab trick.
    """
    bg, pg = jnp.meshgrid(jnp.arange(b_tile), jnp.arange(h_out), indexing="ij")
    m = jnp.zeros((b_tile * h_out, src_rows), dtype)
    m = m.at[bg * h_out + pg, bg * src_stride + 2 * pg].set(0.5)
    m = m.at[bg * h_out + pg, bg * src_stride + 2 * pg + 1].set(0.5)
    return m


def _pool_flatten_block(b_tile, kh, src_stride, src_rows, dtype=jnp.float32):
    """(kh*b_tile, src_rows) left matmul: height pooling + per-image flatten.

    Row k*b_tile+b averages source rows b*src_stride + 2k and +2k+1; the kernel
    then scatters the kh row groups into column blocks of the (B, kh*W*C) head
    input.
    """
    kg, bg = jnp.meshgrid(jnp.arange(kh), jnp.arange(b_tile), indexing="ij")
    m = jnp.zeros((kh * b_tile, src_rows), dtype)
    m = m.at[kg * b_tile + bg, bg * src_stride + 2 * kg].set(0.5)
    m = m.at[kg * b_tile + bg, bg * src_stride + 2 * kg + 1].set(0.5)
    return m


def prepare_kernel_params(params, H, W, b_tile=B_TILE):
    (w1, b1), (w2, b2), (w3, b3) = params["conv1"], params["conv2"], params["conv3"]
    (wf1, bf1), (wf2, bf2) = params["fc1"], params["fc2"]
    k = w1.shape[-1]                           # 5
    c1, c2 = w1.shape[0], w2.shape[0]          # 6, 16
    H1, W1 = H - k + 1, W - k + 1              # conv1 out (28, 28)
    Hp1, Wp1 = H1 // 2, W1 // 2                # pool1 out (14, 14)
    H2, W2 = Hp1 - k + 1, Wp1 - k + 1          # conv2 out (10, 10)
    Wp2 = W2 // 2                              # pool2 out width (5)
    W3o = Wp2 - k + 1                          # conv3 out width (1)
    m1 = b_tile * H - (k - 1)                  # conv1 tap-slab rows (252)
    m2 = b_tile * Hp1 - (k - 1)                # conv2 tap-slab rows (108)
    return {
        "w1": _fused_band_weights(w1, W),      "b1": jnp.tile(b1, W1)[None, :],
        "pw1": _col_pool_mat(W1, c1),
        "ph1b": _row_pool_block(b_tile, Hp1, H, m1),
        "w2": _fused_band_weights(w2, Wp1),    "b2": jnp.tile(b2, W2)[None, :],
        "pw2": _col_pool_mat(W2, c2),
        "ph2f": _pool_flatten_block(b_tile, k, Hp1, m2),
        "w3": _fused_band_weights(w3, Wp2),    "b3": jnp.tile(b3, W3o)[None, :],
        "wf1": wf1.T, "bf1": bf1[None, :],
        "wf2": wf2.T, "bf2": bf2[None, :],
    }


_PARAM_ORDER = ("w1", "b1", "pw1", "ph1b",
                "w2", "b2", "pw2", "ph2f",
                "w3", "b3",
                "wf1", "bf1", "wf2", "bf2")


def _const_spec(a):
    nd = a.ndim
    return pl.BlockSpec(a.shape, lambda n: (0,) * nd)


# ---------------------------------------------------------------------------
# Fused forward pass (one pallas_call, B_TILE images per grid step)
# ---------------------------------------------------------------------------
@jax.jit
def lenet5_forward(kp, x):
    N, Cin, H, W = x.shape
    b_tile = B_TILE
    n_pad = ((N + b_tile - 1) // b_tile) * b_tile

    # Single cheap relayout of the network input: NCHW -> (N*H, W*Cin),
    # channel-minor so every conv layer is a plain 2-D MXU matmul in-kernel.
    x2d = jnp.transpose(x, (0, 2, 3, 1)).reshape(N * H, W * Cin)
    if n_pad != N:
        x2d = jnp.pad(x2d, ((0, (n_pad - N) * H), (0, 0)))

    n_out = kp["bf2"].shape[-1]
    consts = [kp[kk] for kk in _PARAM_ORDER]

    t1_shape = (kp["ph1b"].shape[1], kp["w1"].shape[0])    # (252, 480)
    t2_shape = (kp["ph2f"].shape[1], kp["w2"].shape[0])    # (108, 420)
    f_shape = (b_tile, kp["w3"].shape[0])                  # (8, 400)
    h1_shape = (kp["ph1b"].shape[0], kp["pw1"].shape[1])   # (112, 84)
    g_shape = (kp["ph2f"].shape[0], kp["pw2"].shape[1])    # (40, 80)

    out = pl.pallas_call(
        _lenet5_kernel,
        out_shape=jax.ShapeDtypeStruct((n_pad, n_out), jnp.float32),
        grid=(n_pad // b_tile,),
        in_specs=[pl.BlockSpec((b_tile * H, W * Cin), lambda n: (n, 0))]
                 + [_const_spec(a) for a in consts],
        out_specs=pl.BlockSpec((b_tile, n_out), lambda n: (n, 0)),
        scratch_shapes=[pltpu.VMEM(t1_shape, jnp.float32),
                        pltpu.VMEM(t2_shape, jnp.float32),
                        pltpu.VMEM(f_shape, jnp.float32),
                        pltpu.VMEM(h1_shape, jnp.float32),
                        pltpu.VMEM(g_shape, jnp.float32)],
        compiler_params=pltpu.CompilerParams(
            dimension_semantics=("parallel",),        # batch tiles over 2 TCs on v7x
            vmem_limit_bytes=32 * 1024 * 1024,        # working set ~3 MiB; safe everywhere
        ),
    )(x2d, *consts)
    return out[:N]


# ---------------------------------------------------------------------------
# Deterministic parameter init (shapes match LeNet5.__init__)
# ---------------------------------------------------------------------------
def init_params(key, n_channels=3, n_outputs=10):
    def conv_p(k, ci, co, ks=5):
        k1, k2 = jax.random.split(k)
        fan_in = ci * ks * ks
        w = jax.random.normal(k1, (co, ci, ks, ks), jnp.float32) / jnp.sqrt(fan_in)
        b = jax.random.normal(k2, (co,), jnp.float32) * 0.01
        return w, b

    def lin_p(k, fi, fo):
        k1, k2 = jax.random.split(k)
        w = jax.random.normal(k1, (fo, fi), jnp.float32) / jnp.sqrt(fi)
        b = jax.random.normal(k2, (fo,), jnp.float32) * 0.01
        return w, b

    ks = jax.random.split(key, 5)
    return {
        "conv1": conv_p(ks[0], n_channels, 6),
        "conv2": conv_p(ks[1], 6, 16),
        "conv3": conv_p(ks[2], 16, 120),
        "fc1": lin_p(ks[3], 120, 84),
        "fc2": lin_p(ks[4], 84, n_outputs),
    }


# ---------------------------------------------------------------------------
# Pure-JAX reference (semantics of the PyTorch module)
# ---------------------------------------------------------------------------
def lenet5_reference(params, x):
    def conv(x, w, b):
        y = jax.lax.conv_general_dilated(
            x, w, (1, 1), "VALID", dimension_numbers=("NCHW", "OIHW", "NCHW"))
        return y + b.reshape(1, -1, 1, 1)

    def pool(x):
        N, C, H, W = x.shape
        return x.reshape(N, C, H // 2, 2, W // 2, 2).mean(axis=(3, 5))

    h = pool(jnp.tanh(conv(x, *params["conv1"])))
    h = pool(jnp.tanh(conv(h, *params["conv2"])))
    h = jnp.tanh(conv(h, *params["conv3"])).reshape(x.shape[0], -1)
    h = jnp.tanh(h @ params["fc1"][0].T + params["fc1"][1])
    return h @ params["fc2"][0].T + params["fc2"][1]


if __name__ == "__main__":
    key = jax.random.PRNGKey(0)
    pkey, xkey = jax.random.split(key)
    params = init_params(pkey, n_channels=3, n_outputs=10)

    # LeNet-5 geometry requires 32x32 spatial input (the conv stack reduces to
    # 1x1 before Flatten -> Linear(120, 84)).  Batch 16 = 2 grid steps of 8.
    x = jax.random.normal(xkey, (16, 3, 32, 32), jnp.float32)

    kparams = prepare_kernel_params(params, H=32, W=32)
    out = jax.block_until_ready(lenet5_forward(kparams, x))
    ref = jax.block_until_ready(lenet5_reference(params, x))

    assert out.shape == (16, 10), out.shape
    # Tap fusion / pooling-as-matmul changes summation order vs. a direct conv,
    # so bitwise equality is not expected; 1e-3 gives ample margin in f32.
    assert jnp.allclose(out, ref, rtol=1e-3, atol=1e-3), "mismatch vs JAX reference"
    print("KERNEL_OK")
</pallas_src>

<mosaic_0001>
module attributes {stable_mosaic.version = 11 : i64} {
  func.func @_lenet5_kernel(%arg0: i32, %arg1: memref<256x96xf32, #tpu.memory_space<vmem>>, %arg2: memref<480x168xf32, #tpu.memory_space<vmem>>, %arg3: memref<1x168xf32, #tpu.memory_space<vmem>>, %arg4: memref<168x84xf32, #tpu.memory_space<vmem>>, %arg5: memref<112x252xf32, #tpu.memory_space<vmem>>, %arg6: memref<420x160xf32, #tpu.memory_space<vmem>>, %arg7: memref<1x160xf32, #tpu.memory_space<vmem>>, %arg8: memref<160x80xf32, #tpu.memory_space<vmem>>, %arg9: memref<40x108xf32, #tpu.memory_space<vmem>>, %arg10: memref<400x120xf32, #tpu.memory_space<vmem>>, %arg11: memref<1x120xf32, #tpu.memory_space<vmem>>, %arg12: memref<120x84xf32, #tpu.memory_space<vmem>>, %arg13: memref<1x84xf32, #tpu.memory_space<vmem>>, %arg14: memref<84x10xf32, #tpu.memory_space<vmem>>, %arg15: memref<1x10xf32, #tpu.memory_space<vmem>>, %arg16: memref<8x10xf32, #tpu.memory_space<vmem>>, %arg17: memref<252x480xf32, #tpu.memory_space<vmem>>, %arg18: memref<108x420xf32, #tpu.memory_space<vmem>>, %arg19: memref<8x400xf32, #tpu.memory_space<vmem>>, %arg20: memref<112x84xf32, #tpu.memory_space<vmem>>, %arg21: memref<40x80xf32, #tpu.memory_space<vmem>>) attributes {dimension_semantics = [#tpu.dimension_semantics<parallel>], iteration_bounds = array<i64: 2>, scalar_prefetch = 0 : i64, scratch_operands = 5 : i64, tpu.core_type = #tpu.core_type<tc>, window_params = [{transform_indices = @transform_0, window_bounds = array<i64: 256, 96>}, {pipeline_mode = #tpu.pipeline_mode<synchronous>, transform_indices = @transform_1, window_bounds = array<i64: 480, 168>}, {pipeline_mode = #tpu.pipeline_mode<synchronous>, transform_indices = @transform_2, window_bounds = array<i64: 1, 168>}, {pipeline_mode = #tpu.pipeline_mode<synchronous>, transform_indices = @transform_3, window_bounds = array<i64: 168, 84>}, {pipeline_mode = #tpu.pipeline_mode<synchronous>, transform_indices = @transform_4, window_bounds = array<i64: 112, 252>}, {pipeline_mode = #tpu.pipeline_mode<synchronous>, transform_indices = @transform_5, window_bounds = array<i64: 420, 160>}, {pipeline_mode = #tpu.pipeline_mode<synchronous>, transform_indices = @transform_6, window_bounds = array<i64: 1, 160>}, {pipeline_mode = #tpu.pipeline_mode<synchronous>, transform_indices = @transform_7, window_bounds = array<i64: 160, 80>}, {pipeline_mode = #tpu.pipeline_mode<synchronous>, transform_indices = @transform_8, window_bounds = array<i64: 40, 108>}, {pipeline_mode = #tpu.pipeline_mode<synchronous>, transform_indices = @transform_9, window_bounds = array<i64: 400, 120>}, {pipeline_mode = #tpu.pipeline_mode<synchronous>, transform_indices = @transform_10, window_bounds = array<i64: 1, 120>}, {pipeline_mode = #tpu.pipeline_mode<synchronous>, transform_indices = @transform_11, window_bounds = array<i64: 120, 84>}, {pipeline_mode = #tpu.pipeline_mode<synchronous>, transform_indices = @transform_12, window_bounds = array<i64: 1, 84>}, {pipeline_mode = #tpu.pipeline_mode<synchronous>, transform_indices = @transform_13, window_bounds = array<i64: 84, 10>}, {pipeline_mode = #tpu.pipeline_mode<synchronous>, transform_indices = @transform_14, window_bounds = array<i64: 1, 10>}, {transform_indices = @transform_15, window_bounds = array<i64: 8, 10>}]} {
    %c0 = arith.constant 0 : index
    %c0_0 = arith.constant 0 : index
    %0 = vector.load %arg1[%c0, %c0_0] : memref<256x96xf32, #tpu.memory_space<vmem>>, vector<252x96xf32>
    %c0_1 = arith.constant 0 : index
    %c0_2 = arith.constant 0 : index
    %1 = vector.load %arg17[%c0_1, %c0_2] : memref<252x480xf32, #tpu.memory_space<vmem>>, vector<252x96xf32>
    tpu.vector_store %arg17[%c0_1, %c0_2], %0 {strides = array<i32>} : memref<252x480xf32, #tpu.memory_space<vmem>>, vector<252x96xf32>,
    %c1 = arith.constant 1 : index
    %c0_3 = arith.constant 0 : index
    %2 = vector.load %arg1[%c1, %c0_3] : memref<256x96xf32, #tpu.memory_space<vmem>>, vector<252x96xf32>
    %c0_4 = arith.constant 0 : index
    %c96 = arith.constant 96 : index
    %3 = vector.load %arg17[%c0_4, %c96] : memref<252x480xf32, #tpu.memory_space<vmem>>, vector<252x96xf32>
    tpu.vector_store %arg17[%c0_4, %c96], %2 {strides = array<i32>} : memref<252x480xf32, #tpu.memory_space<vmem>>, vector<252x96xf32>,
    %c2 = arith.constant 2 : index
    %c0_5 = arith.constant 0 : index
    %4 = vector.load %arg1[%c2, %c0_5] : memref<256x96xf32, #tpu.memory_space<vmem>>, vector<252x96xf32>
    %c0_6 = arith.constant 0 : index
    %c192 = arith.constant 192 : index
    %5 = vector.load %arg17[%c0_6, %c192] : memref<252x480xf32, #tpu.memory_space<vmem>>, vector<252x96xf32>
    tpu.vector_store %arg17[%c0_6, %c192], %4 {strides = array<i32>} : memref<252x480xf32, #tpu.memory_space<vmem>>, vector<252x96xf32>,
    %c3 = arith.constant 3 : index
    %c0_7 = arith.constant 0 : index
    %6 = vector.load %arg1[%c3, %c0_7] : memref<256x96xf32, #tpu.memory_space<vmem>>, vector<252x96xf32>
    %c0_8 = arith.constant 0 : index
    %c288 = arith.constant 288 : index
    %7 = vector.load %arg17[%c0_8, %c288] : memref<252x480xf32, #tpu.memory_space<vmem>>, vector<252x96xf32>
    tpu.vector_store %arg17[%c0_8, %c288], %6 {strides = array<i32>} : memref<252x480xf32, #tpu.memory_space<vmem>>, vector<252x96xf32>,
    %c4 = arith.constant 4 : index
    %c0_9 = arith.constant 0 : index
    %8 = vector.load %arg1[%c4, %c0_9] : memref<256x96xf32, #tpu.memory_space<vmem>>, vector<252x96xf32>
    %c0_10 = arith.constant 0 : index
    %c384 = arith.constant 384 : index
    %9 = vector.load %arg17[%c0_10, %c384] : memref<252x480xf32, #tpu.memory_space<vmem>>, vector<252x96xf32>
    tpu.vector_store %arg17[%c0_10, %c384], %8 {strides = array<i32>} : memref<252x480xf32, #tpu.memory_space<vmem>>, vector<252x96xf32>,
    %c0_11 = arith.constant 0 : index
    %c0_12 = arith.constant 0 : index
    %10 = vector.load %arg17[%c0_11, %c0_12] : memref<252x480xf32, #tpu.memory_space<vmem>>, vector<252x480xf32>
    %c0_13 = arith.constant 0 : index
    %c0_14 = arith.constant 0 : index
    %11 = vector.load %arg2[%c0_13, %c0_14] : memref<480x168xf32, #tpu.memory_space<vmem>>, vector<480x168xf32>
    %cst = arith.constant dense<0.000000e+00> : vector<252x168xf32>
    %12 = tpu.matmul %10, %11, %cst {dimension_numbers = #tpu.dot_dimension_numbers<[1], [0], [0], [1], [0, 0, 1, 1], [], []>} : vector<252x480xf32>, vector<480x168xf32>, vector<252x168xf32> -> vector<252x168xf32>
    %c0_15 = arith.constant 0 : index
    %c0_16 = arith.constant 0 : index
    %13 = vector.load %arg3[%c0_15, %c0_16] : memref<1x168xf32, #tpu.memory_space<vmem>>, vector<1x168xf32>
    %14 = vector.broadcast %13 : vector<1x168xf32> to vector<252x168xf32>
    %15 = arith.addf %12, %14 : vector<252x168xf32>
    %16 = math.tanh %15 : vector<252x168xf32>
    %c0_17 = arith.constant 0 : index
    %c0_18 = arith.constant 0 : index
    %17 = vector.load %arg5[%c0_17, %c0_18] : memref<112x252xf32, #tpu.memory_space<vmem>>, vector<112x252xf32>
    %c0_19 = arith.constant 0 : index
    %c0_20 = arith.constant 0 : index
    %18 = vector.load %arg4[%c0_19, %c0_20] : memref<168x84xf32, #tpu.memory_space<vmem>>, vector<168x84xf32>
    %cst_21 = arith.constant dense<0.000000e+00> : vector<252x84xf32>
    %19 = tpu.matmul %16, %18, %cst_21 {dimension_numbers = #tpu.dot_dimension_numbers<[1], [0], [0], [1], [0, 0, 1, 1], [], []>} : vector<252x168xf32>, vector<168x84xf32>, vector<252x84xf32> -> vector<252x84xf32>
    %cst_22 = arith.constant dense<0.000000e+00> : vector<112x84xf32>
    %20 = tpu.matmul %17, %19, %cst_22 {dimension_numbers = #tpu.dot_dimension_numbers<[1], [0], [0], [1], [0, 0, 1, 1], [], []>} : vector<112x252xf32>, vector<252x84xf32>, vector<112x84xf32> -> vector<112x84xf32>
    %c0_23 = arith.constant 0 : index
    %c0_24 = arith.constant 0 : index
    %21 = vector.load %arg20[%c0_23, %c0_24] : memref<112x84xf32, #tpu.memory_space<vmem>>, vector<112x84xf32>
    tpu.vector_store %arg20[%c0_23, %c0_24], %20 {strides = array<i32>} : memref<112x84xf32, #tpu.memory_space<vmem>>, vector<112x84xf32>,
    %c0_25 = arith.constant 0 : index
    %c0_26 = arith.constant 0 : index
    %22 = vector.load %arg20[%c0_25, %c0_26] : memref<112x84xf32, #tpu.memory_space<vmem>>, vector<108x84xf32>
    %c0_27 = arith.constant 0 : index
    %c0_28 = arith.constant 0 : index
    %23 = vector.load %arg18[%c0_27, %c0_28] : memref<108x420xf32, #tpu.memory_space<vmem>>, vector<108x84xf32>
    tpu.vector_store %arg18[%c0_27, %c0_28], %22 {strides = array<i32>} : memref<108x420xf32, #tpu.memory_space<vmem>>, vector<108x84xf32>,
    %c1_29 = arith.constant 1 : index
    %c0_30 = arith.constant 0 : index
    %24 = vector.load %arg20[%c1_29, %c0_30] : memref<112x84xf32, #tpu.memory_space<vmem>>, vector<108x84xf32>
    %c0_31 = arith.constant 0 : index
    %c84 = arith.constant 84 : index
    %25 = vector.load %arg18[%c0_31, %c84] : memref<108x420xf32, #tpu.memory_space<vmem>>, vector<108x84xf32>
    tpu.vector_store %arg18[%c0_31, %c84], %24 {strides = array<i32>} : memref<108x420xf32, #tpu.memory_space<vmem>>, vector<108x84xf32>,
    %c2_32 = arith.constant 2 : index
    %c0_33 = arith.constant 0 : index
    %26 = vector.load %arg20[%c2_32, %c0_33] : memref<112x84xf32, #tpu.memory_space<vmem>>, vector<108x84xf32>
    %c0_34 = arith.constant 0 : index
    %c168 = arith.constant 168 : index
    %27 = vector.load %arg18[%c0_34, %c168] : memref<108x420xf32, #tpu.memory_space<vmem>>, vector<108x84xf32>
    tpu.vector_store %arg18[%c0_34, %c168], %26 {strides = array<i32>} : memref<108x420xf32, #tpu.memory_space<vmem>>, vector<108x84xf32>,
    %c3_35 = arith.constant 3 : index
    %c0_36 = arith.constant 0 : index
    %28 = vector.load %arg20[%c3_35, %c0_36] : memref<112x84xf32, #tpu.memory_space<vmem>>, vector<108x84xf32>
    %c0_37 = arith.constant 0 : index
    %c252 = arith.constant 252 : index
    %29 = vector.load %arg18[%c0_37, %c252] : memref<108x420xf32, #tpu.memory_space<vmem>>, vector<108x84xf32>
    tpu.vector_store %arg18[%c0_37, %c252], %28 {strides = array<i32>} : memref<108x420xf32, #tpu.memory_space<vmem>>, vector<108x84xf32>,
    %c4_38 = arith.constant 4 : index
    %c0_39 = arith.constant 0 : index
    %30 = vector.load %arg20[%c4_38, %c0_39] : memref<112x84xf32, #tpu.memory_space<vmem>>, vector<108x84xf32>
    %c0_40 = arith.constant 0 : index
    %c336 = arith.constant 336 : index
    %31 = vector.load %arg18[%c0_40, %c336] : memref<108x420xf32, #tpu.memory_space<vmem>>, vector<108x84xf32>
    tpu.vector_store %arg18[%c0_40, %c336], %30 {strides = array<i32>} : memref<108x420xf32, #tpu.memory_space<vmem>>, vector<108x84xf32>,
    %c0_41 = arith.constant 0 : index
    %c0_42 = arith.constant 0 : index
    %32 = vector.load %arg18[%c0_41, %c0_42] : memref<108x420xf32, #tpu.memory_space<vmem>>, vector<108x420xf32>
    %c0_43 = arith.constant 0 : index
    %c0_44 = arith.constant 0 : index
    %33 = vector.load %arg6[%c0_43, %c0_44] : memref<420x160xf32, #tpu.memory_space<vmem>>, vector<420x160xf32>
    %cst_45 = arith.constant dense<0.000000e+00> : vector<108x160xf32>
    %34 = tpu.matmul %32, %33, %cst_45 {dimension_numbers = #tpu.dot_dimension_numbers<[1], [0], [0], [1], [0, 0, 1, 1], [], []>} : vector<108x420xf32>, vector<420x160xf32>, vector<108x160xf32> -> vector<108x160xf32>
    %c0_46 = arith.constant 0 : index
    %c0_47 = arith.constant 0 : index
    %35 = vector.load %arg7[%c0_46, %c0_47] : memref<1x160xf32, #tpu.memory_space<vmem>>, vector<1x160xf32>
    %36 = vector.broadcast %35 : vector<1x160xf32> to vector<108x160xf32>
    %37 = arith.addf %34, %36 : vector<108x160xf32>
    %38 = math.tanh %37 : vector<108x160xf32>
    %c0_48 = arith.constant 0 : index
    %c0_49 = arith.constant 0 : index
    %39 = vector.load %arg9[%c0_48, %c0_49] : memref<40x108xf32, #tpu.memory_space<vmem>>, vector<40x108xf32>
    %c0_50 = arith.constant 0 : index
    %c0_51 = arith.constant 0 : index
    %40 = vector.load %arg8[%c0_50, %c0_51] : memref<160x80xf32, #tpu.memory_space<vmem>>, vector<160x80xf32>
    %cst_52 = arith.constant dense<0.000000e+00> : vector<108x80xf32>
    %41 = tpu.matmul %38, %40, %cst_52 {dimension_numbers = #tpu.dot_dimension_numbers<[1], [0], [0], [1], [0, 0, 1, 1], [], []>} : vector<108x160xf32>, vector<160x80xf32>, vector<108x80xf32> -> vector<108x80xf32>
    %cst_53 = arith.constant dense<0.000000e+00> : vector<40x80xf32>
    %42 = tpu.matmul %39, %41, %cst_53 {dimension_numbers = #tpu.dot_dimension_numbers<[1], [0], [0], [1], [0, 0, 1, 1], [], []>} : vector<40x108xf32>, vector<108x80xf32>, vector<40x80xf32> -> vector<40x80xf32>
    %c0_54 = arith.constant 0 : index
    %c0_55 = arith.constant 0 : index
    %43 = vector.load %arg21[%c0_54, %c0_55] : memref<40x80xf32, #tpu.memory_space<vmem>>, vector<40x80xf32>
    tpu.vector_store %arg21[%c0_54, %c0_55], %42 {strides = array<i32>} : memref<40x80xf32, #tpu.memory_space<vmem>>, vector<40x80xf32>,
    %c0_56 = arith.constant 0 : index
    %c0_57 = arith.constant 0 : index
    %44 = vector.load %arg21[%c0_56, %c0_57] : memref<40x80xf32, #tpu.memory_space<vmem>>, vector<8x80xf32>
    %c0_58 = arith.constant 0 : index
    %c0_59 = arith.constant 0 : index
    %45 = vector.load %arg19[%c0_58, %c0_59] : memref<8x400xf32, #tpu.memory_space<vmem>>, vector<8x80xf32>
    tpu.vector_store %arg19[%c0_58, %c0_59], %44 {strides = array<i32>} : memref<8x400xf32, #tpu.memory_space<vmem>>, vector<8x80xf32>,
    %c8 = arith.constant 8 : index
    %c0_60 = arith.constant 0 : index
    %46 = vector.load %arg21[%c8, %c0_60] : memref<40x80xf32, #tpu.memory_space<vmem>>, vector<8x80xf32>
    %c0_61 = arith.constant 0 : index
    %c80 = arith.constant 80 : index
    %47 = vector.load %arg19[%c0_61, %c80] : memref<8x400xf32, #tpu.memory_space<vmem>>, vector<8x80xf32>
    tpu.vector_store %arg19[%c0_61, %c80], %46 {strides = array<i32>} : memref<8x400xf32, #tpu.memory_space<vmem>>, vector<8x80xf32>,
    %c16 = arith.constant 16 : index
    %c0_62 = arith.constant 0 : index
    %48 = vector.load %arg21[%c16, %c0_62] : memref<40x80xf32, #tpu.memory_space<vmem>>, vector<8x80xf32>
    %c0_63 = arith.constant 0 : index
    %c160 = arith.constant 160 : index
    %49 = vector.load %arg19[%c0_63, %c160] : memref<8x400xf32, #tpu.memory_space<vmem>>, vector<8x80xf32>
    tpu.vector_store %arg19[%c0_63, %c160], %48 {strides = array<i32>} : memref<8x400xf32, #tpu.memory_space<vmem>>, vector<8x80xf32>,
    %c24 = arith.constant 24 : index
    %c0_64 = arith.constant 0 : index
    %50 = vector.load %arg21[%c24, %c0_64] : memref<40x80xf32, #tpu.memory_space<vmem>>, vector<8x80xf32>
    %c0_65 = arith.constant 0 : index
    %c240 = arith.constant 240 : index
    %51 = vector.load %arg19[%c0_65, %c240] : memref<8x400xf32, #tpu.memory_space<vmem>>, vector<8x80xf32>
    tpu.vector_store %arg19[%c0_65, %c240], %50 {strides = array<i32>} : memref<8x400xf32, #tpu.memory_space<vmem>>, vector<8x80xf32>,
    %c32 = arith.constant 32 : index
    %c0_66 = arith.constant 0 : index
    %52 = vector.load %arg21[%c32, %c0_66] : memref<40x80xf32, #tpu.memory_space<vmem>>, vector<8x80xf32>
    %c0_67 = arith.constant 0 : index
    %c320 = arith.constant 320 : index
    %53 = vector.load %arg19[%c0_67, %c320] : memref<8x400xf32, #tpu.memory_space<vmem>>, vector<8x80xf32>
    tpu.vector_store %arg19[%c0_67, %c320], %52 {strides = array<i32>} : memref<8x400xf32, #tpu.memory_space<vmem>>, vector<8x80xf32>,
    %c0_68 = arith.constant 0 : index
    %c0_69 = arith.constant 0 : index
    %54 = vector.load %arg19[%c0_68, %c0_69] : memref<8x400xf32, #tpu.memory_space<vmem>>, vector<8x400xf32>
    %c0_70 = arith.constant 0 : index
    %c0_71 = arith.constant 0 : index
    %55 = vector.load %arg10[%c0_70, %c0_71] : memref<400x120xf32, #tpu.memory_space<vmem>>, vector<400x120xf32>
    %cst_72 = arith.constant dense<0.000000e+00> : vector<8x120xf32>
    %56 = tpu.matmul %54, %55, %cst_72 {dimension_numbers = #tpu.dot_dimension_numbers<[1], [0], [0], [1], [0, 0, 1, 1], [], []>} : vector<8x400xf32>, vector<400x120xf32>, vector<8x120xf32> -> vector<8x120xf32>
    %c0_73 = arith.constant 0 : index
    %c0_74 = arith.constant 0 : index
    %57 = vector.load %arg11[%c0_73, %c0_74] : memref<1x120xf32, #tpu.memory_space<vmem>>, vector<1x120xf32>
    %58 = vector.broadcast %57 : vector<1x120xf32> to vector<8x120xf32>
    %59 = arith.addf %56, %58 : vector<8x120xf32>
    %60 = math.tanh %59 : vector<8x120xf32>
    %c0_75 = arith.constant 0 : index
    %c0_76 = arith.constant 0 : index
    %61 = vector.load %arg12[%c0_75, %c0_76] : memref<120x84xf32, #tpu.memory_space<vmem>>, vector<120x84xf32>
    %cst_77 = arith.constant dense<0.000000e+00> : vector<8x84xf32>
    %62 = tpu.matmul %60, %61, %cst_77 {dimension_numbers = #tpu.dot_dimension_numbers<[1], [0], [0], [1], [0, 0, 1, 1], [], []>} : vector<8x120xf32>, vector<120x84xf32>, vector<8x84xf32> -> vector<8x84xf32>
    %c0_78 = arith.constant 0 : index
    %c0_79 = arith.constant 0 : index
    %63 = vector.load %arg13[%c0_78, %c0_79] : memref<1x84xf32, #tpu.memory_space<vmem>>, vector<1x84xf32>
    %64 = vector.broadcast %63 : vector<1x84xf32> to vector<8x84xf32>
    %65 = arith.addf %62, %64 : vector<8x84xf32>
    %66 = math.tanh %65 : vector<8x84xf32>
    %c0_80 = arith.constant 0 : index
    %c0_81 = arith.constant 0 : index
    %67 = vector.load %arg14[%c0_80, %c0_81] : memref<84x10xf32, #tpu.memory_space<vmem>>, vector<84x10xf32>
    %cst_82 = arith.constant dense<0.000000e+00> : vector<8x10xf32>
    %68 = tpu.matmul %66, %67, %cst_82 {dimension_numbers = #tpu.dot_dimension_numbers<[1], [0], [0], [1], [0, 0, 1, 1], [], []>} : vector<8x84xf32>, vector<84x10xf32>, vector<8x10xf32> -> vector<8x10xf32>
    %c0_83 = arith.constant 0 : index
    %c0_84 = arith.constant 0 : index
    %69 = vector.load %arg15[%c0_83, %c0_84] : memref<1x10xf32, #tpu.memory_space<vmem>>, vector<1x10xf32>
    %70 = vector.broadcast %69 : vector<1x10xf32> to vector<8x10xf32>
    %71 = arith.addf %68, %70 : vector<8x10xf32>
    %c0_85 = arith.constant 0 : index
    %c0_86 = arith.constant 0 : index
    %72 = vector.load %arg16[%c0_85, %c0_86] : memref<8x10xf32, #tpu.memory_space<vmem>>, vector<8x10xf32>
    tpu.vector_store %arg16[%c0_85, %c0_86], %71 {strides = array<i32>} : memref<8x10xf32, #tpu.memory_space<vmem>>, vector<8x10xf32>,
    return
  }
  func.func @transform_0(%arg0: i32) -> (i32, i32) {
    %c0_i32 = arith.constant 0 : i32
    %c0_i32_0 = arith.constant 0 : i32
    return %arg0, %c0_i32 : i32, i32
  }
  func.func @transform_1(%arg0: i32) -> (i32, i32) {
    %c0_i32 = arith.constant 0 : i32
    %c0_i32_0 = arith.constant 0 : i32
    %c0_i32_1 = arith.constant 0 : i32
    return %c0_i32, %c0_i32_0 : i32, i32
  }
  func.func @transform_2(%arg0: i32) -> (i32, i32) {
    %c0_i32 = arith.constant 0 : i32
    %c0_i32_0 = arith.constant 0 : i32
    %c0_i32_1 = arith.constant 0 : i32
    return %c0_i32, %c0_i32_0 : i32, i32
  }
  func.func @transform_3(%arg0: i32) -> (i32, i32) {
    %c0_i32 = arith.constant 0 : i32
    %c0_i32_0 = arith.constant 0 : i32
    %c0_i32_1 = arith.constant 0 : i32
    return %c0_i32, %c0_i32_0 : i32, i32
  }
  func.func @transform_4(%arg0: i32) -> (i32, i32) {
    %c0_i32 = arith.constant 0 : i32
    %c0_i32_0 = arith.constant 0 : i32
    %c0_i32_1 = arith.constant 0 : i32
    return %c0_i32, %c0_i32_0 : i32, i32
  }
  func.func @transform_5(%arg0: i32) -> (i32, i32) {
    %c0_i32 = arith.constant 0 : i32
    %c0_i32_0 = arith.constant 0 : i32
    %c0_i32_1 = arith.constant 0 : i32
    return %c0_i32, %c0_i32_0 : i32, i32
  }
  func.func @transform_6(%arg0: i32) -> (i32, i32) {
    %c0_i32 = arith.constant 0 : i32
    %c0_i32_0 = arith.constant 0 : i32
    %c0_i32_1 = arith.constant 0 : i32
    return %c0_i32, %c0_i32_0 : i32, i32
  }
  func.func @transform_7(%arg0: i32) -> (i32, i32) {
    %c0_i32 = arith.constant 0 : i32
    %c0_i32_0 = arith.constant 0 : i32
    %c0_i32_1 = arith.constant 0 : i32
    return %c0_i32, %c0_i32_0 : i32, i32
  }
  func.func @transform_8(%arg0: i32) -> (i32, i32) {
    %c0_i32 = arith.constant 0 : i32
    %c0_i32_0 = arith.constant 0 : i32
    %c0_i32_1 = arith.constant 0 : i32
    return %c0_i32, %c0_i32_0 : i32, i32
  }
  func.func @transform_9(%arg0: i32) -> (i32, i32) {
    %c0_i32 = arith.constant 0 : i32
    %c0_i32_0 = arith.constant 0 : i32
    %c0_i32_1 = arith.constant 0 : i32
    return %c0_i32, %c0_i32_0 : i32, i32
  }
  func.func @transform_10(%arg0: i32) -> (i32, i32) {
    %c0_i32 = arith.constant 0 : i32
    %c0_i32_0 = arith.constant 0 : i32
    %c0_i32_1 = arith.constant 0 : i32
    return %c0_i32, %c0_i32_0 : i32, i32
  }
  func.func @transform_11(%arg0: i32) -> (i32, i32) {
    %c0_i32 = arith.constant 0 : i32
    %c0_i32_0 = arith.constant 0 : i32
    %c0_i32_1 = arith.constant 0 : i32
    return %c0_i32, %c0_i32_0 : i32, i32
  }
  func.func @transform_12(%arg0: i32) -> (i32, i32) {
    %c0_i32 = arith.constant 0 : i32
    %c0_i32_0 = arith.constant 0 : i32
    %c0_i32_1 = arith.constant 0 : i32
    return %c0_i32, %c0_i32_0 : i32, i32
  }
  func.func @transform_13(%arg0: i32) -> (i32, i32) {
    %c0_i32 = arith.constant 0 : i32
    %c0_i32_0 = arith.constant 0 : i32
    %c0_i32_1 = arith.constant 0 : i32
    return %c0_i32, %c0_i32_0 : i32, i32
  }
  func.func @transform_14(%arg0: i32) -> (i32, i32) {
    %c0_i32 = arith.constant 0 : i32
    %c0_i32_0 = arith.constant 0 : i32
    %c0_i32_1 = arith.constant 0 : i32
    return %c0_i32, %c0_i32_0 : i32, i32
  }
  func.func @transform_15(%arg0: i32) -> (i32, i32) {
    %c0_i32 = arith.constant 0 : i32
    %c0_i32_0 = arith.constant 0 : i32
    return %arg0, %c0_i32 : i32, i32
  }
}

</mosaic_0001>

<llo_original>
// kernel: lenet5_forward.1
$region0: #{lenet5_forward.1}
  #allocation0 [shape = 'u32[]', space=smem, size = 0x4, offset = 0x4, fixed_abs, tag = 'smem constant byte address 0x4 - core index']
  #allocation1 [shape = 'u32[144,128]{1,0:T(1,128)}', space=vmem, size = 0x12000, scoped, tag = 'internal scratch']
  #allocation2 [shape = 'f32[252,480]{1,0:T(8,128)}', space=vmem, size = 0x80000, scoped, tag = 'scratch operand']
  #allocation3 [shape = 'f32[108,420]{1,0:T(8,128)}', space=vmem, size = 0x38000, scoped, tag = 'scratch operand']
  #allocation4 [shape = 'f32[8,400]{1,0:T(8,128)}', space=vmem, size = 0x4000, scoped, tag = 'scratch operand']
  #allocation5 [shape = 'f32[112,84]{1,0:T(8,128)}', space=vmem, size = 0xe000, scoped, tag = 'scratch operand']
  #allocation6 [shape = 'f32[40,80]{1,0:T(8,128)}', space=vmem, size = 0x5000, scoped, tag = 'scratch operand']
  %s0 = inlined_call_operand.vmem [shape: f32[512,96], index: 0, kind: input, shape index: {}]
  %s1 = inlined_call_operand.vmem [shape: f32[480,168], index: 1, kind: input, shape index: {}]
  %s2 = inlined_call_operand.vmem [shape: f32[1,168], index: 2, kind: input, shape index: {}]
  %s3 = inlined_call_operand.vmem [shape: f32[168,84], index: 3, kind: input, shape index: {}]
  %s4 = inlined_call_operand.vmem [shape: f32[112,252], index: 4, kind: input, shape index: {}]
  %s5 = inlined_call_operand.vmem [shape: f32[420,160], index: 5, kind: input, shape index: {}]
  %s6 = inlined_call_operand.vmem [shape: f32[1,160], index: 6, kind: input, shape index: {}]
  %s7 = inlined_call_operand.vmem [shape: f32[160,80], index: 7, kind: input, shape index: {}]
  %s8 = inlined_call_operand.vmem [shape: f32[40,108], index: 8, kind: input, shape index: {}]
  %s9 = inlined_call_operand.vmem [shape: f32[400,120], index: 9, kind: input, shape index: {}]
  %s10 = inlined_call_operand.vmem [shape: f32[1,120], index: 10, kind: input, shape index: {}]
  %s11 = inlined_call_operand.vmem [shape: f32[120,84], index: 11, kind: input, shape index: {}]
  %s12 = inlined_call_operand.vmem [shape: f32[1,84], index: 12, kind: input, shape index: {}]
  %s13 = inlined_call_operand.vmem [shape: f32[84,10], index: 13, kind: input, shape index: {}]
  %s14 = inlined_call_operand.vmem [shape: f32[1,10], index: 14, kind: input, shape index: {}]
  %s15 = inlined_call_operand.hbm [shape: f32[16,10], index: 15, kind: output, shape index: {}]
  %s16 = sld [smem:[#allocation0]]
  $region93: #{lenet5_forward.1} parent=0
    _
  %s18 = ssub.s32 1, %s16
  %s19 = scalar_select 0, %s18, %s16
  $region1: #{lenet5_forward.1} parent=0
    #allocation7 [shape = 'u8[8192]{0}', space=vmem, size = 0x2000, scoped, tag = 'output window, operand 0']
    #allocation8 [shape = 's32[2]{0}', space=sflag, size = 0x8, scoped, tag = 'scoped memory for lenet5_forward.1']
    %20 = vsyncpa [#allocation8], 0
    %s21 = scalar_lea.sflag [#allocation8], 1
    %22 = vsyncpa %s21, 0
    loop: start=0, step=1, limit=4
    $region2: #{lenet5_forward.1} parent=1 // loop_pre_header
      _
    $region3: #{lenet5_forward.1} parent=1 // loop_header
      %s24 = sphi 0, %s28
      %p25 = scmp.ge.s32.totalorder %s24, 4
      %s34 = sphi 0, %s36
      %s37 = sphi 0, %s34
      %s38 = sphi 0, %s37
      %s54 = sphi 0, %s38
      %s58 = sphi 0, %s58
      %s60 = sphi 0, %s58
      %s61 = sphi 0, %s60
      %s75 = sphi 0, %s61
      %s79 = sphi 0, %s79
      %s81 = sphi 0, %s79
      %s82 = sphi 0, %s81
      %s96 = sphi 0, %s82
      %s100 = sphi 0, %s100
      %s102 = sphi 0, %s100
      %s103 = sphi 0, %s102
      %s117 = sphi 0, %s103
      %s121 = sphi 0, %s121
      %s123 = sphi 0, %s121
      %s124 = sphi 0, %s123
      %s138 = sphi 0, %s124
      %s142 = sphi 0, %s142
      %s144 = sphi 0, %s142
      %s145 = sphi 0, %s144
      %s159 = sphi 0, %s145
      %s163 = sphi 0, %s163
      %s165 = sphi 0, %s163
      %s166 = sphi 0, %s165
      %s180 = sphi 0, %s166
      %s184 = sphi 0, %s184
      %s186 = sphi 0, %s184
      %s187 = sphi 0, %s186
      %s201 = sphi 0, %s187
      %s205 = sphi 0, %s205
      %s207 = sphi 0, %s205
      %s208 = sphi 0, %s207
      %s222 = sphi 0, %s208
      %s226 = sphi 0, %s226
      %s228 = sphi 0, %s226
      %s229 = sphi 0, %s228
      %s243 = sphi 0, %s229
      %s247 = sphi 0, %s247
      %s249 = sphi 0, %s247
      %s250 = sphi 0, %s249
      %s264 = sphi 0, %s250
      %s268 = sphi 0, %s268
      %s270 = sphi 0, %s268
      %s271 = sphi 0, %s270
      %s285 = sphi 0, %s271
      %s289 = sphi 0, %s289
      %s291 = sphi 0, %s289
      %s292 = sphi 0, %s291
      %s306 = sphi 0, %s292
      %s310 = sphi 0, %s310
      %s312 = sphi 0, %s310
      %s313 = sphi 0, %s312
      %s327 = sphi 0, %s313
      %s331 = sphi 0, %s331
      %s333 = sphi 0, %s331
      %s334 = sphi 0, %s333
      %s348 = sphi 0, %s334
      %s354 = sphi 0, %s356
      %s357 = sphi 0, %s354
      %s358 = sphi 0, %s357
      %s374 = sphi 0, %s358
    $region4: #{lenet5_forward.1} parent=1 // loop_header_branch
      %27 = sbr.rel (%p25) target = $region8
    $region5: #{lenet5_forward.1} parent=1 // loop_body
      %s29 = ssub.s32 %s24, 1
      %s30 = ssub.s32 %s24, 2
      %s31 = sadd.s32 %s24, 1
      %s32 = ssub.s32 %s24, %s31
      %p33 = scmp.eq.s32.totalorder %s32, 0
      %s35 = sadd.s32 %s34, 1
      %s36 = scalar_select %p33, %s34, %s35
      %p39 = pneg %p33
      %p40 = scmp.eq.s32.totalorder %s24, 1
      %p41 = por %p39, %p40
      %p42 = scmp.ne.s32.totalorder %s34, %s37
      %p43 = scmp.eq.s32.totalorder %s24, 0
      %p44 = por %p42, %p43
      %p45 = scmp.ne.s32.totalorder %s34, %s37
      %p46 = scmp.eq.s32.totalorder %s29, 1
      %p47 = por %p45, %p46
      %p48 = scmp.ne.s32.totalorder %s37, %s38
      %p49 = scmp.eq.s32.totalorder %s29, 0
      %p50 = por %p48, %p49
      %p51 = scmp.ne.s32.totalorder %s37, %s38
      %p52 = scmp.eq.s32.totalorder %s30, 1
      %p53 = por %p51, %p52
      %p55 = scmp.ne.s32.totalorder %s38, %s54
      %p56 = scmp.eq.s32.totalorder %s30, 0
      %p57 = por %p55, %p56
      %s59 = sadd.s32 %s58, 1
      %p62 = scmp.eq.s32.totalorder %s24, 1
      %p63 = scmp.ne.s32.totalorder %s58, %s60
      %p64 = scmp.eq.s32.totalorder %s24, 0
      %p65 = por %p63, %p64
      %p66 = scmp.ne.s32.totalorder %s58, %s60
      %p67 = scmp.eq.s32.totalorder %s29, 1
      %p68 = por %p66, %p67
      %p69 = scmp.ne.s32.totalorder %s60, %s61
      %p70 = scmp.eq.s32.totalorder %s29, 0
      %p71 = por %p69, %p70
      %p72 = scmp.ne.s32.totalorder %s60, %s61
      %p73 = scmp.eq.s32.totalorder %s30, 1
      %p74 = por %p72, %p73
      %p76 = scmp.ne.s32.totalorder %s61, %s75
      %p77 = scmp.eq.s32.totalorder %s30, 0
      %p78 = por %p76, %p77
      %s80 = sadd.s32 %s79, 1
      %p83 = scmp.eq.s32.totalorder %s24, 1
      %p84 = scmp.ne.s32.totalorder %s79, %s81
      %p85 = scmp.eq.s32.totalorder %s24, 0
      %p86 = por %p84, %p85
      %p87 = scmp.ne.s32.totalorder %s79, %s81
      %p88 = scmp.eq.s32.totalorder %s29, 1
      %p89 = por %p87, %p88
      %p90 = scmp.ne.s32.totalorder %s81, %s82
      %p91 = scmp.eq.s32.totalorder %s29, 0
      %p92 = por %p90, %p91
      %p93 = scmp.ne.s32.totalorder %s81, %s82
      %p94 = scmp.eq.s32.totalorder %s30, 1
      %p95 = por %p93, %p94
      %p97 = scmp.ne.s32.totalorder %s82, %s96
      %p98 = scmp.eq.s32.totalorder %s30, 0
      %p99 = por %p97, %p98
      %s101 = sadd.s32 %s100, 1
      %p104 = scmp.eq.s32.totalorder %s24, 1
      %p105 = scmp.ne.s32.totalorder %s100, %s102
      %p106 = scmp.eq.s32.totalorder %s24, 0
      %p107 = por %p105, %p106
      %p108 = scmp.ne.s32.totalorder %s100, %s102
      %p109 = scmp.eq.s32.totalorder %s29, 1
      %p110 = por %p108, %p109
      %p111 = scmp.ne.s32.totalorder %s102, %s103
      %p112 = scmp.eq.s32.totalorder %s29, 0
      %p113 = por %p111, %p112
      %p114 = scmp.ne.s32.totalorder %s102, %s103
      %p115 = scmp.eq.s32.totalorder %s30, 1
      %p116 = por %p114, %p115
      %p118 = scmp.ne.s32.totalorder %s103, %s117
      %p119 = scmp.eq.s32.totalorder %s30, 0
      %p120 = por %p118, %p119
      %s122 = sadd.s32 %s121, 1
      %p125 = scmp.eq.s32.totalorder %s24, 1
      %p126 = scmp.ne.s32.totalorder %s121, %s123
      %p127 = scmp.eq.s32.totalorder %s24, 0
      %p128 = por %p126, %p127
      %p129 = scmp.ne.s32.totalorder %s121, %s123
      %p130 = scmp.eq.s32.totalorder %s29, 1
      %p131 = por %p129, %p130
      %p132 = scmp.ne.s32.totalorder %s123, %s124
      %p133 = scmp.eq.s32.totalorder %s29, 0
      %p134 = por %p132, %p133
      %p135 = scmp.ne.s32.totalorder %s123, %s124
      %p136 = scmp.eq.s32.totalorder %s30, 1
      %p137 = por %p135, %p136
      %p139 = scmp.ne.s32.totalorder %s124, %s138
      %p140 = scmp.eq.s32.totalorder %s30, 0
      %p141 = por %p139, %p140
      %s143 = sadd.s32 %s142, 1
      %p146 = scmp.eq.s32.totalorder %s24, 1
      %p147 = scmp.ne.s32.totalorder %s142, %s144
      %p148 = scmp.eq.s32.totalorder %s24, 0
      %p149 = por %p147, %p148
      %p150 = scmp.ne.s32.totalorder %s142, %s144
      %p151 = scmp.eq.s32.totalorder %s29, 1
      %p152 = por %p150, %p151
      %p153 = scmp.ne.s32.totalorder %s144, %s145
      %p154 = scmp.eq.s32.totalorder %s29, 0
      %p155 = por %p153, %p154
      %p156 = scmp.ne.s32.totalorder %s144, %s145
      %p157 = scmp.eq.s32.totalorder %s30, 1
      %p158 = por %p156, %p157
      %p160 = scmp.ne.s32.totalorder %s145, %s159
      %p161 = scmp.eq.s32.totalorder %s30, 0
      %p162 = por %p160, %p161
      %s164 = sadd.s32 %s163, 1
      %p167 = scmp.eq.s32.totalorder %s24, 1
      %p168 = scmp.ne.s32.totalorder %s163, %s165
      %p169 = scmp.eq.s32.totalorder %s24, 0
      %p170 = por %p168, %p169
      %p171 = scmp.ne.s32.totalorder %s163, %s165
      %p172 = scmp.eq.s32.totalorder %s29, 1
      %p173 = por %p171, %p172
      %p174 = scmp.ne.s32.totalorder %s165, %s166
      %p175 = scmp.eq.s32.totalorder %s29, 0
      %p176 = por %p174, %p175
      %p177 = scmp.ne.s32.totalorder %s165, %s166
      %p178 = scmp.eq.s32.totalorder %s30, 1
      %p179 = por %p177, %p178
      %p181 = scmp.ne.s32.totalorder %s166, %s180
      %p182 = scmp.eq.s32.totalorder %s30, 0
      %p183 = por %p181, %p182
      %s185 = sadd.s32 %s184, 1
      %p188 = scmp.eq.s32.totalorder %s24, 1
      %p189 = scmp.ne.s32.totalorder %s184, %s186
      %p190 = scmp.eq.s32.totalorder %s24, 0
      %p191 = por %p189, %p190
      %p192 = scmp.ne.s32.totalorder %s184, %s186
      %p193 = scmp.eq.s32.totalorder %s29, 1
      %p194 = por %p192, %p193
      %p195 = scmp.ne.s32.totalorder %s186, %s187
      %p196 = scmp.eq.s32.totalorder %s29, 0
      %p197 = por %p195, %p196
      %p198 = scmp.ne.s32.totalorder %s186, %s187
      %p199 = scmp.eq.s32.totalorder %s30, 1
      %p200 = por %p198, %p199
      %p202 = scmp.ne.s32.totalorder %s187, %s201
      %p203 = scmp.eq.s32.totalorder %s30, 0
      %p204 = por %p202, %p203
      %s206 = sadd.s32 %s205, 1
      %p209 = scmp.eq.s32.totalorder %s24, 1
      %p210 = scmp.ne.s32.totalorder %s205, %s207
      %p211 = scmp.eq.s32.totalorder %s24, 0
      %p212 = por %p210, %p211
      %p213 = scmp.ne.s32.totalorder %s205, %s207
      %p214 = scmp.eq.s32.totalorder %s29, 1
      %p215 = por %p213, %p214
      %p216 = scmp.ne.s32.totalorder %s207, %s208
      %p217 = scmp.eq.s32.totalorder %s29, 0
      %p218 = por %p216, %p217
      %p219 = scmp.ne.s32.totalorder %s207, %s208
      %p220 = scmp.eq.s32.totalorder %s30, 1
      %p221 = por %p219, %p220
      %p223 = scmp.ne.s32.totalorder %s208, %s222
      %p224 = scmp.eq.s32.totalorder %s30, 0
      %p225 = por %p223, %p224
      %s227 = sadd.s32 %s226, 1
      %p230 = scmp.eq.s32.totalorder %s24, 1
      %p231 = scmp.ne.s32.totalorder %s226, %s228
      %p232 = scmp.eq.s32.totalorder %s24, 0
      %p233 = por %p231, %p232
      %p234 = scmp.ne.s32.totalorder %s226, %s228
      %p235 = scmp.eq.s32.totalorder %s29, 1
      %p236 = por %p234, %p235
      %p237 = scmp.ne.s32.totalorder %s228, %s229
      %p238 = scmp.eq.s32.totalorder %s29, 0
      %p239 = por %p237, %p238
      %p240 = scmp.ne.s32.totalorder %s228, %s229
      %p241 = scmp.eq.s32.totalorder %s30, 1
      %p242 = por %p240, %p241
      %p244 = scmp.ne.s32.totalorder %s229, %s243
      %p245 = scmp.eq.s32.totalorder %s30, 0
      %p246 = por %p244, %p245
      %s248 = sadd.s32 %s247, 1
      %p251 = scmp.eq.s32.totalorder %s24, 1
      %p252 = scmp.ne.s32.totalorder %s247, %s249
      %p253 = scmp.eq.s32.totalorder %s24, 0
      %p254 = por %p252, %p253
      %p255 = scmp.ne.s32.totalorder %s247, %s249
      %p256 = scmp.eq.s32.totalorder %s29, 1
      %p257 = por %p255, %p256
      %p258 = scmp.ne.s32.totalorder %s249, %s250
      %p259 = scmp.eq.s32.totalorder %s29, 0
      %p260 = por %p258, %p259
      %p261 = scmp.ne.s32.totalorder %s249, %s250
      %p262 = scmp.eq.s32.totalorder %s30, 1
      %p263 = por %p261, %p262
      %p265 = scmp.ne.s32.totalorder %s250, %s264
      %p266 = scmp.eq.s32.totalorder %s30, 0
      %p267 = por %p265, %p266
      %s269 = sadd.s32 %s268, 1
      %p272 = scmp.eq.s32.totalorder %s24, 1
      %p273 = scmp.ne.s32.totalorder %s268, %s270
      %p274 = scmp.eq.s32.totalorder %s24, 0
      %p275 = por %p273, %p274
      %p276 = scmp.ne.s32.totalorder %s268, %s270
      %p277 = scmp.eq.s32.totalorder %s29, 1
      %p278 = por %p276, %p277
      %p279 = scmp.ne.s32.totalorder %s270, %s271
      %p280 = scmp.eq.s32.totalorder %s29, 0
      %p281 = por %p279, %p280
      %p282 = scmp.ne.s32.totalorder %s270, %s271
      %p283 = scmp.eq.s32.totalorder %s30, 1
      %p284 = por %p282, %p283
      %p286 = scmp.ne.s32.totalorder %s271, %s285
      %p287 = scmp.eq.s32.totalorder %s30, 0
      %p288 = por %p286, %p287
      %s290 = sadd.s32 %s289, 1
      %p293 = scmp.eq.s32.totalorder %s24, 1
      %p294 = scmp.ne.s32.totalorder %s289, %s291
      %p295 = scmp.eq.s32.totalorder %s24, 0
      %p296 = por %p294, %p295
      %p297 = scmp.ne.s32.totalorder %s289, %s291
      %p298 = scmp.eq.s32.totalorder %s29, 1
      %p299 = por %p297, %p298
      %p300 = scmp.ne.s32.totalorder %s291, %s292
      %p301 = scmp.eq.s32.totalorder %s29, 0
      %p302 = por %p300, %p301
      %p303 = scmp.ne.s32.totalorder %s291, %s292
      %p304 = scmp.eq.s32.totalorder %s30, 1
      %p305 = por %p303, %p304
      %p307 = scmp.ne.s32.totalorder %s292, %s306
      %p308 = scmp.eq.s32.totalorder %s30, 0
      %p309 = por %p307, %p308
      %s311 = sadd.s32 %s310, 1
      %p314 = scmp.eq.s32.totalorder %s24, 1
      %p315 = scmp.ne.s32.totalorder %s310, %s312
      %p316 = scmp.eq.s32.totalorder %s24, 0
      %p317 = por %p315, %p316
      %p318 = scmp.ne.s32.totalorder %s310, %s312
      %p319 = scmp.eq.s32.totalorder %s29, 1
      %p320 = por %p318, %p319
      %p321 = scmp.ne.s32.totalorder %s312, %s313
      %p322 = scmp.eq.s32.totalorder %s29, 0
      %p323 = por %p321, %p322
      %p324 = scmp.ne.s32.totalorder %s312, %s313
      %p325 = scmp.eq.s32.totalorder %s30, 1
      %p326 = por %p324, %p325
      %p328 = scmp.ne.s32.totalorder %s313, %s327
      %p329 = scmp.eq.s32.totalorder %s30, 0
      %p330 = por %p328, %p329
      %s332 = sadd.s32 %s331, 1
      %p335 = scmp.eq.s32.totalorder %s24, 1
      %p336 = scmp.ne.s32.totalorder %s331, %s333
      %p337 = scmp.eq.s32.totalorder %s24, 0
      %p338 = por %p336, %p337
      %p339 = scmp.ne.s32.totalorder %s331, %s333
      %p340 = scmp.eq.s32.totalorder %s29, 1
      %p341 = por %p339, %p340
      %p342 = scmp.ne.s32.totalorder %s333, %s334
      %p343 = scmp.eq.s32.totalorder %s29, 0
      %p344 = por %p342, %p343
      %p345 = scmp.ne.s32.totalorder %s333, %s334
      %p346 = scmp.eq.s32.totalorder %s30, 1
      %p347 = por %p345, %p346
      %p349 = scmp.ne.s32.totalorder %s334, %s348
      %p350 = scmp.eq.s32.totalorder %s30, 0
      %p351 = por %p349, %p350
      %s352 = ssub.s32 %s24, %s31
      %p353 = scmp.eq.s32.totalorder %s352, 0
      %s355 = sadd.s32 %s354, 1
      %s356 = scalar_select %p353, %s354, %s355
      %p359 = pneg %p353
      %p360 = scmp.eq.s32.totalorder %s24, 1
      %p361 = por %p359, %p360
      %p362 = scmp.ne.s32.totalorder %s354, %s357
      %p363 = scmp.eq.s32.totalorder %s24, 0
      %p364 = por %p362, %p363
      %p365 = scmp.ne.s32.totalorder %s354, %s357
      %p366 = scmp.eq.s32.totalorder %s29, 1
      %p367 = por %p365, %p366
      %p368 = scmp.ne.s32.totalorder %s357, %s358
      %p369 = scmp.eq.s32.totalorder %s29, 0
      %p370 = por %p368, %p369
      %p371 = scmp.ne.s32.totalorder %s357, %s358
      %p372 = scmp.eq.s32.totalorder %s30, 1
      %p373 = por %p371, %p372
      %p375 = scmp.ne.s32.totalorder %s358, %s374
      %p376 = scmp.eq.s32.totalorder %s30, 0
      %p377 = por %p375, %p376
      %p378 = scmp.le.s32.totalorder 1, %s24
      %p379 = scmp.lt.s32.totalorder %s24, 3
      %p380 = pnand %p378, %p379
      %p381 = pneg %p380
      // Predicated region
      $region9: #{lenet5_forward.1} parent=5 // pred_check
        _
      $region10: #{lenet5_forward.1} parent=5 // pred_check_branch
        %383 = sbr.rel (%p380) target = $region12
      $region11: #{lenet5_forward.1} parent=5 // pred_region
        %s384 = ssub.s32 %s24, 1
        // Predicated region
        $region13: #{lenet5_forward.1} parent=11 // pred_check
          %p385 = pneg %p71
        $region14: #{lenet5_forward.1} parent=11 // pred_check_branch
          %387 = sbr.rel (%p385) target = $region16
        $region15: #{lenet5_forward.1} parent=11 // pred_region
          _
        $region16: #{lenet5_forward.1} parent=11 // pred_fallthru
          _
        // Predicated region
        $region17: #{lenet5_forward.1} parent=11 // pred_check
          %p388 = pneg %p92
        $region18: #{lenet5_forward.1} parent=11 // pred_check_branch
          %390 = sbr.rel (%p388) target = $region20
        $region19: #{lenet5_forward.1} parent=11 // pred_region
          _
        $region20: #{lenet5_forward.1} parent=11 // pred_fallthru
          _
        // Predicated region
        $region21: #{lenet5_forward.1} parent=11 // pred_check
          %p391 = pneg %p113
        $region22: #{lenet5_forward.1} parent=11 // pred_check_branch
          %393 = sbr.rel (%p391) target = $region24
        $region23: #{lenet5_forward.1} parent=11 // pred_region
          _
        $region24: #{lenet5_forward.1} parent=11 // pred_fallthru
          _
        // Predicated region
        $region25: #{lenet5_forward.1} parent=11 // pred_check
          %p394 = pneg %p134
        $region26: #{lenet5_forward.1} parent=11 // pred_check_branch
          %396 = sbr.rel (%p394) target = $region28
        $region27: #{lenet5_forward.1} parent=11 // pred_region
          _
        $region28: #{lenet5_forward.1} parent=11 // pred_fallthru
          _
        // Predicated region
        $region29: #{lenet5_forward.1} parent=11 // pred_check
          %p397 = pneg %p155
        $region30: #{lenet5_forward.1} parent=11 // pred_check_branch
          %399 = sbr.rel (%p397) target = $region32
        $region31: #{lenet5_forward.1} parent=11 // pred_region
          _
        $region32: #{lenet5_forward.1} parent=11 // pred_fallthru
          _
        // Predicated region
        $region33: #{lenet5_forward.1} parent=11 // pred_check
          %p400 = pneg %p176
        $region34: #{lenet5_forward.1} parent=11 // pred_check_branch
          %402 = sbr.rel (%p400) target = $region36
        $region35: #{lenet5_forward.1} parent=11 // pred_region
          _
        $region36: #{lenet5_forward.1} parent=11 // pred_fallthru
          _
        // Predicated region
        $region37: #{lenet5_forward.1} parent=11 // pred_check
          %p403 = pneg %p197
        $region38: #{lenet5_forward.1} parent=11 // pred_check_branch
          %405 = sbr.rel (%p403) target = $region40
        $region39: #{lenet5_forward.1} parent=11 // pred_region
          _
        $region40: #{lenet5_forward.1} parent=11 // pred_fallthru
          _
        // Predicated region
        $region41: #{lenet5_forward.1} parent=11 // pred_check
          %p406 = pneg %p218
        $region42: #{lenet5_forward.1} parent=11 // pred_check_branch
          %408 = sbr.rel (%p406) target = $region44
        $region43: #{lenet5_forward.1} parent=11 // pred_region
          _
        $region44: #{lenet5_forward.1} parent=11 // pred_fallthru
          _
        // Predicated region
        $region45: #{lenet5_forward.1} parent=11 // pred_check
          %p409 = pneg %p239
        $region46: #{lenet5_forward.1} parent=11 // pred_check_branch
          %411 = sbr.rel (%p409) target = $region48
        $region47: #{lenet5_forward.1} parent=11 // pred_region
          _
        $region48: #{lenet5_forward.1} parent=11 // pred_fallthru
          _
        // Predicated region
        $region49: #{lenet5_forward.1} parent=11 // pred_check
          %p412 = pneg %p260
        $region50: #{lenet5_forward.1} parent=11 // pred_check_branch
          %414 = sbr.rel (%p412) target = $region52
        $region51: #{lenet5_forward.1} parent=11 // pred_region
          _
        $region52: #{lenet5_forward.1} parent=11 // pred_fallthru
          _
        // Predicated region
        $region53: #{lenet5_forward.1} parent=11 // pred_check
          %p415 = pneg %p281
        $region54: #{lenet5_forward.1} parent=11 // pred_check_branch
          %417 = sbr.rel (%p415) target = $region56
        $region55: #{lenet5_forward.1} parent=11 // pred_region
          _
        $region56: #{lenet5_forward.1} parent=11 // pred_fallthru
          _
        // Predicated region
        $region57: #{lenet5_forward.1} parent=11 // pred_check
          %p418 = pneg %p302
        $region58: #{lenet5_forward.1} parent=11 // pred_check_branch
          %420 = sbr.rel (%p418) target = $region60
        $region59: #{lenet5_forward.1} parent=11 // pred_region
          _
        $region60: #{lenet5_forward.1} parent=11 // pred_fallthru
          _
        // Predicated region
        $region61: #{lenet5_forward.1} parent=11 // pred_check
          %p421 = pneg %p323
        $region62: #{lenet5_forward.1} parent=11 // pred_check_branch
          %423 = sbr.rel (%p421) target = $region64
        $region63: #{lenet5_forward.1} parent=11 // pred_region
          _
        $region64: #{lenet5_forward.1} parent=11 // pred_fallthru
          _
        // Predicated region
        $region65: #{lenet5_forward.1} parent=11 // pred_check
          %p424 = pneg %p344
        $region66: #{lenet5_forward.1} parent=11 // pred_check_branch
          %426 = sbr.rel (%p424) target = $region68
        $region67: #{lenet5_forward.1} parent=11 // pred_region
          _
        $region68: #{lenet5_forward.1} parent=11 // pred_fallthru
          _
      $region12: #{lenet5_forward.1} parent=5 // pred_fallthru
        _
      %p427 = scmp.lt.s32.totalorder %s24, 2
      // Predicated region
      $region69: #{lenet5_forward.1} parent=5 // pred_check
        %p428 = pneg %p427
      $region70: #{lenet5_forward.1} parent=5 // pred_check_branch
        %430 = sbr.rel (%p428) target = $region72
      $region71: #{lenet5_forward.1} parent=5 // pred_region
        // Predicated region
        $region73: #{lenet5_forward.1} parent=71 // pred_check
          %p431 = pneg %p44
        $region74: #{lenet5_forward.1} parent=71 // pred_check_branch
          %433 = sbr.rel (%p431) target = $region76
        $region75: #{lenet5_forward.1} parent=71 // pred_region
          %s434 = smul.u32 32, %s24
          %p435 = scmp.lt.s32.totalorder %s434, 63
          %s436 = scalar_select %p435, %s434, 63
          %s437 = smul.addr %s436, 8
          %s438 = scalar_lea.vmem %s0, %s437
          %s439 = smul.u32 32, %s24
        $region76: #{lenet5_forward.1} parent=71 // pred_fallthru
          _
      $region72: #{lenet5_forward.1} parent=5 // pred_fallthru
        _
      %p440 = scmp.le.s32.totalorder 1, %s24
      %p441 = scmp.lt.s32.totalorder %s24, 3
      %p442 = pnand %p440, %p441
      %p443 = pneg %p442
      // Predicated region
      $region77: #{lenet5_forward.1} parent=5 // pred_check
        _
      $region78: #{lenet5_forward.1} parent=5 // pred_check_branch
        %445 = sbr.rel (%p442) target = $region80
      $region79: #{lenet5_forward.1} parent=5 // pred_region
        %s446 = ssub.s32 %s24, 1
        %s447 = smul.u32 32, %s29
        %p448 = scmp.lt.s32.totalorder %s447, 63
        %s449 = scalar_select %p448, %s447, 63
        %s450 = smul.addr %s449, 8
        %s451 = scalar_lea.vmem %s0, %s450
        %p452 = pneg %p50
        %p453 = pneg %p47
        %p454 = pneg %p71
        %p455 = pneg %p68
        %p456 = pneg %p92
        %p457 = pneg %p89
        %p458 = pneg %p113
        %p459 = pneg %p110
        %p460 = pneg %p134
        %p461 = pneg %p131
        %p462 = pneg %p155
        %p463 = pneg %p152
        %p464 = pneg %p176
        %p465 = pneg %p173
        %p466 = pneg %p197
        %p467 = pneg %p194
        %p468 = pneg %p218
        %p469 = pneg %p215
        %p470 = pneg %p239
        %p471 = pneg %p236
        %p472 = pneg %p260
        %p473 = pneg %p257
        %p474 = pneg %p281
        %p475 = pneg %p278
        %p476 = pneg %p302
        %p477 = pneg %p299
        %p478 = pneg %p323
        %p479 = pneg %p320
        %p480 = pneg %p344
        %p481 = pneg %p341
        %p482 = pneg %p370
        %p483 = pneg %p367
        %s484 = sand.u32 %s357, 1
        %s485 = scalar_lea.sflag [#allocation8], %s484
        %s486 = sand.u32 %s357, 1
        %s487 = smul.addr %s486, 8
        %s488 = scalar_lea.vmem [#allocation7], %s487
        %s489 = smul.u32 32, %s29
        %p490 = scmp.lt.s32.totalorder %s489, 63
        %s491 = scalar_select %p490, %s489, 63
        %s492 = smul.addr %s491, 8
        %s493 = scalar_lea.vmem %s0, %s492
        %s494 = smul.u32 32, %s29
        %v495 = vld [vmem:[%s493] sm:$0xff]
        %v496 = vld [vmem:[%s493 + $0x8] sm:$0xff]
        %v497 = vld [vmem:[%s493 + $0x10] sm:$0xff]
        %v498 = vld [vmem:[%s493 + $0x18] sm:$0xff]
        %v499 = vld [vmem:[%s493 + $0x20] sm:$0xff]
        %v500 = vld [vmem:[%s493 + $0x28] sm:$0xff]
        %v501 = vld [vmem:[%s493 + $0x30] sm:$0xff]
        %v502 = vld [vmem:[%s493 + $0x38] sm:$0xff]
        %v503 = vld [vmem:[%s493 + $0x40] sm:$0xff]
        %v504 = vld [vmem:[%s493 + $0x48] sm:$0xff]
        %v505 = vld [vmem:[%s493 + $0x50] sm:$0xff]
        %v506 = vld [vmem:[%s493 + $0x58] sm:$0xff]
        %v507 = vld [vmem:[%s493 + $0x60] sm:$0xff]
        %v508 = vld [vmem:[%s493 + $0x68] sm:$0xff]
        %v509 = vld [vmem:[%s493 + $0x70] sm:$0xff]
        %v510 = vld [vmem:[%s493 + $0x78] sm:$0xff]
        %v511 = vld [vmem:[%s493 + $0x80] sm:$0xff]
        %v512 = vld [vmem:[%s493 + $0x88] sm:$0xff]
        %v513 = vld [vmem:[%s493 + $0x90] sm:$0xff]
        %v514 = vld [vmem:[%s493 + $0x98] sm:$0xff]
        %v515 = vld [vmem:[%s493 + $0xa0] sm:$0xff]
        %v516 = vld [vmem:[%s493 + $0xa8] sm:$0xff]
        %v517 = vld [vmem:[%s493 + $0xb0] sm:$0xff]
        %v518 = vld [vmem:[%s493 + $0xb8] sm:$0xff]
        %v519 = vld [vmem:[%s493 + $0xc0] sm:$0xff]
        %v520 = vld [vmem:[%s493 + $0xc8] sm:$0xff]
        %v521 = vld [vmem:[%s493 + $0xd0] sm:$0xff]
        %v522 = vld [vmem:[%s493 + $0xd8] sm:$0xff]
        %v523 = vld [vmem:[%s493 + $0xe0] sm:$0xff]
        %v524 = vld [vmem:[%s493 + $0xe8] sm:$0xff]
        %v525 = vld [vmem:[%s493 + $0xf0] sm:$0xff]
        %v526 = vld [vmem:[%s493 + $0xf8] sm:$0xf]
        %vm527 = vcmask 785408
        %528 = vst.msk [vmem:[#allocation2] sm:$0xff] %vm527, %v495
        %529 = vst.msk [vmem:[#allocation2 + $0x20] sm:$0xff] %vm527, %v496
        %530 = vst.msk [vmem:[#allocation2 + $0x40] sm:$0xff] %vm527, %v497
        %531 = vst.msk [vmem:[#allocation2 + $0x60] sm:$0xff] %vm527, %v498
        %532 = vst.msk [vmem:[#allocation2 + $0x80] sm:$0xff] %vm527, %v499
        %533 = vst.msk [vmem:[#allocation2 + $0xa0] sm:$0xff] %vm527, %v500
        %534 = vst.msk [vmem:[#allocation2 + $0xc0] sm:$0xff] %vm527, %v501
        %535 = vst.msk [vmem:[#allocation2 + $0xe0] sm:$0xff] %vm527, %v502
        %536 = vst.msk [vmem:[#allocation2 + $0x100] sm:$0xff] %vm527, %v503
        %537 = vst.msk [vmem:[#allocation2 + $0x120] sm:$0xff] %vm527, %v504
        %538 = vst.msk [vmem:[#allocation2 + $0x140] sm:$0xff] %vm527, %v505
        %539 = vst.msk [vmem:[#allocation2 + $0x160] sm:$0xff] %vm527, %v506
        %540 = vst.msk [vmem:[#allocation2 + $0x180] sm:$0xff] %vm527, %v507
        %541 = vst.msk [vmem:[#allocation2 + $0x1a0] sm:$0xff] %vm527, %v508
        %542 = vst.msk [vmem:[#allocation2 + $0x1c0] sm:$0xff] %vm527, %v509
        %543 = vst.msk [vmem:[#allocation2 + $0x1e0] sm:$0xff] %vm527, %v510
        %544 = vst.msk [vmem:[#allocation2 + $0x200] sm:$0xff] %vm527, %v511
        %545 = vst.msk [vmem:[#allocation2 + $0x220] sm:$0xff] %vm527, %v512
        %546 = vst.msk [vmem:[#allocation2 + $0x240] sm:$0xff] %vm527, %v513
        %547 = vst.msk [vmem:[#allocation2 + $0x260] sm:$0xff] %vm527, %v514
        %548 = vst.msk [vmem:[#allocation2 + $0x280] sm:$0xff] %vm527, %v515
        %549 = vst.msk [vmem:[#allocation2 + $0x2a0] sm:$0xff] %vm527, %v516
        %550 = vst.msk [vmem:[#allocation2 + $0x2c0] sm:$0xff] %vm527, %v517
        %551 = vst.msk [vmem:[#allocation2 + $0x2e0] sm:$0xff] %vm527, %v518
        %552 = vst.msk [vmem:[#allocation2 + $0x300] sm:$0xff] %vm527, %v519
        %553 = vst.msk [vmem:[#allocation2 + $0x320] sm:$0xff] %vm527, %v520
        %554 = vst.msk [vmem:[#allocation2 + $0x340] sm:$0xff] %vm527, %v521
        %555 = vst.msk [vmem:[#allocation2 + $0x360] sm:$0xff] %vm527, %v522
        %556 = vst.msk [vmem:[#allocation2 + $0x380] sm:$0xff] %vm527, %v523
        %557 = vst.msk [vmem:[#allocation2 + $0x3a0] sm:$0xff] %vm527, %v524
        %558 = vst.msk [vmem:[#allocation2 + $0x3c0] sm:$0xff] %vm527, %v525
        %vm559 = vcmask 781312
        %560 = vst.msk [vmem:[#allocation2 + $0x3e0] sm:$0xf] %vm559, %v526
        %v561 = vld [vmem:[%s493 + $0x1] sm:$0xff]
        %v562 = vld [vmem:[%s493 + $0x9] sm:$0xff]
        %v563 = vld [vmem:[%s493 + $0x11] sm:$0xff]
        %v564 = vld [vmem:[%s493 + $0x19] sm:$0xff]
        %v565 = vld [vmem:[%s493 + $0x21] sm:$0xff]
        %v566 = vld [vmem:[%s493 + $0x29] sm:$0xff]
        %v567 = vld [vmem:[%s493 + $0x31] sm:$0xff]
        %v568 = vld [vmem:[%s493 + $0x39] sm:$0xff]
        %v569 = vld [vmem:[%s493 + $0x41] sm:$0xff]
        %v570 = vld [vmem:[%s493 + $0x49] sm:$0xff]
        %v571 = vld [vmem:[%s493 + $0x51] sm:$0xff]
        %v572 = vld [vmem:[%s493 + $0x59] sm:$0xff]
        %v573 = vld [vmem:[%s493 + $0x61] sm:$0xff]
        %v574 = vld [vmem:[%s493 + $0x69] sm:$0xff]
        %v575 = vld [vmem:[%s493 + $0x71] sm:$0xff]
        %v576 = vld [vmem:[%s493 + $0x79] sm:$0xff]
        %v577 = vld [vmem:[%s493 + $0x81] sm:$0xff]
        %v578 = vld [vmem:[%s493 + $0x89] sm:$0xff]
        %v579 = vld [vmem:[%s493 + $0x91] sm:$0xff]
        %v580 = vld [vmem:[%s493 + $0x99] sm:$0xff]
        %v581 = vld [vmem:[%s493 + $0xa1] sm:$0xff]
        %v582 = vld [vmem:[%s493 + $0xa9] sm:$0xff]
        %v583 = vld [vmem:[%s493 + $0xb1] sm:$0xff]
        %v584 = vld [vmem:[%s493 + $0xb9] sm:$0xff]
        %v585 = vld [vmem:[%s493 + $0xc1] sm:$0xff]
        %v586 = vld [vmem:[%s493 + $0xc9] sm:$0xff]
        %v587 = vld [vmem:[%s493 + $0xd1] sm:$0xff]
        %v588 = vld [vmem:[%s493 + $0xd9] sm:$0xff]
        %v589 = vld [vmem:[%s493 + $0xe1] sm:$0xff]
        %v590 = vld [vmem:[%s493 + $0xe9] sm:$0xff]
        %v591 = vld [vmem:[%s493 + $0xf1] sm:$0xff]
        %v592 = vld [vmem:[%s493 + $0xf9] sm:$0xf]
        %625 = vrot.lane.b32.xlu0 %v561, 96
        %v626 = vpop.permute.xlu0 %625
        %627 = vrot.lane.b32.xlu0 %v562, 96
        %v628 = vpop.permute.xlu0 %627
        %629 = vrot.lane.b32.xlu0 %v563, 96
        %v630 = vpop.permute.xlu0 %629
        %631 = vrot.lane.b32.xlu0 %v564, 96
        %v632 = vpop.permute.xlu0 %631
        %633 = vrot.lane.b32.xlu0 %v565, 96
        %v634 = vpop.permute.xlu0 %633
        %635 = vrot.lane.b32.xlu0 %v566, 96
        %v636 = vpop.permute.xlu0 %635
        %637 = vrot.lane.b32.xlu0 %v567, 96
        %v638 = vpop.permute.xlu0 %637
        %639 = vrot.lane.b32.xlu0 %v568, 96
        %v640 = vpop.permute.xlu0 %639
        %641 = vrot.lane.b32.xlu0 %v569, 96
        %v642 = vpop.permute.xlu0 %641
        %643 = vrot.lane.b32.xlu0 %v570, 96
        %v644 = vpop.permute.xlu0 %643
        %645 = vrot.lane.b32.xlu0 %v571, 96
        %v646 = vpop.permute.xlu0 %645
        %647 = vrot.lane.b32.xlu0 %v572, 96
        %v648 = vpop.permute.xlu0 %647
        %649 = vrot.lane.b32.xlu0 %v573, 96
        %v650 = vpop.permute.xlu0 %649
        %651 = vrot.lane.b32.xlu0 %v574, 96
        %v652 = vpop.permute.xlu0 %651
        %653 = vrot.lane.b32.xlu0 %v575, 96
        %v654 = vpop.permute.xlu0 %653
        %655 = vrot.lane.b32.xlu0 %v576, 96
        %v656 = vpop.permute.xlu0 %655
        %657 = vrot.lane.b32.xlu0 %v577, 96
        %v658 = vpop.permute.xlu0 %657
        %659 = vrot.lane.b32.xlu0 %v578, 96
        %v660 = vpop.permute.xlu0 %659
        %661 = vrot.lane.b32.xlu0 %v579, 96
        %v662 = vpop.permute.xlu0 %661
        %663 = vrot.lane.b32.xlu0 %v580, 96
        %v664 = vpop.permute.xlu0 %663
        %665 = vrot.lane.b32.xlu0 %v581, 96
        %v666 = vpop.permute.xlu0 %665
        %667 = vrot.lane.b32.xlu0 %v582, 96
        %v668 = vpop.permute.xlu0 %667
        %669 = vrot.lane.b32.xlu0 %v583, 96
        %v670 = vpop.permute.xlu0 %669
        %671 = vrot.lane.b32.xlu0 %v584, 96
        %v672 = vpop.permute.xlu0 %671
        %673 = vrot.lane.b32.xlu0 %v585, 96
        %v674 = vpop.permute.xlu0 %673
        %675 = vrot.lane.b32.xlu0 %v586, 96
        %v676 = vpop.permute.xlu0 %675
        %677 = vrot.lane.b32.xlu0 %v587, 96
        %v678 = vpop.permute.xlu0 %677
        %679 = vrot.lane.b32.xlu0 %v588, 96
        %v680 = vpop.permute.xlu0 %679
        %681 = vrot.lane.b32.xlu0 %v589, 96
        %v682 = vpop.permute.xlu0 %681
        %683 = vrot.lane.b32.xlu0 %v590, 96
        %v684 = vpop.permute.xlu0 %683
        %685 = vrot.lane.b32.xlu0 %v591, 96
        %v686 = vpop.permute.xlu0 %685
        %687 = vrot.lane.b32.xlu0 %v592, 96
        %v688 = vpop.permute.xlu0 %687
        %vm721 = vcmask 1048320
        %722 = vst.msk [vmem:[#allocation2] sm:$0xff] %vm721, %v626
        %vm723 = vcmask 523264
        %724 = vst.msk [vmem:[#allocation2 + $0x8] sm:$0xff] %vm723, %v626
        %725 = vst.msk [vmem:[#allocation2 + $0x20] sm:$0xff] %vm721, %v628
        %726 = vst.msk [vmem:[#allocation2 + $0x28] sm:$0xff] %vm723, %v628
        %727 = vst.msk [vmem:[#allocation2 + $0x40] sm:$0xff] %vm721, %v630
        %728 = vst.msk [vmem:[#allocation2 + $0x48] sm:$0xff] %vm723, %v630
        %729 = vst.msk [vmem:[#allocation2 + $0x60] sm:$0xff] %vm721, %v632
        %730 = vst.msk [vmem:[#allocation2 + $0x68] sm:$0xff] %vm723, %v632
        %731 = vst.msk [vmem:[#allocation2 + $0x80] sm:$0xff] %vm721, %v634
        %732 = vst.msk [vmem:[#allocation2 + $0x88] sm:$0xff] %vm723, %v634
        %733 = vst.msk [vmem:[#allocation2 + $0xa0] sm:$0xff] %vm721, %v636
        %734 = vst.msk [vmem:[#allocation2 + $0xa8] sm:$0xff] %vm723, %v636
        %735 = vst.msk [vmem:[#allocation2 + $0xc0] sm:$0xff] %vm721, %v638
        %736 = vst.msk [vmem:[#allocation2 + $0xc8] sm:$0xff] %vm723, %v638
        %737 = vst.msk [vmem:[#allocation2 + $0xe0] sm:$0xff] %vm721, %v640
        %738 = vst.msk [vmem:[#allocation2 + $0xe8] sm:$0xff] %vm723, %v640
        %739 = vst.msk [vmem:[#allocation2 + $0x100] sm:$0xff] %vm721, %v642
        %740 = vst.msk [vmem:[#allocation2 + $0x108] sm:$0xff] %vm723, %v642
        %741 = vst.msk [vmem:[#allocation2 + $0x120] sm:$0xff] %vm721, %v644
        %742 = vst.msk [vmem:[#allocation2 + $0x128] sm:$0xff] %vm723, %v644
        %743 = vst.msk [vmem:[#allocation2 + $0x140] sm:$0xff] %vm721, %v646
        %744 = vst.msk [vmem:[#allocation2 + $0x148] sm:$0xff] %vm723, %v646
        %745 = vst.msk [vmem:[#allocation2 + $0x160] sm:$0xff] %vm721, %v648
        %746 = vst.msk [vmem:[#allocation2 + $0x168] sm:$0xff] %vm723, %v648
        %747 = vst.msk [vmem:[#allocation2 + $0x180] sm:$0xff] %vm721, %v650
        %748 = vst.msk [vmem:[#allocation2 + $0x188] sm:$0xff] %vm723, %v650
        %749 = vst.msk [vmem:[#allocation2 + $0x1a0] sm:$0xff] %vm721, %v652
        %750 = vst.msk [vmem:[#allocation2 + $0x1a8] sm:$0xff] %vm723, %v652
        %751 = vst.msk [vmem:[#allocation2 + $0x1c0] sm:$0xff] %vm721, %v654
        %752 = vst.msk [vmem:[#allocation2 + $0x1c8] sm:$0xff] %vm723, %v654
        %753 = vst.msk [vmem:[#allocation2 + $0x1e0] sm:$0xff] %vm721, %v656
        %754 = vst.msk [vmem:[#allocation2 + $0x1e8] sm:$0xff] %vm723, %v656
        %755 = vst.msk [vmem:[#allocation2 + $0x200] sm:$0xff] %vm721, %v658
        %756 = vst.msk [vmem:[#allocation2 + $0x208] sm:$0xff] %vm723, %v658
        %757 = vst.msk [vmem:[#allocation2 + $0x220] sm:$0xff] %vm721, %v660
        %758 = vst.msk [vmem:[#allocation2 + $0x228] sm:$0xff] %vm723, %v660
        %759 = vst.msk [vmem:[#allocation2 + $0x240] sm:$0xff] %vm721, %v662
        %760 = vst.msk [vmem:[#allocation2 + $0x248] sm:$0xff] %vm723, %v662
        %761 = vst.msk [vmem:[#allocation2 + $0x260] sm:$0xff] %vm721, %v664
        %762 = vst.msk [vmem:[#allocation2 + $0x268] sm:$0xff] %vm723, %v664
        %763 = vst.msk [vmem:[#allocation2 + $0x280] sm:$0xff] %vm721, %v666
        %764 = vst.msk [vmem:[#allocation2 + $0x288] sm:$0xff] %vm723, %v666
        %765 = vst.msk [vmem:[#allocation2 + $0x2a0] sm:$0xff] %vm721, %v668
        %766 = vst.msk [vmem:[#allocation2 + $0x2a8] sm:$0xff] %vm723, %v668
        %767 = vst.msk [vmem:[#allocation2 + $0x2c0] sm:$0xff] %vm721, %v670
        %768 = vst.msk [vmem:[#allocation2 + $0x2c8] sm:$0xff] %vm723, %v670
        %769 = vst.msk [vmem:[#allocation2 + $0x2e0] sm:$0xff] %vm721, %v672
        %770 = vst.msk [vmem:[#allocation2 + $0x2e8] sm:$0xff] %vm723, %v672
        %771 = vst.msk [vmem:[#allocation2 + $0x300] sm:$0xff] %vm721, %v674
        %772 = vst.msk [vmem:[#allocation2 + $0x308] sm:$0xff] %vm723, %v674
        %773 = vst.msk [vmem:[#allocation2 + $0x320] sm:$0xff] %vm721, %v676
        %774 = vst.msk [vmem:[#allocation2 + $0x328] sm:$0xff] %vm723, %v676
        %775 = vst.msk [vmem:[#allocation2 + $0x340] sm:$0xff] %vm721, %v678
        %776 = vst.msk [vmem:[#allocation2 + $0x348] sm:$0xff] %vm723, %v678
        %777 = vst.msk [vmem:[#allocation2 + $0x360] sm:$0xff] %vm721, %v680
        %778 = vst.msk [vmem:[#allocation2 + $0x368] sm:$0xff] %vm723, %v680
        %779 = vst.msk [vmem:[#allocation2 + $0x380] sm:$0xff] %vm721, %v682
        %780 = vst.msk [vmem:[#allocation2 + $0x388] sm:$0xff] %vm723, %v682
        %781 = vst.msk [vmem:[#allocation2 + $0x3a0] sm:$0xff] %vm721, %v684
        %782 = vst.msk [vmem:[#allocation2 + $0x3a8] sm:$0xff] %vm723, %v684
        %783 = vst.msk [vmem:[#allocation2 + $0x3c0] sm:$0xff] %vm721, %v686
        %784 = vst.msk [vmem:[#allocation2 + $0x3c8] sm:$0xff] %vm723, %v686
        %vm785 = vcmask 1044224
        %786 = vst.msk [vmem:[#allocation2 + $0x3e0] sm:$0xf] %vm785, %v688
        %vm787 = vcmask 519168
        %788 = vst.msk [vmem:[#allocation2 + $0x3e8] sm:$0xf] %vm787, %v688
        %v789 = vld [vmem:[%s493 + $0x2] sm:$0xff]
        %v790 = vld [vmem:[%s493 + $0xa] sm:$0xff]
        %v791 = vld [vmem:[%s493 + $0x12] sm:$0xff]
        %v792 = vld [vmem:[%s493 + $0x1a] sm:$0xff]
        %v793 = vld [vmem:[%s493 + $0x22] sm:$0xff]
        %v794 = vld [vmem:[%s493 + $0x2a] sm:$0xff]
        %v795 = vld [vmem:[%s493 + $0x32] sm:$0xff]
        %v796 = vld [vmem:[%s493 + $0x3a] sm:$0xff]
        %v797 = vld [vmem:[%s493 + $0x42] sm:$0xff]
        %v798 = vld [vmem:[%s493 + $0x4a] sm:$0xff]
        %v799 = vld [vmem:[%s493 + $0x52] sm:$0xff]
        %v800 = vld [vmem:[%s493 + $0x5a] sm:$0xff]
        %v801 = vld [vmem:[%s493 + $0x62] sm:$0xff]
        %v802 = vld [vmem:[%s493 + $0x6a] sm:$0xff]
        %v803 = vld [vmem:[%s493 + $0x72] sm:$0xff]
        %v804 = vld [vmem:[%s493 + $0x7a] sm:$0xff]
        %v805 = vld [vmem:[%s493 + $0x82] sm:$0xff]
        %v806 = vld [vmem:[%s493 + $0x8a] sm:$0xff]
        %v807 = vld [vmem:[%s493 + $0x92] sm:$0xff]
        %v808 = vld [vmem:[%s493 + $0x9a] sm:$0xff]
        %v809 = vld [vmem:[%s493 + $0xa2] sm:$0xff]
        %v810 = vld [vmem:[%s493 + $0xaa] sm:$0xff]
        %v811 = vld [vmem:[%s493 + $0xb2] sm:$0xff]
        %v812 = vld [vmem:[%s493 + $0xba] sm:$0xff]
        %v813 = vld [vmem:[%s493 + $0xc2] sm:$0xff]
        %v814 = vld [vmem:[%s493 + $0xca] sm:$0xff]
        %v815 = vld [vmem:[%s493 + $0xd2] sm:$0xff]
        %v816 = vld [vmem:[%s493 + $0xda] sm:$0xff]
        %v817 = vld [vmem:[%s493 + $0xe2] sm:$0xff]
        %v818 = vld [vmem:[%s493 + $0xea] sm:$0xff]
        %v819 = vld [vmem:[%s493 + $0xf2] sm:$0xff]
        %v820 = vld [vmem:[%s493 + $0xfa] sm:$0xf]
        %853 = vrot.lane.b32.xlu0 %v789, 64
        %v854 = vpop.permute.xlu0 %853
        %855 = vrot.lane.b32.xlu0 %v790, 64
        %v856 = vpop.permute.xlu0 %855
        %857 = vrot.lane.b32.xlu0 %v791, 64
        %v858 = vpop.permute.xlu0 %857
        %859 = vrot.lane.b32.xlu0 %v792, 64
        %v860 = vpop.permute.xlu0 %859
        %861 = vrot.lane.b32.xlu0 %v793, 64
        %v862 = vpop.permute.xlu0 %861
        %863 = vrot.lane.b32.xlu0 %v794, 64
        %v864 = vpop.permute.xlu0 %863
        %865 = vrot.lane.b32.xlu0 %v795, 64
        %v866 = vpop.permute.xlu0 %865
        %867 = vrot.lane.b32.xlu0 %v796, 64
        %v868 = vpop.permute.xlu0 %867
        %869 = vrot.lane.b32.xlu0 %v797, 64
        %v870 = vpop.permute.xlu0 %869
        %871 = vrot.lane.b32.xlu0 %v798, 64
        %v872 = vpop.permute.xlu0 %871
        %873 = vrot.lane.b32.xlu0 %v799, 64
        %v874 = vpop.permute.xlu0 %873
        %875 = vrot.lane.b32.xlu0 %v800, 64
        %v876 = vpop.permute.xlu0 %875
        %877 = vrot.lane.b32.xlu0 %v801, 64
        %v878 = vpop.permute.xlu0 %877
        %879 = vrot.lane.b32.xlu0 %v802, 64
        %v880 = vpop.permute.xlu0 %879
        %881 = vrot.lane.b32.xlu0 %v803, 64
        %v882 = vpop.permute.xlu0 %881
        %883 = vrot.lane.b32.xlu0 %v804, 64
        %v884 = vpop.permute.xlu0 %883
        %885 = vrot.lane.b32.xlu0 %v805, 64
        %v886 = vpop.permute.xlu0 %885
        %887 = vrot.lane.b32.xlu0 %v806, 64
        %v888 = vpop.permute.xlu0 %887
        %889 = vrot.lane.b32.xlu0 %v807, 64
        %v890 = vpop.permute.xlu0 %889
        %891 = vrot.lane.b32.xlu0 %v808, 64
        %v892 = vpop.permute.xlu0 %891
        %893 = vrot.lane.b32.xlu0 %v809, 64
        %v894 = vpop.permute.xlu0 %893
        %895 = vrot.lane.b32.xlu0 %v810, 64
        %v896 = vpop.permute.xlu0 %895
        %897 = vrot.lane.b32.xlu0 %v811, 64
        %v898 = vpop.permute.xlu0 %897
        %899 = vrot.lane.b32.xlu0 %v812, 64
        %v900 = vpop.permute.xlu0 %899
        %901 = vrot.lane.b32.xlu0 %v813, 64
        %v902 = vpop.permute.xlu0 %901
        %903 = vrot.lane.b32.xlu0 %v814, 64
        %v904 = vpop.permute.xlu0 %903
        %905 = vrot.lane.b32.xlu0 %v815, 64
        %v906 = vpop.permute.xlu0 %905
        %907 = vrot.lane.b32.xlu0 %v816, 64
        %v908 = vpop.permute.xlu0 %907
        %909 = vrot.lane.b32.xlu0 %v817, 64
        %v910 = vpop.permute.xlu0 %909
        %911 = vrot.lane.b32.xlu0 %v818, 64
        %v912 = vpop.permute.xlu0 %911
        %913 = vrot.lane.b32.xlu0 %v819, 64
        %v914 = vpop.permute.xlu0 %913
        %915 = vrot.lane.b32.xlu0 %v820, 64
        %v916 = vpop.permute.xlu0 %915
        %vm949 = vcmask 1048064
        %950 = vst.msk [vmem:[#allocation2 + $0x8] sm:$0xff] %vm949, %v854
        %vm951 = vcmask 261120
        %952 = vst.msk [vmem:[#allocation2 + $0x10] sm:$0xff] %vm951, %v854
        %953 = vst.msk [vmem:[#allocation2 + $0x28] sm:$0xff] %vm949, %v856
        %954 = vst.msk [vmem:[#allocation2 + $0x30] sm:$0xff] %vm951, %v856
        %955 = vst.msk [vmem:[#allocation2 + $0x48] sm:$0xff] %vm949, %v858
        %956 = vst.msk [vmem:[#allocation2 + $0x50] sm:$0xff] %vm951, %v858
        %957 = vst.msk [vmem:[#allocation2 + $0x68] sm:$0xff] %vm949, %v860
        %958 = vst.msk [vmem:[#allocation2 + $0x70] sm:$0xff] %vm951, %v860
        %959 = vst.msk [vmem:[#allocation2 + $0x88] sm:$0xff] %vm949, %v862
        %960 = vst.msk [vmem:[#allocation2 + $0x90] sm:$0xff] %vm951, %v862
        %961 = vst.msk [vmem:[#allocation2 + $0xa8] sm:$0xff] %vm949, %v864
        %962 = vst.msk [vmem:[#allocation2 + $0xb0] sm:$0xff] %vm951, %v864
        %963 = vst.msk [vmem:[#allocation2 + $0xc8] sm:$0xff] %vm949, %v866
        %964 = vst.msk [vmem:[#allocation2 + $0xd0] sm:$0xff] %vm951, %v866
        %965 = vst.msk [vmem:[#allocation2 + $0xe8] sm:$0xff] %vm949, %v868
        %966 = vst.msk [vmem:[#allocation2 + $0xf0] sm:$0xff] %vm951, %v868
        %967 = vst.msk [vmem:[#allocation2 + $0x108] sm:$0xff] %vm949, %v870
        %968 = vst.msk [vmem:[#allocation2 + $0x110] sm:$0xff] %vm951, %v870
        %969 = vst.msk [vmem:[#allocation2 + $0x128] sm:$0xff] %vm949, %v872
        %970 = vst.msk [vmem:[#allocation2 + $0x130] sm:$0xff] %vm951, %v872
        %971 = vst.msk [vmem:[#allocation2 + $0x148] sm:$0xff] %vm949, %v874
        %972 = vst.msk [vmem:[#allocation2 + $0x150] sm:$0xff] %vm951, %v874
        %973 = vst.msk [vmem:[#allocation2 + $0x168] sm:$0xff] %vm949, %v876
        %974 = vst.msk [vmem:[#allocation2 + $0x170] sm:$0xff] %vm951, %v876
        %975 = vst.msk [vmem:[#allocation2 + $0x188] sm:$0xff] %vm949, %v878
        %976 = vst.msk [vmem:[#allocation2 + $0x190] sm:$0xff] %vm951, %v878
        %977 = vst.msk [vmem:[#allocation2 + $0x1a8] sm:$0xff] %vm949, %v880
        %978 = vst.msk [vmem:[#allocation2 + $0x1b0] sm:$0xff] %vm951, %v880
        %979 = vst.msk [vmem:[#allocation2 + $0x1c8] sm:$0xff] %vm949, %v882
        %980 = vst.msk [vmem:[#allocation2 + $0x1d0] sm:$0xff] %vm951, %v882
        %981 = vst.msk [vmem:[#allocation2 + $0x1e8] sm:$0xff] %vm949, %v884
        %982 = vst.msk [vmem:[#allocation2 + $0x1f0] sm:$0xff] %vm951, %v884
        %983 = vst.msk [vmem:[#allocation2 + $0x208] sm:$0xff] %vm949, %v886
        %984 = vst.msk [vmem:[#allocation2 + $0x210] sm:$0xff] %vm951, %v886
        %985 = vst.msk [vmem:[#allocation2 + $0x228] sm:$0xff] %vm949, %v888
        %986 = vst.msk [vmem:[#allocation2 + $0x230] sm:$0xff] %vm951, %v888
        %987 = vst.msk [vmem:[#allocation2 + $0x248] sm:$0xff] %vm949, %v890
        %988 = vst.msk [vmem:[#allocation2 + $0x250] sm:$0xff] %vm951, %v890
        %989 = vst.msk [vmem:[#allocation2 + $0x268] sm:$0xff] %vm949, %v892
        %990 = vst.msk [vmem:[#allocation2 + $0x270] sm:$0xff] %vm951, %v892
        %991 = vst.msk [vmem:[#allocation2 + $0x288] sm:$0xff] %vm949, %v894
        %992 = vst.msk [vmem:[#allocation2 + $0x290] sm:$0xff] %vm951, %v894
        %993 = vst.msk [vmem:[#allocation2 + $0x2a8] sm:$0xff] %vm949, %v896
        %994 = vst.msk [vmem:[#allocation2 + $0x2b0] sm:$0xff] %vm951, %v896
        %995 = vst.msk [vmem:[#allocation2 + $0x2c8] sm:$0xff] %vm949, %v898
        %996 = vst.msk [vmem:[#allocation2 + $0x2d0] sm:$0xff] %vm951, %v898
        %997 = vst.msk [vmem:[#allocation2 + $0x2e8] sm:$0xff] %vm949, %v900
        %998 = vst.msk [vmem:[#allocation2 + $0x2f0] sm:$0xff] %vm951, %v900
        %999 = vst.msk [vmem:[#allocation2 + $0x308] sm:$0xff] %vm949, %v902
        %1000 = vst.msk [vmem:[#allocation2 + $0x310] sm:$0xff] %vm951, %v902
        %1001 = vst.msk [vmem:[#allocation2 + $0x328] sm:$0xff] %vm949, %v904
        %1002 = vst.msk [vmem:[#allocation2 + $0x330] sm:$0xff] %vm951, %v904
        %1003 = vst.msk [vmem:[#allocation2 + $0x348] sm:$0xff] %vm949, %v906
        %1004 = vst.msk [vmem:[#allocation2 + $0x350] sm:$0xff] %vm951, %v906
        %1005 = vst.msk [vmem:[#allocation2 + $0x368] sm:$0xff] %vm949, %v908
        %1006 = vst.msk [vmem:[#allocation2 + $0x370] sm:$0xff] %vm951, %v908
        %1007 = vst.msk [vmem:[#allocation2 + $0x388] sm:$0xff] %vm949, %v910
        %1008 = vst.msk [vmem:[#allocation2 + $0x390] sm:$0xff] %vm951, %v910
        %1009 = vst.msk [vmem:[#allocation2 + $0x3a8] sm:$0xff] %vm949, %v912
        %1010 = vst.msk [vmem:[#allocation2 + $0x3b0] sm:$0xff] %vm951, %v912
        %1011 = vst.msk [vmem:[#allocation2 + $0x3c8] sm:$0xff] %vm949, %v914
        %1012 = vst.msk [vmem:[#allocation2 + $0x3d0] sm:$0xff] %vm951, %v914
        %vm1013 = vcmask 1043968
        %1014 = vst.msk [vmem:[#allocation2 + $0x3e8] sm:$0xf] %vm1013, %v916
        %vm1015 = vcmask 257024
        %1016 = vst.msk [vmem:[#allocation2 + $0x3f0] sm:$0xf] %vm1015, %v916
        %v1017 = vld [vmem:[%s493 + $0x3] sm:$0xff]
        %v1018 = vld [vmem:[%s493 + $0xb] sm:$0xff]
        %v1019 = vld [vmem:[%s493 + $0x13] sm:$0xff]
        %v1020 = vld [vmem:[%s493 + $0x1b] sm:$0xff]
        %v1021 = vld [vmem:[%s493 + $0x23] sm:$0xff]
        %v1022 = vld [vmem:[%s493 + $0x2b] sm:$0xff]
        %v1023 = vld [vmem:[%s493 + $0x33] sm:$0xff]
        %v1024 = vld [vmem:[%s493 + $0x3b] sm:$0xff]
        %v1025 = vld [vmem:[%s493 + $0x43] sm:$0xff]
        %v1026 = vld [vmem:[%s493 + $0x4b] sm:$0xff]
        %v1027 = vld [vmem:[%s493 + $0x53] sm:$0xff]
        %v1028 = vld [vmem:[%s493 + $0x5b] sm:$0xff]
        %v1029 = vld [vmem:[%s493 + $0x63] sm:$0xff]
        %v1030 = vld [vmem:[%s493 + $0x6b] sm:$0xff]
        %v1031 = vld [vmem:[%s493 + $0x73] sm:$0xff]
        %v1032 = vld [vmem:[%s493 + $0x7b] sm:$0xff]
        %v1033 = vld [vmem:[%s493 + $0x83] sm:$0xff]
        %v1034 = vld [vmem:[%s493 + $0x8b] sm:$0xff]
        %v1035 = vld [vmem:[%s493 + $0x93] sm:$0xff]
        %v1036 = vld [vmem:[%s493 + $0x9b] sm:$0xff]
        %v1037 = vld [vmem:[%s493 + $0xa3] sm:$0xff]
        %v1038 = vld [vmem:[%s493 + $0xab] sm:$0xff]
        %v1039 = vld [vmem:[%s493 + $0xb3] sm:$0xff]
        %v1040 = vld [vmem:[%s493 + $0xbb] sm:$0xff]
        %v1041 = vld [vmem:[%s493 + $0xc3] sm:$0xff]
        %v1042 = vld [vmem:[%s493 + $0xcb] sm:$0xff]
        %v1043 = vld [vmem:[%s493 + $0xd3] sm:$0xff]
        %v1044 = vld [vmem:[%s493 + $0xdb] sm:$0xff]
        %v1045 = vld [vmem:[%s493 + $0xe3] sm:$0xff]
        %v1046 = vld [vmem:[%s493 + $0xeb] sm:$0xff]
        %v1047 = vld [vmem:[%s493 + $0xf3] sm:$0xff]
        %v1048 = vld [vmem:[%s493 + $0xfb] sm:$0xf]
        %1081 = vrot.lane.b32.xlu0 %v1017, 32
        %v1082 = vpop.permute.xlu0 %1081
        %1083 = vrot.lane.b32.xlu0 %v1018, 32
        %v1084 = vpop.permute.xlu0 %1083
        %1085 = vrot.lane.b32.xlu0 %v1019, 32
        %v1086 = vpop.permute.xlu0 %1085
        %1087 = vrot.lane.b32.xlu0 %v1020, 32
        %v1088 = vpop.permute.xlu0 %1087
        %1089 = vrot.lane.b32.xlu0 %v1021, 32
        %v1090 = vpop.permute.xlu0 %1089
        %1091 = vrot.lane.b32.xlu0 %v1022, 32
        %v1092 = vpop.permute.xlu0 %1091
        %1093 = vrot.lane.b32.xlu0 %v1023, 32
        %v1094 = vpop.permute.xlu0 %1093
        %1095 = vrot.lane.b32.xlu0 %v1024, 32
        %v1096 = vpop.permute.xlu0 %1095
        %1097 = vrot.lane.b32.xlu0 %v1025, 32
        %v1098 = vpop.permute.xlu0 %1097
        %1099 = vrot.lane.b32.xlu0 %v1026, 32
        %v1100 = vpop.permute.xlu0 %1099
        %1101 = vrot.lane.b32.xlu0 %v1027, 32
        %v1102 = vpop.permute.xlu0 %1101
        %1103 = vrot.lane.b32.xlu0 %v1028, 32
        %v1104 = vpop.permute.xlu0 %1103
        %1105 = vrot.lane.b32.xlu0 %v1029, 32
        %v1106 = vpop.permute.xlu0 %1105
        %1107 = vrot.lane.b32.xlu0 %v1030, 32
        %v1108 = vpop.permute.xlu0 %1107
        %1109 = vrot.lane.b32.xlu0 %v1031, 32
        %v1110 = vpop.permute.xlu0 %1109
        %1111 = vrot.lane.b32.xlu0 %v1032, 32
        %v1112 = vpop.permute.xlu0 %1111
        %1113 = vrot.lane.b32.xlu0 %v1033, 32
        %v1114 = vpop.permute.xlu0 %1113
        %1115 = vrot.lane.b32.xlu0 %v1034, 32
        %v1116 = vpop.permute.xlu0 %1115
        %1117 = vrot.lane.b32.xlu0 %v1035, 32
        %v1118 = vpop.permute.xlu0 %1117
        %1119 = vrot.lane.b32.xlu0 %v1036, 32
        %v1120 = vpop.permute.xlu0 %1119
        %1121 = vrot.lane.b32.xlu0 %v1037, 32
        %v1122 = vpop.permute.xlu0 %1121
        %1123 = vrot.lane.b32.xlu0 %v1038, 32
        %v1124 = vpop.permute.xlu0 %1123
        %1125 = vrot.lane.b32.xlu0 %v1039, 32
        %v1126 = vpop.permute.xlu0 %1125
        %1127 = vrot.lane.b32.xlu0 %v1040, 32
        %v1128 = vpop.permute.xlu0 %1127
        %1129 = vrot.lane.b32.xlu0 %v1041, 32
        %v1130 = vpop.permute.xlu0 %1129
        %1131 = vrot.lane.b32.xlu0 %v1042, 32
        %v1132 = vpop.permute.xlu0 %1131
        %1133 = vrot.lane.b32.xlu0 %v1043, 32
        %v1134 = vpop.permute.xlu0 %1133
        %1135 = vrot.lane.b32.xlu0 %v1044, 32
        %v1136 = vpop.permute.xlu0 %1135
        %1137 = vrot.lane.b32.xlu0 %v1045, 32
        %v1138 = vpop.permute.xlu0 %1137
        %1139 = vrot.lane.b32.xlu0 %v1046, 32
        %v1140 = vpop.permute.xlu0 %1139
        %1141 = vrot.lane.b32.xlu0 %v1047, 32
        %v1142 = vpop.permute.xlu0 %1141
        %1143 = vrot.lane.b32.xlu0 %v1048, 32
        %v1144 = vpop.permute.xlu0 %1143
        %vm1177 = vcmask 1047808
        %1178 = vst.msk [vmem:[#allocation2 + $0x10] sm:$0xff] %vm1177, %v1082
        %1179 = vst.msk [vmem:[#allocation2 + $0x30] sm:$0xff] %vm1177, %v1084
        %1180 = vst.msk [vmem:[#allocation2 + $0x50] sm:$0xff] %vm1177, %v1086
        %1181 = vst.msk [vmem:[#allocation2 + $0x70] sm:$0xff] %vm1177, %v1088
        %1182 = vst.msk [vmem:[#allocation2 + $0x90] sm:$0xff] %vm1177, %v1090
        %1183 = vst.msk [vmem:[#allocation2 + $0xb0] sm:$0xff] %vm1177, %v1092
        %1184 = vst.msk [vmem:[#allocation2 + $0xd0] sm:$0xff] %vm1177, %v1094
        %1185 = vst.msk [vmem:[#allocation2 + $0xf0] sm:$0xff] %vm1177, %v1096
        %1186 = vst.msk [vmem:[#allocation2 + $0x110] sm:$0xff] %vm1177, %v1098
        %1187 = vst.msk [vmem:[#allocation2 + $0x130] sm:$0xff] %vm1177, %v1100
        %1188 = vst.msk [vmem:[#allocation2 + $0x150] sm:$0xff] %vm1177, %v1102
        %1189 = vst.msk [vmem:[#allocation2 + $0x170] sm:$0xff] %vm1177, %v1104
        %1190 = vst.msk [vmem:[#allocation2 + $0x190] sm:$0xff] %vm1177, %v1106
        %1191 = vst.msk [vmem:[#allocation2 + $0x1b0] sm:$0xff] %vm1177, %v1108
        %1192 = vst.msk [vmem:[#allocation2 + $0x1d0] sm:$0xff] %vm1177, %v1110
        %1193 = vst.msk [vmem:[#allocation2 + $0x1f0] sm:$0xff] %vm1177, %v1112
        %1194 = vst.msk [vmem:[#allocation2 + $0x210] sm:$0xff] %vm1177, %v1114
        %1195 = vst.msk [vmem:[#allocation2 + $0x230] sm:$0xff] %vm1177, %v1116
        %1196 = vst.msk [vmem:[#allocation2 + $0x250] sm:$0xff] %vm1177, %v1118
        %1197 = vst.msk [vmem:[#allocation2 + $0x270] sm:$0xff] %vm1177, %v1120
        %1198 = vst.msk [vmem:[#allocation2 + $0x290] sm:$0xff] %vm1177, %v1122
        %1199 = vst.msk [vmem:[#allocation2 + $0x2b0] sm:$0xff] %vm1177, %v1124
        %1200 = vst.msk [vmem:[#allocation2 + $0x2d0] sm:$0xff] %vm1177, %v1126
        %1201 = vst.msk [vmem:[#allocation2 + $0x2f0] sm:$0xff] %vm1177, %v1128
        %1202 = vst.msk [vmem:[#allocation2 + $0x310] sm:$0xff] %vm1177, %v1130
        %1203 = vst.msk [vmem:[#allocation2 + $0x330] sm:$0xff] %vm1177, %v1132
        %1204 = vst.msk [vmem:[#allocation2 + $0x350] sm:$0xff] %vm1177, %v1134
        %1205 = vst.msk [vmem:[#allocation2 + $0x370] sm:$0xff] %vm1177, %v1136
        %1206 = vst.msk [vmem:[#allocation2 + $0x390] sm:$0xff] %vm1177, %v1138
        %1207 = vst.msk [vmem:[#allocation2 + $0x3b0] sm:$0xff] %vm1177, %v1140
        %1208 = vst.msk [vmem:[#allocation2 + $0x3d0] sm:$0xff] %vm1177, %v1142
        %vm1209 = vcmask 1043712
        %1210 = vst.msk [vmem:[#allocation2 + $0x3f0] sm:$0xf] %vm1209, %v1144
        %v1211 = vld [vmem:[%s493 + $0x4] sm:$0xff]
        %v1212 = vld [vmem:[%s493 + $0xc] sm:$0xff]
        %v1213 = vld [vmem:[%s493 + $0x14] sm:$0xff]
        %v1214 = vld [vmem:[%s493 + $0x1c] sm:$0xff]
        %v1215 = vld [vmem:[%s493 + $0x24] sm:$0xff]
        %v1216 = vld [vmem:[%s493 + $0x2c] sm:$0xff]
        %v1217 = vld [vmem:[%s493 + $0x34] sm:$0xff]
        %v1218 = vld [vmem:[%s493 + $0x3c] sm:$0xff]
        %v1219 = vld [vmem:[%s493 + $0x44] sm:$0xff]
        %v1220 = vld [vmem:[%s493 + $0x4c] sm:$0xff]
        %v1221 = vld [vmem:[%s493 + $0x54] sm:$0xff]
        %v1222 = vld [vmem:[%s493 + $0x5c] sm:$0xff]
        %v1223 = vld [vmem:[%s493 + $0x64] sm:$0xff]
        %v1224 = vld [vmem:[%s493 + $0x6c] sm:$0xff]
        %v1225 = vld [vmem:[%s493 + $0x74] sm:$0xff]
        %v1226 = vld [vmem:[%s493 + $0x7c] sm:$0xff]
        %v1227 = vld [vmem:[%s493 + $0x84] sm:$0xff]
        %v1228 = vld [vmem:[%s493 + $0x8c] sm:$0xff]
        %v1229 = vld [vmem:[%s493 + $0x94] sm:$0xff]
        %v1230 = vld [vmem:[%s493 + $0x9c] sm:$0xff]
        %v1231 = vld [vmem:[%s493 + $0xa4] sm:$0xff]
        %v1232 = vld [vmem:[%s493 + $0xac] sm:$0xff]
        %v1233 = vld [vmem:[%s493 + $0xb4] sm:$0xff]
        %v1234 = vld [vmem:[%s493 + $0xbc] sm:$0xff]
        %v1235 = vld [vmem:[%s493 + $0xc4] sm:$0xff]
        %v1236 = vld [vmem:[%s493 + $0xcc] sm:$0xff]
        %v1237 = vld [vmem:[%s493 + $0xd4] sm:$0xff]
        %v1238 = vld [vmem:[%s493 + $0xdc] sm:$0xff]
        %v1239 = vld [vmem:[%s493 + $0xe4] sm:$0xff]
        %v1240 = vld [vmem:[%s493 + $0xec] sm:$0xff]
        %v1241 = vld [vmem:[%s493 + $0xf4] sm:$0xff]
        %v1242 = vld [vmem:[%s493 + $0xfc] sm:$0xf]
        %1243 = vst.msk [vmem:[#allocation2 + $0x18] sm:$0xff] %vm527, %v1211
        %1244 = vst.msk [vmem:[#allocation2 + $0x38] sm:$0xff] %vm527, %v1212
        %1245 = vst.msk [vmem:[#allocation2 + $0x58] sm:$0xff] %vm527, %v1213
        %1246 = vst.msk [vmem:[#allocation2 + $0x78] sm:$0xff] %vm527, %v1214
        %1247 = vst.msk [vmem:[#allocation2 + $0x98] sm:$0xff] %vm527, %v1215
        %1248 = vst.msk [vmem:[#allocation2 + $0xb8] sm:$0xff] %vm527, %v1216
        %1249 = vst.msk [vmem:[#allocation2 + $0xd8] sm:$0xff] %vm527, %v1217
        %1250 = vst.msk [vmem:[#allocation2 + $0xf8] sm:$0xff] %vm527, %v1218
        %1251 = vst.msk [vmem:[#allocation2 + $0x118] sm:$0xff] %vm527, %v1219
        %1252 = vst.msk [vmem:[#allocation2 + $0x138] sm:$0xff] %vm527, %v1220
        %1253 = vst.msk [vmem:[#allocation2 + $0x158] sm:$0xff] %vm527, %v1221
        %1254 = vst.msk [vmem:[#allocation2 + $0x178] sm:$0xff] %vm527, %v1222
        %1255 = vst.msk [vmem:[#allocation2 + $0x198] sm:$0xff] %vm527, %v1223
        %1256 = vst.msk [vmem:[#allocation2 + $0x1b8] sm:$0xff] %vm527, %v1224
        %1257 = vst.msk [vmem:[#allocation2 + $0x1d8] sm:$0xff] %vm527, %v1225
        %1258 = vst.msk [vmem:[#allocation2 + $0x1f8] sm:$0xff] %vm527, %v1226
        %1259 = vst.msk [vmem:[#allocation2 + $0x218] sm:$0xff] %vm527, %v1227
        %1260 = vst.msk [vmem:[#allocation2 + $0x238] sm:$0xff] %vm527, %v1228
        %1261 = vst.msk [vmem:[#allocation2 + $0x258] sm:$0xff] %vm527, %v1229
        %1262 = vst.msk [vmem:[#allocation2 + $0x278] sm:$0xff] %vm527, %v1230
        %1263 = vst.msk [vmem:[#allocation2 + $0x298] sm:$0xff] %vm527, %v1231
        %1264 = vst.msk [vmem:[#allocation2 + $0x2b8] sm:$0xff] %vm527, %v1232
        %1265 = vst.msk [vmem:[#allocation2 + $0x2d8] sm:$0xff] %vm527, %v1233
        %1266 = vst.msk [vmem:[#allocation2 + $0x2f8] sm:$0xff] %vm527, %v1234
        %1267 = vst.msk [vmem:[#allocation2 + $0x318] sm:$0xff] %vm527, %v1235
        %1268 = vst.msk [vmem:[#allocation2 + $0x338] sm:$0xff] %vm527, %v1236
        %1269 = vst.msk [vmem:[#allocation2 + $0x358] sm:$0xff] %vm527, %v1237
        %1270 = vst.msk [vmem:[#allocation2 + $0x378] sm:$0xff] %vm527, %v1238
        %1271 = vst.msk [vmem:[#allocation2 + $0x398] sm:$0xff] %vm527, %v1239
        %1272 = vst.msk [vmem:[#allocation2 + $0x3b8] sm:$0xff] %vm527, %v1240
        %1273 = vst.msk [vmem:[#allocation2 + $0x3d8] sm:$0xff] %vm527, %v1241
        %1274 = vst.msk [vmem:[#allocation2 + $0x3f8] sm:$0xf] %vm559, %v1242
        %v1275 = vld [vmem:[#allocation2] sm:$0xff]
        %v1276 = vld [vmem:[#allocation2 + $0x8] sm:$0xff]
        %v1277 = vld [vmem:[#allocation2 + $0x10] sm:$0xff]
        %v1278 = vld [vmem:[#allocation2 + $0x18] sm:$0xff]
        %v1279 = vld [vmem:[#allocation2 + $0x20] sm:$0xff]
        %v1280 = vld [vmem:[#allocation2 + $0x28] sm:$0xff]
        %v1281 = vld [vmem:[#allocation2 + $0x30] sm:$0xff]
        %v1282 = vld [vmem:[#allocation2 + $0x38] sm:$0xff]
        %v1283 = vld [vmem:[#allocation2 + $0x40] sm:$0xff]
        %v1284 = vld [vmem:[#allocation2 + $0x48] sm:$0xff]
        %v1285 = vld [vmem:[#allocation2 + $0x50] sm:$0xff]
        %v1286 = vld [vmem:[#allocation2 + $0x58] sm:$0xff]
        %v1287 = vld [vmem:[#allocation2 + $0x60] sm:$0xff]
        %v1288 = vld [vmem:[#allocation2 + $0x68] sm:$0xff]
        %v1289 = vld [vmem:[#allocation2 + $0x70] sm:$0xff]
        %v1290 = vld [vmem:[#allocation2 + $0x78] sm:$0xff]
        %v1291 = vld [vmem:[#allocation2 + $0x80] sm:$0xff]
        %v1292 = vld [vmem:[#allocation2 + $0x88] sm:$0xff]
        %v1293 = vld [vmem:[#allocation2 + $0x90] sm:$0xff]
        %v1294 = vld [vmem:[#allocation2 + $0x98] sm:$0xff]
        %v1295 = vld [vmem:[#allocation2 + $0xa0] sm:$0xff]
        %v1296 = vld [vmem:[#allocation2 + $0xa8] sm:$0xff]
        %v1297 = vld [vmem:[#allocation2 + $0xb0] sm:$0xff]
        %v1298 = vld [vmem:[#allocation2 + $0xb8] sm:$0xff]
        %v1299 = vld [vmem:[#allocation2 + $0xc0] sm:$0xff]
        %v1300 = vld [vmem:[#allocation2 + $0xc8] sm:$0xff]
        %v1301 = vld [vmem:[#allocation2 + $0xd0] sm:$0xff]
        %v1302 = vld [vmem:[#allocation2 + $0xd8] sm:$0xff]
        %v1303 = vld [vmem:[#allocation2 + $0xe0] sm:$0xff]
        %v1304 = vld [vmem:[#allocation2 + $0xe8] sm:$0xff]
        %v1305 = vld [vmem:[#allocation2 + $0xf0] sm:$0xff]
        %v1306 = vld [vmem:[#allocation2 + $0xf8] sm:$0xff]
        %v1307 = vld [vmem:[#allocation2 + $0x100] sm:$0xff]
        %v1308 = vld [vmem:[#allocation2 + $0x108] sm:$0xff]
        %v1309 = vld [vmem:[#allocation2 + $0x110] sm:$0xff]
        %v1310 = vld [vmem:[#allocation2 + $0x118] sm:$0xff]
        %v1311 = vld [vmem:[#allocation2 + $0x120] sm:$0xff]
        %v1312 = vld [vmem:[#allocation2 + $0x128] sm:$0xff]
        %v1313 = vld [vmem:[#allocation2 + $0x130] sm:$0xff]
        %v1314 = vld [vmem:[#allocation2 + $0x138] sm:$0xff]
        %v1315 = vld [vmem:[#allocation2 + $0x140] sm:$0xff]
        %v1316 = vld [vmem:[#allocation2 + $0x148] sm:$0xff]
        %v1317 = vld [vmem:[#allocation2 + $0x150] sm:$0xff]
        %v1318 = vld [vmem:[#allocation2 + $0x158] sm:$0xff]
        %v1319 = vld [vmem:[#allocation2 + $0x160] sm:$0xff]
        %v1320 = vld [vmem:[#allocation2 + $0x168] sm:$0xff]
        %v1321 = vld [vmem:[#allocation2 + $0x170] sm:$0xff]
        %v1322 = vld [vmem:[#allocation2 + $0x178] sm:$0xff]
        %v1323 = vld [vmem:[#allocation2 + $0x180] sm:$0xff]
        %v1324 = vld [vmem:[#allocation2 + $0x188] sm:$0xff]
        %v1325 = vld [vmem:[#allocation2 + $0x190] sm:$0xff]
        %v1326 = vld [vmem:[#allocation2 + $0x198] sm:$0xff]
        %v1327 = vld [vmem:[#allocation2 + $0x1a0] sm:$0xff]
        %v1328 = vld [vmem:[#allocation2 + $0x1a8] sm:$0xff]
        %v1329 = vld [vmem:[#allocation2 + $0x1b0] sm:$0xff]
        %v1330 = vld [vmem:[#allocation2 + $0x1b8] sm:$0xff]
        %v1331 = vld [vmem:[#allocation2 + $0x1c0] sm:$0xff]
        %v1332 = vld [vmem:[#allocation2 + $0x1c8] sm:$0xff]
        %v1333 = vld [vmem:[#allocation2 + $0x1d0] sm:$0xff]
        %v1334 = vld [vmem:[#allocation2 + $0x1d8] sm:$0xff]
        %v1335 = vld [vmem:[#allocation2 + $0x1e0] sm:$0xff]
        %v1336 = vld [vmem:[#allocation2 + $0x1e8] sm:$0xff]
        %v1337 = vld [vmem:[#allocation2 + $0x1f0] sm:$0xff]
        %v1338 = vld [vmem:[#allocation2 + $0x1f8] sm:$0xff]
        %v1339 = vld [vmem:[#allocation2 + $0x200] sm:$0xff]
        %v1340 = vld [vmem:[#allocation2 + $0x208] sm:$0xff]
        %v1341 = vld [vmem:[#allocation2 + $0x210] sm:$0xff]
        %v1342 = vld [vmem:[#allocation2 + $0x218] sm:$0xff]
        %v1343 = vld [vmem:[#allocation2 + $0x220] sm:$0xff]
        %v1344 = vld [vmem:[#allocation2 + $0x228] sm:$0xff]
        %v1345 = vld [vmem:[#allocation2 + $0x230] sm:$0xff]
        %v1346 = vld [vmem:[#allocation2 + $0x238] sm:$0xff]
        %v1347 = vld [vmem:[#allocation2 + $0x240] sm:$0xff]
        %v1348 = vld [vmem:[#allocation2 + $0x248] sm:$0xff]
        %v1349 = vld [vmem:[#allocation2 + $0x250] sm:$0xff]
        %v1350 = vld [vmem:[#allocation2 + $0x258] sm:$0xff]
        %v1351 = vld [vmem:[#allocation2 + $0x260] sm:$0xff]
        %v1352 = vld [vmem:[#allocation2 + $0x268] sm:$0xff]
        %v1353 = vld [vmem:[#allocation2 + $0x270] sm:$0xff]
        %v1354 = vld [vmem:[#allocation2 + $0x278] sm:$0xff]
        %v1355 = vld [vmem:[#allocation2 + $0x280] sm:$0xff]
        %v1356 = vld [vmem:[#allocation2 + $0x288] sm:$0xff]
        %v1357 = vld [vmem:[#allocation2 + $0x290] sm:$0xff]
        %v1358 = vld [vmem:[#allocation2 + $0x298] sm:$0xff]
        %v1359 = vld [vmem:[#allocation2 + $0x2a0] sm:$0xff]
        %v1360 = vld [vmem:[#allocation2 + $0x2a8] sm:$0xff]
        %v1361 = vld [vmem:[#allocation2 + $0x2b0] sm:$0xff]
        %v1362 = vld [vmem:[#allocation2 + $0x2b8] sm:$0xff]
        %v1363 = vld [vmem:[#allocation2 + $0x2c0] sm:$0xff]
        %v1364 = vld [vmem:[#allocation2 + $0x2c8] sm:$0xff]
        %v1365 = vld [vmem:[#allocation2 + $0x2d0] sm:$0xff]
        %v1366 = vld [vmem:[#allocation2 + $0x2d8] sm:$0xff]
        %v1367 = vld [vmem:[#allocation2 + $0x2e0] sm:$0xff]
        %v1368 = vld [vmem:[#allocation2 + $0x2e8] sm:$0xff]
        %v1369 = vld [vmem:[#allocation2 + $0x2f0] sm:$0xff]
        %v1370 = vld [vmem:[#allocation2 + $0x2f8] sm:$0xff]
        %v1371 = vld [vmem:[#allocation2 + $0x300] sm:$0xff]
        %v1372 = vld [vmem:[#allocation2 + $0x308] sm:$0xff]
        %v1373 = vld [vmem:[#allocation2 + $0x310] sm:$0xff]
        %v1374 = vld [vmem:[#allocation2 + $0x318] sm:$0xff]
        %v1375 = vld [vmem:[#allocation2 + $0x320] sm:$0xff]
        %v1376 = vld [vmem:[#allocation2 + $0x328] sm:$0xff]
        %v1377 = vld [vmem:[#allocation2 + $0x330] sm:$0xff]
        %v1378 = vld [vmem:[#allocation2 + $0x338] sm:$0xff]
        %v1379 = vld [vmem:[#allocation2 + $0x340] sm:$0xff]
        %v1380 = vld [vmem:[#allocation2 + $0x348] sm:$0xff]
        %v1381 = vld [vmem:[#allocation2 + $0x350] sm:$0xff]
        %v1382 = vld [vmem:[#allocation2 + $0x358] sm:$0xff]
        %v1383 = vld [vmem:[#allocation2 + $0x360] sm:$0xff]
        %v1384 = vld [vmem:[#allocation2 + $0x368] sm:$0xff]
        %v1385 = vld [vmem:[#allocation2 + $0x370] sm:$0xff]
        %v1386 = vld [vmem:[#allocation2 + $0x378] sm:$0xff]
        %v1387 = vld [vmem:[#allocation2 + $0x380] sm:$0xff]
        %v1388 = vld [vmem:[#allocation2 + $0x388] sm:$0xff]
        %v1389 = vld [vmem:[#allocation2 + $0x390] sm:$0xff]
        %v1390 = vld [vmem:[#allocation2 + $0x398] sm:$0xff]
        %v1391 = vld [vmem:[#allocation2 + $0x3a0] sm:$0xff]
        %v1392 = vld [vmem:[#allocation2 + $0x3a8] sm:$0xff]
        %v1393 = vld [vmem:[#allocation2 + $0x3b0] sm:$0xff]
        %v1394 = vld [vmem:[#allocation2 + $0x3b8] sm:$0xff]
        %v1395 = vld [vmem:[#allocation2 + $0x3c0] sm:$0xff]
        %v1396 = vld [vmem:[#allocation2 + $0x3c8] sm:$0xff]
        %v1397 = vld [vmem:[#allocation2 + $0x3d0] sm:$0xff]
        %v1398 = vld [vmem:[#allocation2 + $0x3d8] sm:$0xff]
        %v1399 = vld [vmem:[#allocation2 + $0x3e0] sm:$0xf]
        %v1400 = vld [vmem:[#allocation2 + $0x3e8] sm:$0xf]
        %v1401 = vld [vmem:[#allocation2 + $0x3f0] sm:$0xf]
        %v1402 = vld [vmem:[#allocation2 + $0x3f8] sm:$0xf]
        %v1403 = vld [vmem:[%s1] sm:$0xff]
        %v1404 = vld [vmem:[%s1 + $0x8] sm:$0xff]
        %v1405 = vld [vmem:[%s1 + $0x10] sm:$0xff]
        %v1406 = vld [vmem:[%s1 + $0x18] sm:$0xff]
        %v1407 = vld [vmem:[%s1 + $0x20] sm:$0xff]
        %v1408 = vld [vmem:[%s1 + $0x28] sm:$0xff]
        %v1409 = vld [vmem:[%s1 + $0x30] sm:$0xff]
        %v1410 = vld [vmem:[%s1 + $0x38] sm:$0xff]
        %v1411 = vld [vmem:[%s1 + $0x40] sm:$0xff]
        %v1412 = vld [vmem:[%s1 + $0x48] sm:$0xff]
        %v1413 = vld [vmem:[%s1 + $0x50] sm:$0xff]
        %v1414 = vld [vmem:[%s1 + $0x58] sm:$0xff]
        %v1415 = vld [vmem:[%s1 + $0x60] sm:$0xff]
        %v1416 = vld [vmem:[%s1 + $0x68] sm:$0xff]
        %v1417 = vld [vmem:[%s1 + $0x70] sm:$0xff]
        %v1418 = vld [vmem:[%s1 + $0x78] sm:$0xff]
        %v1419 = vld [vmem:[%s1 + $0x80] sm:$0xff]
        %v1420 = vld [vmem:[%s1 + $0x88] sm:$0xff]
        %v1421 = vld [vmem:[%s1 + $0x90] sm:$0xff]
        %v1422 = vld [vmem:[%s1 + $0x98] sm:$0xff]
        %v1423 = vld [vmem:[%s1 + $0xa0] sm:$0xff]
        %v1424 = vld [vmem:[%s1 + $0xa8] sm:$0xff]
        %v1425 = vld [vmem:[%s1 + $0xb0] sm:$0xff]
        %v1426 = vld [vmem:[%s1 + $0xb8] sm:$0xff]
        %v1427 = vld [vmem:[%s1 + $0xc0] sm:$0xff]
        %v1428 = vld [vmem:[%s1 + $0xc8] sm:$0xff]
        %v1429 = vld [vmem:[%s1 + $0xd0] sm:$0xff]
        %v1430 = vld [vmem:[%s1 + $0xd8] sm:$0xff]
        %v1431 = vld [vmem:[%s1 + $0xe0] sm:$0xff]
        %v1432 = vld [vmem:[%s1 + $0xe8] sm:$0xff]
        %v1433 = vld [vmem:[%s1 + $0xf0] sm:$0xff]
        %v1434 = vld [vmem:[%s1 + $0xf8] sm:$0xff]
        %v1435 = vld [vmem:[%s1 + $0x100] sm:$0xff]
        %v1436 = vld [vmem:[%s1 + $0x108] sm:$0xff]
        %v1437 = vld [vmem:[%s1 + $0x110] sm:$0xff]
        %v1438 = vld [vmem:[%s1 + $0x118] sm:$0xff]
        %v1439 = vld [vmem:[%s1 + $0x120] sm:$0xff]
        %v1440 = vld [vmem:[%s1 + $0x128] sm:$0xff]
        %v1441 = vld [vmem:[%s1 + $0x130] sm:$0xff]
        %v1442 = vld [vmem:[%s1 + $0x138] sm:$0xff]
        %v1443 = vld [vmem:[%s1 + $0x140] sm:$0xff]
        %v1444 = vld [vmem:[%s1 + $0x148] sm:$0xff]
        %v1445 = vld [vmem:[%s1 + $0x150] sm:$0xff]
        %v1446 = vld [vmem:[%s1 + $0x158] sm:$0xff]
        %v1447 = vld [vmem:[%s1 + $0x160] sm:$0xff]
        %v1448 = vld [vmem:[%s1 + $0x168] sm:$0xff]
        %v1449 = vld [vmem:[%s1 + $0x170] sm:$0xff]
        %v1450 = vld [vmem:[%s1 + $0x178] sm:$0xff]
        %v1451 = vld [vmem:[%s1 + $0x180] sm:$0xff]
        %v1452 = vld [vmem:[%s1 + $0x188] sm:$0xff]
        %v1453 = vld [vmem:[%s1 + $0x190] sm:$0xff]
        %v1454 = vld [vmem:[%s1 + $0x198] sm:$0xff]
        %v1455 = vld [vmem:[%s1 + $0x1a0] sm:$0xff]
        %v1456 = vld [vmem:[%s1 + $0x1a8] sm:$0xff]
        %v1457 = vld [vmem:[%s1 + $0x1b0] sm:$0xff]
        %v1458 = vld [vmem:[%s1 + $0x1b8] sm:$0xff]
        %v1459 = vld [vmem:[%s1 + $0x1c0] sm:$0xff]
        %v1460 = vld [vmem:[%s1 + $0x1c8] sm:$0xff]
        %v1461 = vld [vmem:[%s1 + $0x1d0] sm:$0xff]
        %v1462 = vld [vmem:[%s1 + $0x1d8] sm:$0xff]
        %v1463 = vld [vmem:[%s1 + $0x1e0] sm:$0xff]
        %v1464 = vld [vmem:[%s1 + $0x1e8] sm:$0xff]
        %v1465 = vld [vmem:[%s1 + $0x1f0] sm:$0xff]
        %v1466 = vld [vmem:[%s1 + $0x1f8] sm:$0xff]
        %v1467 = vld [vmem:[%s1 + $0x200] sm:$0xff]
        %v1468 = vld [vmem:[%s1 + $0x208] sm:$0xff]
        %v1469 = vld [vmem:[%s1 + $0x210] sm:$0xff]
        %v1470 = vld [vmem:[%s1 + $0x218] sm:$0xff]
        %v1471 = vld [vmem:[%s1 + $0x220] sm:$0xff]
        %v1472 = vld [vmem:[%s1 + $0x228] sm:$0xff]
        %v1473 = vld [vmem:[%s1 + $0x230] sm:$0xff]
        %v1474 = vld [vmem:[%s1 + $0x238] sm:$0xff]
        %v1475 = vld [vmem:[%s1 + $0x240] sm:$0xff]
        %v1476 = vld [vmem:[%s1 + $0x248] sm:$0xff]
        %v1477 = vld [vmem:[%s1 + $0x250] sm:$0xff]
        %v1478 = vld [vmem:[%s1 + $0x258] sm:$0xff]
        %v1479 = vld [vmem:[%s1 + $0x260] sm:$0xff]
        %v1480 = vld [vmem:[%s1 + $0x268] sm:$0xff]
        %v1481 = vld [vmem:[%s1 + $0x270] sm:$0xff]
        %v1482 = vld [vmem:[%s1 + $0x278] sm:$0xff]
        %v1483 = vld [vmem:[%s1 + $0x280] sm:$0xff]
        %v1484 = vld [vmem:[%s1 + $0x288] sm:$0xff]
        %v1485 = vld [vmem:[%s1 + $0x290] sm:$0xff]
        %v1486 = vld [vmem:[%s1 + $0x298] sm:$0xff]
        %v1487 = vld [vmem:[%s1 + $0x2a0] sm:$0xff]
        %v1488 = vld [vmem:[%s1 + $0x2a8] sm:$0xff]
        %v1489 = vld [vmem:[%s1 + $0x2b0] sm:$0xff]
        %v1490 = vld [vmem:[%s1 + $0x2b8] sm:$0xff]
        %v1491 = vld [vmem:[%s1 + $0x2c0] sm:$0xff]
        %v1492 = vld [vmem:[%s1 + $0x2c8] sm:$0xff]
        %v1493 = vld [vmem:[%s1 + $0x2d0] sm:$0xff]
        %v1494 = vld [vmem:[%s1 + $0x2d8] sm:$0xff]
        %v1495 = vld [vmem:[%s1 + $0x2e0] sm:$0xff]
        %v1496 = vld [vmem:[%s1 + $0x2e8] sm:$0xff]
        %v1497 = vld [vmem:[%s1 + $0x2f0] sm:$0xff]
        %v1498 = vld [vmem:[%s1 + $0x2f8] sm:$0xff]
        %v1499 = vld [vmem:[%s1 + $0x300] sm:$0xff]
        %v1500 = vld [vmem:[%s1 + $0x308] sm:$0xff]
        %v1501 = vld [vmem:[%s1 + $0x310] sm:$0xff]
        %v1502 = vld [vmem:[%s1 + $0x318] sm:$0xff]
        %v1503 = vld [vmem:[%s1 + $0x320] sm:$0xff]
        %v1504 = vld [vmem:[%s1 + $0x328] sm:$0xff]
        %v1505 = vld [vmem:[%s1 + $0x330] sm:$0xff]
        %v1506 = vld [vmem:[%s1 + $0x338] sm:$0xff]
        %v1507 = vld [vmem:[%s1 + $0x340] sm:$0xff]
        %v1508 = vld [vmem:[%s1 + $0x348] sm:$0xff]
        %v1509 = vld [vmem:[%s1 + $0x350] sm:$0xff]
        %v1510 = vld [vmem:[%s1 + $0x358] sm:$0xff]
        %v1511 = vld [vmem:[%s1 + $0x360] sm:$0xff]
        %v1512 = vld [vmem:[%s1 + $0x368] sm:$0xff]
        %v1513 = vld [vmem:[%s1 + $0x370] sm:$0xff]
        %v1514 = vld [vmem:[%s1 + $0x378] sm:$0xff]
        %v1515 = vld [vmem:[%s1 + $0x380] sm:$0xff]
        %v1516 = vld [vmem:[%s1 + $0x388] sm:$0xff]
        %v1517 = vld [vmem:[%s1 + $0x390] sm:$0xff]
        %v1518 = vld [vmem:[%s1 + $0x398] sm:$0xff]
        %v1519 = vld [vmem:[%s1 + $0x3a0] sm:$0xff]
        %v1520 = vld [vmem:[%s1 + $0x3a8] sm:$0xff]
        %v1521 = vld [vmem:[%s1 + $0x3b0] sm:$0xff]
        %v1522 = vld [vmem:[%s1 + $0x3b8] sm:$0xff]
        %v1523 = vld [vmem:[%s2] sm:$0x3]
        %v1525 = vlaneseq
        %v1526 = vshrl.u32 %v1525, 7
        %v1527 = vsub.s32 0, %v1526
        %v1528 = vrot.slane %v1523, %v1527
        %v1529 = vlaneseq
        %v1530 = vshrl.u32 %v1529, 7
        %v1531 = vsub.s32 1, %v1530
        %v1532 = vrot.slane %v1523, %v1531
        %v1536 = vsel %vm527, %v1278, 0
        %v1539 = vsel %vm527, %v1282, 0
        %v1542 = vsel %vm527, %v1286, 0
        %v1545 = vsel %vm527, %v1290, 0
        %v1548 = vsel %vm527, %v1294, 0
        %v1551 = vsel %vm527, %v1298, 0
        %v1554 = vsel %vm527, %v1302, 0
        %v1557 = vsel %vm527, %v1306, 0
        %v1560 = vsel %vm527, %v1310, 0
        %v1563 = vsel %vm527, %v1314, 0
        %v1566 = vsel %vm527, %v1318, 0
        %v1569 = vsel %vm527, %v1322, 0
        %v1572 = vsel %vm527, %v1326, 0
        %v1575 = vsel %vm527, %v1330, 0
        %v1578 = vsel %vm527, %v1334, 0
        %v1581 = vsel %vm527, %v1338, 0
        %v1584 = vsel %vm527, %v1342, 0
        %v1587 = vsel %vm527, %v1346, 0
        %v1590 = vsel %vm527, %v1350, 0
        %v1593 = vsel %vm527, %v1354, 0
        %v1596 = vsel %vm527, %v1358, 0
        %v1599 = vsel %vm527, %v1362, 0
        %v1602 = vsel %vm527, %v1366, 0
        %v1605 = vsel %vm527, %v1370, 0
        %v1608 = vsel %vm527, %v1374, 0
        %v1611 = vsel %vm527, %v1378, 0
        %v1614 = vsel %vm527, %v1382, 0
        %v1617 = vsel %vm527, %v1386, 0
        %v1620 = vsel %vm527, %v1390, 0
        %v1623 = vsel %vm527, %v1394, 0
        %v1626 = vsel %vm527, %v1398, 0
        %v1629 = vsel %vm527, %v1402, 0
        %1631 = vmatprep.subr.mxu0 %v1404
        %1632 = vmatpush1.msra.mxu0 %v1403
        %1633 = vmatprep.subr.mxu0 %v1406
        %1634 = vmatpush1.msra.mxu0 %v1405
        %1635 = vmatprep.subr.mxu0 %v1408
        %1636 = vmatpush1.msra.mxu0 %v1407
        %1637 = vmatprep.subr.mxu0 %v1410
        %1638 = vmatpush1.msra.mxu0 %v1409
        %1639 = vmatprep.subr.mxu0 %v1412
        %1640 = vmatpush1.msra.mxu0 %v1411
        %1641 = vmatprep.subr.mxu0 %v1414
        %1642 = vmatpush1.msra.mxu0 %v1413
        %1643 = vmatprep.subr.mxu0 %v1416
        %1644 = vmatpush1.msra.mxu0 %v1415
        %1645 = vmatprep.subr.mxu0 %v1418
        %1646 = vmatpush1.msra.mxu0 %v1417
        %1647 = vmatprep.subr.mxu0 %v1420
        %1648 = vmatpush1.msra.mxu0 %v1419
        %1649 = vmatprep.subr.mxu0 %v1422
        %1650 = vmatpush1.msra.mxu0 %v1421
        %1651 = vmatprep.subr.mxu0 %v1424
        %1652 = vmatpush1.msra.mxu0 %v1423
        %1653 = vmatprep.subr.mxu0 %v1426
        %1654 = vmatpush1.msra.mxu0 %v1425
        %1655 = vmatprep.subr.mxu0 %v1428
        %1656 = vmatpush1.msra.mxu0 %v1427
        %1657 = vmatprep.subr.mxu0 %v1430
        %1658 = vmatpush1.msra.mxu0 %v1429
        %1659 = vmatprep.subr.mxu0 %v1432
        %1660 = vmatpush1.msra.mxu0 %v1431
        %1661 = vmatprep.subr.mxu0 %v1434
        %1662 = vmatpush1.msra.mxu0 %v1433
        %1663 = vmatprep.subr.mxu0 %v1436
        %1664 = vmatpush1.msra.mxu0 %v1435
        %1665 = vmatprep.subr.mxu0 %v1438
        %1666 = vmatpush1.msra.mxu0 %v1437
        %1667 = vmatprep.subr.mxu0 %v1440
        %1668 = vmatpush1.msra.mxu0 %v1439
        %1669 = vmatprep.subr.mxu0 %v1442
        %1670 = vmatpush1.msra.mxu0 %v1441
        %1671 = vmatprep.subr.mxu0 %v1444
        %1672 = vmatpush1.msra.mxu0 %v1443
        %1673 = vmatprep.subr.mxu0 %v1446
        %1674 = vmatpush1.msra.mxu0 %v1445
        %1675 = vmatprep.subr.mxu0 %v1448
        %1676 = vmatpush1.msra.mxu0 %v1447
        %1677 = vmatprep.subr.mxu0 %v1450
        %1678 = vmatpush1.msra.mxu0 %v1449
        %1679 = vmatprep.subr.mxu0 %v1452
        %1680 = vmatpush1.msra.mxu0 %v1451
        %1681 = vmatprep.subr.mxu0 %v1454
        %1682 = vmatpush1.msra.mxu0 %v1453
        %1683 = vmatprep.subr.mxu0 %v1456
        %1684 = vmatpush1.msra.mxu0 %v1455
        %1685 = vmatprep.subr.mxu0 %v1458
        %1686 = vmatpush1.msra.mxu0 %v1457
        %1687 = vmatprep.subr.mxu0 %v1460
        %1688 = vmatpush1.msra.mxu0 %v1459
        %1689 = vmatprep.subr.mxu0 %v1462
        %1690 = vmatpush1.msra.mxu0 %v1461
        %1691 = vmatprep.subr.mxu0 %v1464
        %1692 = vmatpush1.msra.mxu0 %v1463
        %1693 = vmatprep.subr.mxu0 %v1466
        %1694 = vmatpush1.msra.mxu0 %v1465
        %1695 = vmatprep.mubr.f32.mxu0 %v1276
        %1696 = vmatmul.mubr.f32.gmra.mrb[0].mxu0 %v1275
        %v1697 = vpop.f32.mrb[0].mxu0
        %v1698 = vadd.f32 %v1528, %v1697
        %v1699 = vpop.f32.mrb[0].mxu0
        %v1700 = vadd.f32 %v1532, %v1699
        %1701 = vmatprep.mubr.f32.mxu0 %v1280
        %1702 = vmatmul.mubr.f32.gmra.mrb[0].mxu0 %v1279
        %v1703 = vpop.f32.mrb[0].mxu0
        %v1704 = vadd.f32 %v1528, %v1703
        %v1705 = vpop.f32.mrb[0].mxu0
        %v1706 = vadd.f32 %v1532, %v1705
        %1707 = vmatprep.mubr.f32.mxu0 %v1284
        %1708 = vmatmul.mubr.f32.gmra.mrb[0].mxu0 %v1283
        %v1709 = vpop.f32.mrb[0].mxu0
        %v1710 = vadd.f32 %v1528, %v1709
        %v1711 = vpop.f32.mrb[0].mxu0
        %v1712 = vadd.f32 %v1532, %v1711
        %1713 = vmatprep.mubr.f32.mxu0 %v1288
        %1714 = vmatmul.mubr.f32.gmra.mrb[0].mxu0 %v1287
        %v1715 = vpop.f32.mrb[0].mxu0
        %v1716 = vadd.f32 %v1528, %v1715
        %v1717 = vpop.f32.mrb[0].mxu0
        %v1718 = vadd.f32 %v1532, %v1717
        %1719 = vmatprep.mubr.f32.mxu0 %v1292
        %1720 = vmatmul.mubr.f32.gmra.mrb[0].mxu0 %v1291
        %v1721 = vpop.f32.mrb[0].mxu0
        %v1722 = vadd.f32 %v1528, %v1721
        %v1723 = vpop.f32.mrb[0].mxu0
        %v1724 = vadd.f32 %v1532, %v1723
        %1725 = vmatprep.mubr.f32.mxu0 %v1296
        %1726 = vmatmul.mubr.f32.gmra.mrb[0].mxu0 %v1295
        %v1727 = vpop.f32.mrb[0].mxu0
        %v1728 = vadd.f32 %v1528, %v1727
        %v1729 = vpop.f32.mrb[0].mxu0
        %v1730 = vadd.f32 %v1532, %v1729
        %1731 = vmatprep.mubr.f32.mxu0 %v1300
        %1732 = vmatmul.mubr.f32.gmra.mrb[0].mxu0 %v1299
        %v1733 = vpop.f32.mrb[0].mxu0
        %v1734 = vadd.f32 %v1528, %v1733
        %v1735 = vpop.f32.mrb[0].mxu0
        %v1736 = vadd.f32 %v1532, %v1735
        %1737 = vmatprep.mubr.f32.mxu0 %v1304
        %1738 = vmatmul.mubr.f32.gmra.mrb[0].mxu0 %v1303
        %v1739 = vpop.f32.mrb[0].mxu0
        %v1740 = vadd.f32 %v1528, %v1739
        %v1741 = vpop.f32.mrb[0].mxu0
        %v1742 = vadd.f32 %v1532, %v1741
        %1743 = vmatprep.mubr.f32.mxu0 %v1308
        %1744 = vmatmul.mubr.f32.gmra.mrb[0].mxu0 %v1307
        %v1745 = vpop.f32.mrb[0].mxu0
        %v1746 = vadd.f32 %v1528, %v1745
        %v1747 = vpop.f32.mrb[0].mxu0
        %v1748 = vadd.f32 %v1532, %v1747
        %1749 = vmatprep.mubr.f32.mxu0 %v1312
        %1750 = vmatmul.mubr.f32.gmra.mrb[0].mxu0 %v1311
        %v1751 = vpop.f32.mrb[0].mxu0
        %v1752 = vadd.f32 %v1528, %v1751
        %v1753 = vpop.f32.mrb[0].mxu0
        %v1754 = vadd.f32 %v1532, %v1753
        %1755 = vmatprep.mubr.f32.mxu0 %v1316
        %1756 = vmatmul.mubr.f32.gmra.mrb[0].mxu0 %v1315
        %v1757 = vpop.f32.mrb[0].mxu0
        %v1758 = vadd.f32 %v1528, %v1757
        %v1759 = vpop.f32.mrb[0].mxu0
        %v1760 = vadd.f32 %v1532, %v1759
        %1761 = vmatprep.mubr.f32.mxu0 %v1320
        %1762 = vmatmul.mubr.f32.gmra.mrb[0].mxu0 %v1319
        %v1763 = vpop.f32.mrb[0].mxu0
        %v1764 = vadd.f32 %v1528, %v1763
        %v1765 = vpop.f32.mrb[0].mxu0
        %v1766 = vadd.f32 %v1532, %v1765
        %1767 = vmatprep.mubr.f32.mxu0 %v1324
        %1768 = vmatmul.mubr.f32.gmra.mrb[0].mxu0 %v1323
        %v1769 = vpop.f32.mrb[0].mxu0
        %v1770 = vadd.f32 %v1528, %v1769
        %v1771 = vpop.f32.mrb[0].mxu0
        %v1772 = vadd.f32 %v1532, %v1771
        %1773 = vmatprep.mubr.f32.mxu0 %v1328
        %1774 = vmatmul.mubr.f32.gmra.mrb[0].mxu0 %v1327
        %v1775 = vpop.f32.mrb[0].mxu0
        %v1776 = vadd.f32 %v1528, %v1775
        %v1777 = vpop.f32.mrb[0].mxu0
        %v1778 = vadd.f32 %v1532, %v1777
        %1779 = vmatprep.mubr.f32.mxu0 %v1332
        %1780 = vmatmul.mubr.f32.gmra.mrb[0].mxu0 %v1331
        %v1781 = vpop.f32.mrb[0].mxu0
        %v1782 = vadd.f32 %v1528, %v1781
        %v1783 = vpop.f32.mrb[0].mxu0
        %v1784 = vadd.f32 %v1532, %v1783
        %1785 = vmatprep.mubr.f32.mxu0 %v1336
        %1786 = vmatmul.mubr.f32.gmra.mrb[0].mxu0 %v1335
        %v1787 = vpop.f32.mrb[0].mxu0
        %v1788 = vadd.f32 %v1528, %v1787
        %v1789 = vpop.f32.mrb[0].mxu0
        %v1790 = vadd.f32 %v1532, %v1789
        %1791 = vmatprep.mubr.f32.mxu0 %v1340
        %1792 = vmatmul.mubr.f32.gmra.mrb[0].mxu0 %v1339
        %v1793 = vpop.f32.mrb[0].mxu0
        %v1794 = vadd.f32 %v1528, %v1793
        %v1795 = vpop.f32.mrb[0].mxu0
        %v1796 = vadd.f32 %v1532, %v1795
        %1797 = vmatprep.mubr.f32.mxu0 %v1344
        %1798 = vmatmul.mubr.f32.gmra.mrb[0].mxu0 %v1343
        %v1799 = vpop.f32.mrb[0].mxu0
        %v1800 = vadd.f32 %v1528, %v1799
        %v1801 = vpop.f32.mrb[0].mxu0
        %v1802 = vadd.f32 %v1532, %v1801
        %1803 = vmatprep.mubr.f32.mxu0 %v1348
        %1804 = vmatmul.mubr.f32.gmra.mrb[0].mxu0 %v1347
        %v1805 = vpop.f32.mrb[0].mxu0
        %v1806 = vadd.f32 %v1528, %v1805
        %v1807 = vpop.f32.mrb[0].mxu0
        %v1808 = vadd.f32 %v1532, %v1807
        %1809 = vmatprep.mubr.f32.mxu0 %v1352
        %1810 = vmatmul.mubr.f32.gmra.mrb[0].mxu0 %v1351
        %v1811 = vpop.f32.mrb[0].mxu0
        %v1812 = vadd.f32 %v1528, %v1811
        %v1813 = vpop.f32.mrb[0].mxu0
        %v1814 = vadd.f32 %v1532, %v1813
        %1815 = vmatprep.mubr.f32.mxu0 %v1356
        %1816 = vmatmul.mubr.f32.gmra.mrb[0].mxu0 %v1355
        %v1817 = vpop.f32.mrb[0].mxu0
        %v1818 = vadd.f32 %v1528, %v1817
        %v1819 = vpop.f32.mrb[0].mxu0
        %v1820 = vadd.f32 %v1532, %v1819
        %1821 = vmatprep.mubr.f32.mxu0 %v1360
        %1822 = vmatmul.mubr.f32.gmra.mrb[0].mxu0 %v1359
        %v1823 = vpop.f32.mrb[0].mxu0
        %v1824 = vadd.f32 %v1528, %v1823
        %v1825 = vpop.f32.mrb[0].mxu0
        %v1826 = vadd.f32 %v1532, %v1825
        %1827 = vmatprep.mubr.f32.mxu0 %v1364
        %1828 = vmatmul.mubr.f32.gmra.mrb[0].mxu0 %v1363
        %v1829 = vpop.f32.mrb[0].mxu0
        %v1830 = vadd.f32 %v1528, %v1829
        %v1831 = vpop.f32.mrb[0].mxu0
        %v1832 = vadd.f32 %v1532, %v1831
        %1833 = vmatprep.mubr.f32.mxu0 %v1368
        %1834 = vmatmul.mubr.f32.gmra.mrb[0].mxu0 %v1367
        %v1835 = vpop.f32.mrb[0].mxu0
        %v1836 = vadd.f32 %v1528, %v1835
        %v1837 = vpop.f32.mrb[0].mxu0
        %v1838 = vadd.f32 %v1532, %v1837
        %1839 = vmatprep.mubr.f32.mxu0 %v1372
        %1840 = vmatmul.mubr.f32.gmra.mrb[0].mxu0 %v1371
        %v1841 = vpop.f32.mrb[0].mxu0
        %v1842 = vadd.f32 %v1528, %v1841
        %v1843 = vpop.f32.mrb[0].mxu0
        %v1844 = vadd.f32 %v1532, %v1843
        %1845 = vmatprep.mubr.f32.mxu0 %v1376
        %1846 = vmatmul.mubr.f32.gmra.mrb[0].mxu0 %v1375
        %v1847 = vpop.f32.mrb[0].mxu0
        %v1848 = vadd.f32 %v1528, %v1847
        %v1849 = vpop.f32.mrb[0].mxu0
        %v1850 = vadd.f32 %v1532, %v1849
        %1851 = vmatprep.mubr.f32.mxu0 %v1380
        %1852 = vmatmul.mubr.f32.gmra.mrb[0].mxu0 %v1379
        %v1853 = vpop.f32.mrb[0].mxu0
        %v1854 = vadd.f32 %v1528, %v1853
        %v1855 = vpop.f32.mrb[0].mxu0
        %v1856 = vadd.f32 %v1532, %v1855
        %1857 = vmatprep.mubr.f32.mxu0 %v1384
        %1858 = vmatmul.mubr.f32.gmra.mrb[0].mxu0 %v1383
        %v1859 = vpop.f32.mrb[0].mxu0
        %v1860 = vadd.f32 %v1528, %v1859
        %v1861 = vpop.f32.mrb[0].mxu0
        %v1862 = vadd.f32 %v1532, %v1861
        %1863 = vmatprep.mubr.f32.mxu0 %v1388
        %1864 = vmatmul.mubr.f32.gmra.mrb[0].mxu0 %v1387
        %v1865 = vpop.f32.mrb[0].mxu0
        %v1866 = vadd.f32 %v1528, %v1865
        %v1867 = vpop.f32.mrb[0].mxu0
        %v1868 = vadd.f32 %v1532, %v1867
        %1869 = vmatprep.mubr.f32.mxu0 %v1392
        %1870 = vmatmul.mubr.f32.gmra.mrb[0].mxu0 %v1391
        %v1871 = vpop.f32.mrb[0].mxu0
        %v1872 = vadd.f32 %v1528, %v1871
        %v1873 = vpop.f32.mrb[0].mxu0
        %v1874 = vadd.f32 %v1532, %v1873
        %1875 = vmatprep.mubr.f32.mxu0 %v1396
        %1876 = vmatmul.mubr.f32.gmra.mrb[0].mxu0 %v1395
        %v1877 = vpop.f32.mrb[0].mxu0
        %v1878 = vadd.f32 %v1528, %v1877
        %v1879 = vpop.f32.mrb[0].mxu0
        %v1880 = vadd.f32 %v1532, %v1879
        %1881 = vmatprep.mubr.f32.mxu0 %v1400
        %1882 = vmatmul.mubr.f32.gmra.mrb[0].mxu0 %v1399
        %v1883 = vpop.f32.mrb[0].mxu0
        %v1884 = vadd.f32 %v1528, %v1883
        %v1885 = vpop.f32.mrb[0].mxu0
        %v1886 = vadd.f32 %v1532, %v1885
        %1887 = vdwg.mxu0
        %1888 = vmatprep.subr.mxu0 %v1468
        %1889 = vmatpush1.msra.mxu0 %v1467
        %1890 = vmatprep.subr.mxu0 %v1470
        %1891 = vmatpush1.msra.mxu0 %v1469
        %1892 = vmatprep.subr.mxu0 %v1472
        %1893 = vmatpush1.msra.mxu0 %v1471
        %1894 = vmatprep.subr.mxu0 %v1474
        %1895 = vmatpush1.msra.mxu0 %v1473
        %1896 = vmatprep.subr.mxu0 %v1476
        %1897 = vmatpush1.msra.mxu0 %v1475
        %1898 = vmatprep.subr.mxu0 %v1478
        %1899 = vmatpush1.msra.mxu0 %v1477
        %1900 = vmatprep.subr.mxu0 %v1480
        %1901 = vmatpush1.msra.mxu0 %v1479
        %1902 = vmatprep.subr.mxu0 %v1482
        %1903 = vmatpush1.msra.mxu0 %v1481
        %1904 = vmatprep.subr.mxu0 %v1484
        %1905 = vmatpush1.msra.mxu0 %v1483
        %1906 = vmatprep.subr.mxu0 %v1486
        %1907 = vmatpush1.msra.mxu0 %v1485
        %1908 = vmatprep.subr.mxu0 %v1488
        %1909 = vmatpush1.msra.mxu0 %v1487
        %1910 = vmatprep.subr.mxu0 %v1490
        %1911 = vmatpush1.msra.mxu0 %v1489
        %1912 = vmatprep.subr.mxu0 %v1492
        %1913 = vmatpush1.msra.mxu0 %v1491
        %1914 = vmatprep.subr.mxu0 %v1494
        %1915 = vmatpush1.msra.mxu0 %v1493
        %1916 = vmatprep.subr.mxu0 %v1496
        %1917 = vmatpush1.msra.mxu0 %v1495
        %1918 = vmatprep.subr.mxu0 %v1498
        %1919 = vmatpush1.msra.mxu0 %v1497
        %1920 = vmatprep.subr.mxu0 %v1500
        %1921 = vmatpush1.msra.mxu0 %v1499
        %1922 = vmatprep.subr.mxu0 %v1502
        %1923 = vmatpush1.msra.mxu0 %v1501
        %1924 = vmatprep.subr.mxu0 %v1504
        %1925 = vmatpush1.msra.mxu0 %v1503
        %1926 = vmatprep.subr.mxu0 %v1506
        %1927 = vmatpush1.msra.mxu0 %v1505
        %1928 = vmatprep.subr.mxu0 %v1508
        %1929 = vmatpush1.msra.mxu0 %v1507
        %1930 = vmatprep.subr.mxu0 %v1510
        %1931 = vmatpush1.msra.mxu0 %v1509
        %1932 = vmatprep.subr.mxu0 %v1512
        %1933 = vmatpush1.msra.mxu0 %v1511
        %1934 = vmatprep.subr.mxu0 %v1514
        %1935 = vmatpush1.msra.mxu0 %v1513
        %1936 = vmatprep.subr.mxu0 %v1516
        %1937 = vmatpush1.msra.mxu0 %v1515
        %1938 = vmatprep.subr.mxu0 %v1518
        %1939 = vmatpush1.msra.mxu0 %v1517
        %1940 = vmatprep.subr.mxu0 %v1520
        %1941 = vmatpush1.msra.mxu0 %v1519
        %1942 = vmatprep.subr.mxu0 %v1522
        %1943 = vmatpush1.msra.mxu0 %v1521
        %1944 = vmatprep.subr.mxu0 0.0
        %1945 = vmatpush1.msra.mxu0 0.0
        %1946 = vmatprep.subr.mxu0 0.0
        %1947 = vmatpush1.msra.mxu0 0.0
        %1948 = vmatprep.subr.mxu0 0.0
        %1949 = vmatpush1.msra.mxu0 0.0
        %1950 = vmatprep.subr.mxu0 0.0
        %1951 = vmatpush1.msra.mxu0 0.0
        %1952 = vmatprep.mubr.f32.mxu0 %v1536
        %1953 = vmatmul.mubr.f32.gmra.mrb[0].mxu0 %v1277
        %v1954 = vpop.f32.mrb[0].mxu0
        %v1955 = vadd.f32 %v1698, %v1954
        %v1956 = vpop.f32.mrb[0].mxu0
        %v1957 = vadd.f32 %v1700, %v1956
        %1958 = vmatprep.mubr.f32.mxu0 %v1539
        %1959 = vmatmul.mubr.f32.gmra.mrb[0].mxu0 %v1281
        %v1960 = vpop.f32.mrb[0].mxu0
        %v1961 = vadd.f32 %v1704, %v1960
        %v1962 = vpop.f32.mrb[0].mxu0
        %v1963 = vadd.f32 %v1706, %v1962
        %1964 = vmatprep.mubr.f32.mxu0 %v1542
        %1965 = vmatmul.mubr.f32.gmra.mrb[0].mxu0 %v1285
        %v1966 = vpop.f32.mrb[0].mxu0
        %v1967 = vadd.f32 %v1710, %v1966
        %v1968 = vpop.f32.mrb[0].mxu0
        %v1969 = vadd.f32 %v1712, %v1968
        %1970 = vmatprep.mubr.f32.mxu0 %v1545
        %1971 = vmatmul.mubr.f32.gmra.mrb[0].mxu0 %v1289
        %v1972 = vpop.f32.mrb[0].mxu0
        %v1973 = vadd.f32 %v1716, %v1972
        %v1974 = vpop.f32.mrb[0].mxu0
        %v1975 = vadd.f32 %v1718, %v1974
        %1976 = vmatprep.mubr.f32.mxu0 %v1548
        %1977 = vmatmul.mubr.f32.gmra.mrb[0].mxu0 %v1293
        %v1978 = vpop.f32.mrb[0].mxu0
        %v1979 = vadd.f32 %v1722, %v1978
        %v1980 = vpop.f32.mrb[0].mxu0
        %v1981 = vadd.f32 %v1724, %v1980
        %1982 = vmatprep.mubr.f32.mxu0 %v1551
        %1983 = vmatmul.mubr.f32.gmra.mrb[0].mxu0 %v1297
        %v1984 = vpop.f32.mrb[0].mxu0
        %v1985 = vadd.f32 %v1728, %v1984
        %v1986 = vpop.f32.mrb[0].mxu0
        %v1987 = vadd.f32 %v1730, %v1986
        %1988 = vmatprep.mubr.f32.mxu0 %v1554
        %1989 = vmatmul.mubr.f32.gmra.mrb[0].mxu0 %v1301
        %v1990 = vpop.f32.mrb[0].mxu0
        %v1991 = vadd.f32 %v1734, %v1990
        %v1992 = vpop.f32.mrb[0].mxu0
        %v1993 = vadd.f32 %v1736, %v1992
        %1994 = vmatprep.mubr.f32.mxu0 %v1557
        %1995 = vmatmul.mubr.f32.gmra.mrb[0].mxu0 %v1305
        %v1996 = vpop.f32.mrb[0].mxu0
        %v1997 = vadd.f32 %v1740, %v1996
        %v1998 = vpop.f32.mrb[0].mxu0
        %v1999 = vadd.f32 %v1742, %v1998
        %2000 = vmatprep.mubr.f32.mxu0 %v1560
        %2001 = vmatmul.mubr.f32.gmra.mrb[0].mxu0 %v1309
        %v2002 = vpop.f32.mrb[0].mxu0
        %v2003 = vadd.f32 %v1746, %v2002
        %v2004 = vpop.f32.mrb[0].mxu0
        %v2005 = vadd.f32 %v1748, %v2004
        %2006 = vmatprep.mubr.f32.mxu0 %v1563
        %2007 = vmatmul.mubr.f32.gmra.mrb[0].mxu0 %v1313
        %v2008 = vpop.f32.mrb[0].mxu0
        %v2009 = vadd.f32 %v1752, %v2008
        %v2010 = vpop.f32.mrb[0].mxu0
        %v2011 = vadd.f32 %v1754, %v2010
        %2012 = vmatprep.mubr.f32.mxu0 %v1566
        %2013 = vmatmul.mubr.f32.gmra.mrb[0].mxu0 %v1317
        %v2014 = vpop.f32.mrb[0].mxu0
        %v2015 = vadd.f32 %v1758, %v2014
        %v2016 = vpop.f32.mrb[0].mxu0
        %v2017 = vadd.f32 %v1760, %v2016
        %2018 = vmatprep.mubr.f32.mxu0 %v1569
        %2019 = vmatmul.mubr.f32.gmra.mrb[0].mxu0 %v1321
        %v2020 = vpop.f32.mrb[0].mxu0
        %v2021 = vadd.f32 %v1764, %v2020
        %v2022 = vpop.f32.mrb[0].mxu0
        %v2023 = vadd.f32 %v1766, %v2022
        %2024 = vmatprep.mubr.f32.mxu0 %v1572
        %2025 = vmatmul.mubr.f32.gmra.mrb[0].mxu0 %v1325
        %v2026 = vpop.f32.mrb[0].mxu0
        %v2027 = vadd.f32 %v1770, %v2026
        %v2028 = vpop.f32.mrb[0].mxu0
        %v2029 = vadd.f32 %v1772, %v2028
        %2030 = vmatprep.mubr.f32.mxu0 %v1575
        %2031 = vmatmul.mubr.f32.gmra.mrb[0].mxu0 %v1329
        %v2032 = vpop.f32.mrb[0].mxu0
        %v2033 = vadd.f32 %v1776, %v2032
        %v2034 = vpop.f32.mrb[0].mxu0
        %v2035 = vadd.f32 %v1778, %v2034
        %2036 = vmatprep.mubr.f32.mxu0 %v1578
        %2037 = vmatmul.mubr.f32.gmra.mrb[0].mxu0 %v1333
        %v2038 = vpop.f32.mrb[0].mxu0
        %v2039 = vadd.f32 %v1782, %v2038
        %v2040 = vpop.f32.mrb[0].mxu0
        %v2041 = vadd.f32 %v1784, %v2040
        %2042 = vmatprep.mubr.f32.mxu0 %v1581
        %2043 = vmatmul.mubr.f32.gmra.mrb[0].mxu0 %v1337
        %v2044 = vpop.f32.mrb[0].mxu0
        %v2045 = vadd.f32 %v1788, %v2044
        %v2046 = vpop.f32.mrb[0].mxu0
        %v2047 = vadd.f32 %v1790, %v2046
        %2048 = vmatprep.mubr.f32.mxu0 %v1584
        %2049 = vmatmul.mubr.f32.gmra.mrb[0].mxu0 %v1341
        %v2050 = vpop.f32.mrb[0].mxu0
        %v2051 = vadd.f32 %v1794, %v2050
        %v2052 = vpop.f32.mrb[0].mxu0
        %v2053 = vadd.f32 %v1796, %v2052
        %2054 = vmatprep.mubr.f32.mxu0 %v1587
        %2055 = vmatmul.mubr.f32.gmra.mrb[0].mxu0 %v1345
        %v2056 = vpop.f32.mrb[0].mxu0
        %v2057 = vadd.f32 %v1800, %v2056
        %v2058 = vpop.f32.mrb[0].mxu0
        %v2059 = vadd.f32 %v1802, %v2058
        %2060 = vmatprep.mubr.f32.mxu0 %v1590
        %2061 = vmatmul.mubr.f32.gmra.mrb[0].mxu0 %v1349
        %v2062 = vpop.f32.mrb[0].mxu0
        %v2063 = vadd.f32 %v1806, %v2062
        %v2064 = vpop.f32.mrb[0].mxu0
        %v2065 = vadd.f32 %v1808, %v2064
        %2066 = vmatprep.mubr.f32.mxu0 %v1593
        %2067 = vmatmul.mubr.f32.gmra.mrb[0].mxu0 %v1353
        %v2068 = vpop.f32.mrb[0].mxu0
        %v2069 = vadd.f32 %v1812, %v2068
        %v2070 = vpop.f32.mrb[0].mxu0
        %v2071 = vadd.f32 %v1814, %v2070
        %2072 = vmatprep.mubr.f32.mxu0 %v1596
        %2073 = vmatmul.mubr.f32.gmra.mrb[0].mxu0 %v1357
        %v2074 = vpop.f32.mrb[0].mxu0
        %v2075 = vadd.f32 %v1818, %v2074
        %v2076 = vpop.f32.mrb[0].mxu0
        %v2077 = vadd.f32 %v1820, %v2076
        %2078 = vmatprep.mubr.f32.mxu0 %v1599
        %2079 = vmatmul.mubr.f32.gmra.mrb[0].mxu0 %v1361
        %v2080 = vpop.f32.mrb[0].mxu0
        %v2081 = vadd.f32 %v1824, %v2080
        %v2082 = vpop.f32.mrb[0].mxu0
        %v2083 = vadd.f32 %v1826, %v2082
        %2084 = vmatprep.mubr.f32.mxu0 %v1602
        %2085 = vmatmul.mubr.f32.gmra.mrb[0].mxu0 %v1365
        %v2086 = vpop.f32.mrb[0].mxu0
        %v2087 = vadd.f32 %v1830, %v2086
        %v2088 = vpop.f32.mrb[0].mxu0
        %v2089 = vadd.f32 %v1832, %v2088
        %2090 = vmatprep.mubr.f32.mxu0 %v1605
        %2091 = vmatmul.mubr.f32.gmra.mrb[0].mxu0 %v1369
        %v2092 = vpop.f32.mrb[0].mxu0
        %v2093 = vadd.f32 %v1836, %v2092
        %v2094 = vpop.f32.mrb[0].mxu0
        %v2095 = vadd.f32 %v1838, %v2094
        %2096 = vmatprep.mubr.f32.mxu0 %v1608
        %2097 = vmatmul.mubr.f32.gmra.mrb[0].mxu0 %v1373
        %v2098 = vpop.f32.mrb[0].mxu0
        %v2099 = vadd.f32 %v1842, %v2098
        %v2100 = vpop.f32.mrb[0].mxu0
        %v2101 = vadd.f32 %v1844, %v2100
        %2102 = vmatprep.mubr.f32.mxu0 %v1611
        %2103 = vmatmul.mubr.f32.gmra.mrb[0].mxu0 %v1377
        %v2104 = vpop.f32.mrb[0].mxu0
        %v2105 = vadd.f32 %v1848, %v2104
        %v2106 = vpop.f32.mrb[0].mxu0
        %v2107 = vadd.f32 %v1850, %v2106
        %2108 = vmatprep.mubr.f32.mxu0 %v1614
        %2109 = vmatmul.mubr.f32.gmra.mrb[0].mxu0 %v1381
        %v2110 = vpop.f32.mrb[0].mxu0
        %v2111 = vadd.f32 %v1854, %v2110
        %v2112 = vpop.f32.mrb[0].mxu0
        %v2113 = vadd.f32 %v1856, %v2112
        %2114 = vmatprep.mubr.f32.mxu0 %v1617
        %2115 = vmatmul.mubr.f32.gmra.mrb[0].mxu0 %v1385
        %v2116 = vpop.f32.mrb[0].mxu0
        %v2117 = vadd.f32 %v1860, %v2116
        %v2118 = vpop.f32.mrb[0].mxu0
        %v2119 = vadd.f32 %v1862, %v2118
        %2120 = vmatprep.mubr.f32.mxu0 %v1620
        %2121 = vmatmul.mubr.f32.gmra.mrb[0].mxu0 %v1389
        %v2122 = vpop.f32.mrb[0].mxu0
        %v2123 = vadd.f32 %v1866, %v2122
        %v2124 = vpop.f32.mrb[0].mxu0
        %v2125 = vadd.f32 %v1868, %v2124
        %2126 = vmatprep.mubr.f32.mxu0 %v1623
        %2127 = vmatmul.mubr.f32.gmra.mrb[0].mxu0 %v1393
        %v2128 = vpop.f32.mrb[0].mxu0
        %v2129 = vadd.f32 %v1872, %v2128
        %v2130 = vpop.f32.mrb[0].mxu0
        %v2131 = vadd.f32 %v1874, %v2130
        %2132 = vmatprep.mubr.f32.mxu0 %v1626
        %2133 = vmatmul.mubr.f32.gmra.mrb[0].mxu0 %v1397
        %v2134 = vpop.f32.mrb[0].mxu0
        %v2135 = vadd.f32 %v1878, %v2134
        %v2136 = vpop.f32.mrb[0].mxu0
        %v2137 = vadd.f32 %v1880, %v2136
        %2138 = vmatprep.mubr.f32.mxu0 %v1629
        %2139 = vmatmul.mubr.f32.gmra.mrb[0].mxu0 %v1401
        %v2140 = vpop.f32.mrb[0].mxu0
        %v2141 = vadd.f32 %v1884, %v2140
        %v2142 = vpop.f32.mrb[0].mxu0
        %v2143 = vadd.f32 %v1886, %v2142
        %2144 = vdwg.mxu0
        %v2145 = vtanh.pop %v1955
        %v2146 = vtanh.pop %v1957
        %v2147 = vtanh.pop %v1961
        %v2148 = vtanh.pop %v1963
        %v2149 = vtanh.pop %v1967
        %v2150 = vtanh.pop %v1969
        %v2151 = vtanh.pop %v1973
        %v2152 = vtanh.pop %v1975
        %v2153 = vtanh.pop %v1979
        %v2154 = vtanh.pop %v1981
        %v2155 = vtanh.pop %v1985
        %v2156 = vtanh.pop %v1987
        %v2157 = vtanh.pop %v1991
        %v2158 = vtanh.pop %v1993
        %v2159 = vtanh.pop %v1997
        %v2160 = vtanh.pop %v1999
        %v2161 = vtanh.pop %v2003
        %v2162 = vtanh.pop %v2005
        %v2163 = vtanh.pop %v2009
        %v2164 = vtanh.pop %v2011
        %v2165 = vtanh.pop %v2015
        %v2166 = vtanh.pop %v2017
        %v2167 = vtanh.pop %v2021
        %v2168 = vtanh.pop %v2023
        %v2169 = vtanh.pop %v2027
        %v2170 = vtanh.pop %v2029
        %v2171 = vtanh.pop %v2033
        %v2172 = vtanh.pop %v2035
        %v2173 = vtanh.pop %v2039
        %v2174 = vtanh.pop %v2041
        %v2175 = vtanh.pop %v2045
        %v2176 = vtanh.pop %v2047
        %v2177 = vtanh.pop %v2051
        %v2178 = vtanh.pop %v2053
        %v2179 = vtanh.pop %v2057
        %v2180 = vtanh.pop %v2059
        %v2181 = vtanh.pop %v2063
        %v2182 = vtanh.pop %v2065
        %v2183 = vtanh.pop %v2069
        %v2184 = vtanh.pop %v2071
        %v2185 = vtanh.pop %v2075
        %v2186 = vtanh.pop %v2077
        %v2187 = vtanh.pop %v2081
        %v2188 = vtanh.pop %v2083
        %v2189 = vtanh.pop %v2087
        %v2190 = vtanh.pop %v2089
        %v2191 = vtanh.pop %v2093
        %v2192 = vtanh.pop %v2095
        %v2193 = vtanh.pop %v2099
        %v2194 = vtanh.pop %v2101
        %v2195 = vtanh.pop %v2105
        %v2196 = vtanh.pop %v2107
        %v2197 = vtanh.pop %v2111
        %v2198 = vtanh.pop %v2113
        %v2199 = vtanh.pop %v2117
        %v2200 = vtanh.pop %v2119
        %v2201 = vtanh.pop %v2123
        %v2202 = vtanh.pop %v2125
        %v2203 = vtanh.pop %v2129
        %v2204 = vtanh.pop %v2131
        %v2205 = vtanh.pop %v2135
        %v2206 = vtanh.pop %v2137
        %v2207 = vtanh.pop %v2141
        %v2208 = vtanh.pop %v2143
        %v2209 = vld [vmem:[%s4] sm:$0xff]
        %v2210 = vld [vmem:[%s4 + $0x8] sm:$0xff]
        %v2211 = vld [vmem:[%s4 + $0x10] sm:$0xff]
        %v2212 = vld [vmem:[%s4 + $0x18] sm:$0xff]
        %v2213 = vld [vmem:[%s4 + $0x20] sm:$0xff]
        %v2214 = vld [vmem:[%s4 + $0x28] sm:$0xff]
        %v2215 = vld [vmem:[%s4 + $0x30] sm:$0xff]
        %v2216 = vld [vmem:[%s4 + $0x38] sm:$0xff]
        %v2217 = vld [vmem:[%s4 + $0x40] sm:$0xff]
        %v2218 = vld [vmem:[%s4 + $0x48] sm:$0xff]
        %v2219 = vld [vmem:[%s4 + $0x50] sm:$0xff]
        %v2220 = vld [vmem:[%s4 + $0x58] sm:$0xff]
        %v2221 = vld [vmem:[%s4 + $0x60] sm:$0xff]
        %v2222 = vld [vmem:[%s4 + $0x68] sm:$0xff]
        %v2223 = vld [vmem:[%s4 + $0x70] sm:$0xff]
        %v2224 = vld [vmem:[%s4 + $0x78] sm:$0xff]
        %v2225 = vld [vmem:[%s4 + $0x80] sm:$0xff]
        %v2226 = vld [vmem:[%s4 + $0x88] sm:$0xff]
        %v2227 = vld [vmem:[%s4 + $0x90] sm:$0xff]
        %v2228 = vld [vmem:[%s4 + $0x98] sm:$0xff]
        %v2229 = vld [vmem:[%s4 + $0xa0] sm:$0xff]
        %v2230 = vld [vmem:[%s4 + $0xa8] sm:$0xff]
        %v2231 = vld [vmem:[%s4 + $0xb0] sm:$0xff]
        %v2232 = vld [vmem:[%s4 + $0xb8] sm:$0xff]
        %v2233 = vld [vmem:[%s4 + $0xc0] sm:$0xff]
        %v2234 = vld [vmem:[%s4 + $0xc8] sm:$0xff]
        %v2235 = vld [vmem:[%s4 + $0xd0] sm:$0xff]
        %v2236 = vld [vmem:[%s4 + $0xd8] sm:$0xff]
        %v2237 = vld [vmem:[%s3] sm:$0xff]
        %v2238 = vld [vmem:[%s3 + $0x8] sm:$0xff]
        %v2239 = vld [vmem:[%s3 + $0x10] sm:$0xff]
        %v2240 = vld [vmem:[%s3 + $0x18] sm:$0xff]
        %v2241 = vld [vmem:[%s3 + $0x20] sm:$0xff]
        %v2242 = vld [vmem:[%s3 + $0x28] sm:$0xff]
        %v2243 = vld [vmem:[%s3 + $0x30] sm:$0xff]
        %v2244 = vld [vmem:[%s3 + $0x38] sm:$0xff]
        %v2245 = vld [vmem:[%s3 + $0x40] sm:$0xff]
        %v2246 = vld [vmem:[%s3 + $0x48] sm:$0xff]
        %v2247 = vld [vmem:[%s3 + $0x50] sm:$0xff]
        %v2248 = vld [vmem:[%s3 + $0x58] sm:$0xff]
        %v2249 = vld [vmem:[%s3 + $0x60] sm:$0xff]
        %v2250 = vld [vmem:[%s3 + $0x68] sm:$0xff]
        %v2251 = vld [vmem:[%s3 + $0x70] sm:$0xff]
        %v2252 = vld [vmem:[%s3 + $0x78] sm:$0xff]
        %v2253 = vld [vmem:[%s3 + $0x80] sm:$0xff]
        %v2254 = vld [vmem:[%s3 + $0x88] sm:$0xff]
        %v2255 = vld [vmem:[%s3 + $0x90] sm:$0xff]
        %v2256 = vld [vmem:[%s3 + $0x98] sm:$0xff]
        %v2257 = vld [vmem:[%s3 + $0xa0] sm:$0xff]
        %vm2258 = vcmask 326656
        %v2260 = vsel %vm2258, %v2146, 0
        %v2263 = vsel %vm2258, %v2148, 0
        %v2266 = vsel %vm2258, %v2150, 0
        %v2269 = vsel %vm2258, %v2152, 0
        %v2272 = vsel %vm2258, %v2154, 0
        %v2275 = vsel %vm2258, %v2156, 0
        %v2278 = vsel %vm2258, %v2158, 0
        %v2281 = vsel %vm2258, %v2160, 0
        %v2284 = vsel %vm2258, %v2162, 0
        %v2287 = vsel %vm2258, %v2164, 0
        %v2290 = vsel %vm2258, %v2166, 0
        %v2293 = vsel %vm2258, %v2168, 0
        %v2296 = vsel %vm2258, %v2170, 0
        %v2299 = vsel %vm2258, %v2172, 0
        %v2302 = vsel %vm2258, %v2174, 0
        %v2305 = vsel %vm2258, %v2176, 0
        %v2308 = vsel %vm2258, %v2178, 0
        %v2311 = vsel %vm2258, %v2180, 0
        %v2314 = vsel %vm2258, %v2182, 0
        %v2317 = vsel %vm2258, %v2184, 0
        %v2320 = vsel %vm2258, %v2186, 0
        %v2323 = vsel %vm2258, %v2188, 0
        %v2326 = vsel %vm2258, %v2190, 0
        %v2329 = vsel %vm2258, %v2192, 0
        %v2332 = vsel %vm2258, %v2194, 0
        %v2335 = vsel %vm2258, %v2196, 0
        %v2338 = vsel %vm2258, %v2198, 0
        %v2341 = vsel %vm2258, %v2200, 0
        %v2344 = vsel %vm2258, %v2202, 0
        %v2347 = vsel %vm2258, %v2204, 0
        %v2350 = vsel %vm2258, %v2206, 0
        %v2353 = vsel %vm2258, %v2208, 0
        %2355 = vmatprep.subr.mxu0 0.0
        %2356 = vmatpush1.msra.mxu0 %v2237
        %2357 = vmatprep.subr.mxu0 0.0
        %2358 = vmatpush1.msra.mxu0 %v2238
        %2359 = vmatprep.subr.mxu0 0.0
        %2360 = vmatpush1.msra.mxu0 %v2239
        %2361 = vmatprep.subr.mxu0 0.0
        %2362 = vmatpush1.msra.mxu0 %v2240
        %2363 = vmatprep.subr.mxu0 0.0
        %2364 = vmatpush1.msra.mxu0 %v2241
        %2365 = vmatprep.subr.mxu0 0.0
        %2366 = vmatpush1.msra.mxu0 %v2242
        %2367 = vmatprep.subr.mxu0 0.0
        %2368 = vmatpush1.msra.mxu0 %v2243
        %2369 = vmatprep.subr.mxu0 0.0
        %2370 = vmatpush1.msra.mxu0 %v2244
        %2371 = vmatprep.subr.mxu0 0.0
        %2372 = vmatpush1.msra.mxu0 %v2245
        %2373 = vmatprep.subr.mxu0 0.0
        %2374 = vmatpush1.msra.mxu0 %v2246
        %2375 = vmatprep.subr.mxu0 0.0
        %2376 = vmatpush1.msra.mxu0 %v2247
        %2377 = vmatprep.subr.mxu0 0.0
        %2378 = vmatpush1.msra.mxu0 %v2248
        %2379 = vmatprep.subr.mxu0 0.0
        %2380 = vmatpush1.msra.mxu0 %v2249
        %2381 = vmatprep.subr.mxu0 0.0
        %2382 = vmatpush1.msra.mxu0 %v2250
        %2383 = vmatprep.subr.mxu0 0.0
        %2384 = vmatpush1.msra.mxu0 %v2251
        %2385 = vmatprep.subr.mxu0 0.0
        %2386 = vmatpush1.msra.mxu0 %v2252
        %2387 = vmatprep.subr.mxu0 0.0
        %2388 = vmatpush1.msra.mxu0 %v2253
        %2389 = vmatprep.subr.mxu0 0.0
        %2390 = vmatpush1.msra.mxu0 %v2254
        %2391 = vmatprep.subr.mxu0 0.0
        %2392 = vmatpush1.msra.mxu0 %v2255
        %2393 = vmatprep.subr.mxu0 0.0
        %2394 = vmatpush1.msra.mxu0 %v2256
        %2395 = vmatprep.subr.mxu0 0.0
        %2396 = vmatpush1.msra.mxu0 %v2257
        %2397 = vmatprep.subr.mxu0 0.0
        %2398 = vmatpush1.msra.mxu0 0.0
        %2399 = vmatprep.subr.mxu0 0.0
        %2400 = vmatpush1.msra.mxu0 0.0
        %2401 = vmatprep.subr.mxu0 0.0
        %2402 = vmatpush1.msra.mxu0 0.0
        %2403 = vmatprep.subr.mxu0 0.0
        %2404 = vmatpush1.msra.mxu0 0.0
        %2405 = vmatprep.subr.mxu0 0.0
        %2406 = vmatpush1.msra.mxu0 0.0
        %2407 = vmatprep.subr.mxu0 0.0
        %2408 = vmatpush1.msra.mxu0 0.0
        %2409 = vmatprep.subr.mxu0 0.0
        %2410 = vmatpush1.msra.mxu0 0.0
        %2411 = vmatprep.subr.mxu0 0.0
        %2412 = vmatpush1.msra.mxu0 0.0
        %2413 = vmatprep.subr.mxu0 0.0
        %2414 = vmatpush1.msra.mxu0 0.0
        %2415 = vmatprep.subr.mxu0 0.0
        %2416 = vmatpush1.msra.mxu0 0.0
        %2417 = vmatprep.subr.mxu0 0.0
        %2418 = vmatpush1.msra.mxu0 0.0
        %2419 = vmatprep.mubr.f32.mxu0 %v2260
        %2420 = vmatmul.mubr.f32.gmra.mrb[0].mxu0 %v2145
        %v2421 = vpop.f32.mrb[0].mxu0
        %v2422 = vadd.f32 0.0, %v2421
        %v2423 = vpop.f32.mrb[0].mxu0
        %2424 = vmatprep.mubr.f32.mxu0 %v2263
        %2425 = vmatmul.mubr.f32.gmra.mrb[0].mxu0 %v2147
        %v2426 = vpop.f32.mrb[0].mxu0
        %v2427 = vadd.f32 0.0, %v2426
        %v2428 = vpop.f32.mrb[0].mxu0
        %2429 = vmatprep.mubr.f32.mxu0 %v2266
        %2430 = vmatmul.mubr.f32.gmra.mrb[0].mxu0 %v2149
        %v2431 = vpop.f32.mrb[0].mxu0
        %v2432 = vadd.f32 0.0, %v2431
        %v2433 = vpop.f32.mrb[0].mxu0
        %2434 = vmatprep.mubr.f32.mxu0 %v2269
        %2435 = vmatmul.mubr.f32.gmra.mrb[0].mxu0 %v2151
        %v2436 = vpop.f32.mrb[0].mxu0
        %v2437 = vadd.f32 0.0, %v2436
        %v2438 = vpop.f32.mrb[0].mxu0
        %2439 = vmatprep.mubr.f32.mxu0 %v2272
        %2440 = vmatmul.mubr.f32.gmra.mrb[0].mxu0 %v2153
        %v2441 = vpop.f32.mrb[0].mxu0
        %v2442 = vadd.f32 0.0, %v2441
        %v2443 = vpop.f32.mrb[0].mxu0
        %2444 = vmatprep.mubr.f32.mxu0 %v2275
        %2445 = vmatmul.mubr.f32.gmra.mrb[0].mxu0 %v2155
        %v2446 = vpop.f32.mrb[0].mxu0
        %v2447 = vadd.f32 0.0, %v2446
        %v2448 = vpop.f32.mrb[0].mxu0
        %2449 = vmatprep.mubr.f32.mxu0 %v2278
        %2450 = vmatmul.mubr.f32.gmra.mrb[0].mxu0 %v2157
        %v2451 = vpop.f32.mrb[0].mxu0
        %v2452 = vadd.f32 0.0, %v2451
        %v2453 = vpop.f32.mrb[0].mxu0
        %2454 = vmatprep.mubr.f32.mxu0 %v2281
        %2455 = vmatmul.mubr.f32.gmra.mrb[0].mxu0 %v2159
        %v2456 = vpop.f32.mrb[0].mxu0
        %v2457 = vadd.f32 0.0, %v2456
        %v2458 = vpop.f32.mrb[0].mxu0
        %2459 = vmatprep.mubr.f32.mxu0 %v2284
        %2460 = vmatmul.mubr.f32.gmra.mrb[0].mxu0 %v2161
        %v2461 = vpop.f32.mrb[0].mxu0
        %v2462 = vadd.f32 0.0, %v2461
        %v2463 = vpop.f32.mrb[0].mxu0
        %2464 = vmatprep.mubr.f32.mxu0 %v2287
        %2465 = vmatmul.mubr.f32.gmra.mrb[0].mxu0 %v2163
        %v2466 = vpop.f32.mrb[0].mxu0
        %v2467 = vadd.f32 0.0, %v2466
        %v2468 = vpop.f32.mrb[0].mxu0
        %2469 = vmatprep.mubr.f32.mxu0 %v2290
        %2470 = vmatmul.mubr.f32.gmra.mrb[0].mxu0 %v2165
        %v2471 = vpop.f32.mrb[0].mxu0
        %v2472 = vadd.f32 0.0, %v2471
        %v2473 = vpop.f32.mrb[0].mxu0
        %2474 = vmatprep.mubr.f32.mxu0 %v2293
        %2475 = vmatmul.mubr.f32.gmra.mrb[0].mxu0 %v2167
        %v2476 = vpop.f32.mrb[0].mxu0
        %v2477 = vadd.f32 0.0, %v2476
        %v2478 = vpop.f32.mrb[0].mxu0
        %2479 = vmatprep.mubr.f32.mxu0 %v2296
        %2480 = vmatmul.mubr.f32.gmra.mrb[0].mxu0 %v2169
        %v2481 = vpop.f32.mrb[0].mxu0
        %v2482 = vadd.f32 0.0, %v2481
        %v2483 = vpop.f32.mrb[0].mxu0
        %2484 = vmatprep.mubr.f32.mxu0 %v2299
        %2485 = vmatmul.mubr.f32.gmra.mrb[0].mxu0 %v2171
        %v2486 = vpop.f32.mrb[0].mxu0
        %v2487 = vadd.f32 0.0, %v2486
        %v2488 = vpop.f32.mrb[0].mxu0
        %2489 = vmatprep.mubr.f32.mxu0 %v2302
        %2490 = vmatmul.mubr.f32.gmra.mrb[0].mxu0 %v2173
        %v2491 = vpop.f32.mrb[0].mxu0
        %v2492 = vadd.f32 0.0, %v2491
        %v2493 = vpop.f32.mrb[0].mxu0
        %2494 = vmatprep.mubr.f32.mxu0 %v2305
        %2495 = vmatmul.mubr.f32.gmra.mrb[0].mxu0 %v2175
        %v2496 = vpop.f32.mrb[0].mxu0
        %v2497 = vadd.f32 0.0, %v2496
        %v2498 = vpop.f32.mrb[0].mxu0
        %2499 = vmatprep.mubr.f32.mxu0 %v2308
        %2500 = vmatmul.mubr.f32.gmra.mrb[0].mxu0 %v2177
        %v2501 = vpop.f32.mrb[0].mxu0
        %v2502 = vadd.f32 0.0, %v2501
        %v2503 = vpop.f32.mrb[0].mxu0
        %2504 = vmatprep.mubr.f32.mxu0 %v2311
        %2505 = vmatmul.mubr.f32.gmra.mrb[0].mxu0 %v2179
        %v2506 = vpop.f32.mrb[0].mxu0
        %v2507 = vadd.f32 0.0, %v2506
        %v2508 = vpop.f32.mrb[0].mxu0
        %2509 = vmatprep.mubr.f32.mxu0 %v2314
        %2510 = vmatmul.mubr.f32.gmra.mrb[0].mxu0 %v2181
        %v2511 = vpop.f32.mrb[0].mxu0
        %v2512 = vadd.f32 0.0, %v2511
        %v2513 = vpop.f32.mrb[0].mxu0
        %2514 = vmatprep.mubr.f32.mxu0 %v2317
        %2515 = vmatmul.mubr.f32.gmra.mrb[0].mxu0 %v2183
        %v2516 = vpop.f32.mrb[0].mxu0
        %v2517 = vadd.f32 0.0, %v2516
        %v2518 = vpop.f32.mrb[0].mxu0
        %2519 = vmatprep.mubr.f32.mxu0 %v2320
        %2520 = vmatmul.mubr.f32.gmra.mrb[0].mxu0 %v2185
        %v2521 = vpop.f32.mrb[0].mxu0
        %v2522 = vadd.f32 0.0, %v2521
        %v2523 = vpop.f32.mrb[0].mxu0
        %2524 = vmatprep.mubr.f32.mxu0 %v2323
        %2525 = vmatmul.mubr.f32.gmra.mrb[0].mxu0 %v2187
        %v2526 = vpop.f32.mrb[0].mxu0
        %v2527 = vadd.f32 0.0, %v2526
        %v2528 = vpop.f32.mrb[0].mxu0
        %2529 = vmatprep.mubr.f32.mxu0 %v2326
        %2530 = vmatmul.mubr.f32.gmra.mrb[0].mxu0 %v2189
        %v2531 = vpop.f32.mrb[0].mxu0
        %v2532 = vadd.f32 0.0, %v2531
        %v2533 = vpop.f32.mrb[0].mxu0
        %2534 = vmatprep.mubr.f32.mxu0 %v2329
        %2535 = vmatmul.mubr.f32.gmra.mrb[0].mxu0 %v2191
        %v2536 = vpop.f32.mrb[0].mxu0
        %v2537 = vadd.f32 0.0, %v2536
        %v2538 = vpop.f32.mrb[0].mxu0
        %2539 = vmatprep.mubr.f32.mxu0 %v2332
        %2540 = vmatmul.mubr.f32.gmra.mrb[0].mxu0 %v2193
        %v2541 = vpop.f32.mrb[0].mxu0
        %v2542 = vadd.f32 0.0, %v2541
        %v2543 = vpop.f32.mrb[0].mxu0
        %2544 = vmatprep.mubr.f32.mxu0 %v2335
        %2545 = vmatmul.mubr.f32.gmra.mrb[0].mxu0 %v2195
        %v2546 = vpop.f32.mrb[0].mxu0
        %v2547 = vadd.f32 0.0, %v2546
        %v2548 = vpop.f32.mrb[0].mxu0
        %2549 = vmatprep.mubr.f32.mxu0 %v2338
        %2550 = vmatmul.mubr.f32.gmra.mrb[0].mxu0 %v2197
        %v2551 = vpop.f32.mrb[0].mxu0
        %v2552 = vadd.f32 0.0, %v2551
        %v2553 = vpop.f32.mrb[0].mxu0
        %2554 = vmatprep.mubr.f32.mxu0 %v2341
        %2555 = vmatmul.mubr.f32.gmra.mrb[0].mxu0 %v2199
        %v2556 = vpop.f32.mrb[0].mxu0
        %v2557 = vadd.f32 0.0, %v2556
        %v2558 = vpop.f32.mrb[0].mxu0
        %2559 = vmatprep.mubr.f32.mxu0 %v2344
        %2560 = vmatmul.mubr.f32.gmra.mrb[0].mxu0 %v2201
        %v2561 = vpop.f32.mrb[0].mxu0
        %v2562 = vadd.f32 0.0, %v2561
        %v2563 = vpop.f32.mrb[0].mxu0
        %2564 = vmatprep.mubr.f32.mxu0 %v2347
        %2565 = vmatmul.mubr.f32.gmra.mrb[0].mxu0 %v2203
        %v2566 = vpop.f32.mrb[0].mxu0
        %v2567 = vadd.f32 0.0, %v2566
        %v2568 = vpop.f32.mrb[0].mxu0
        %2569 = vmatprep.mubr.f32.mxu0 %v2350
        %2570 = vmatmul.mubr.f32.gmra.mrb[0].mxu0 %v2205
        %v2571 = vpop.f32.mrb[0].mxu0
        %v2572 = vadd.f32 0.0, %v2571
        %v2573 = vpop.f32.mrb[0].mxu0
        %2574 = vmatprep.mubr.f32.mxu0 %v2353
        %2575 = vmatmul.mubr.f32.gmra.mrb[0].mxu0 %v2207
        %v2576 = vpop.f32.mrb[0].mxu0
        %v2577 = vadd.f32 0.0, %v2576
        %v2578 = vpop.f32.mrb[0].mxu0
        %2579 = vdwg.mxu0
        %vm2580 = vcmask 1014784
        %v2582 = vsel %vm2580, %v2210, 0
        %v2585 = vsel %vm2580, %v2212, 0
        %v2588 = vsel %vm2580, %v2214, 0
        %v2591 = vsel %vm2580, %v2216, 0
        %v2594 = vsel %vm2580, %v2218, 0
        %v2597 = vsel %vm2580, %v2220, 0
        %v2600 = vsel %vm2580, %v2222, 0
        %v2603 = vsel %vm2580, %v2224, 0
        %v2606 = vsel %vm2580, %v2226, 0
        %v2609 = vsel %vm2580, %v2228, 0
        %v2612 = vsel %vm2580, %v2230, 0
        %v2615 = vsel %vm2580, %v2232, 0
        %v2618 = vsel %vm2580, %v2234, 0
        %v2621 = vsel %vm2580, %v2236, 0
        %vm2623 = vcmask 1043456
        %v2625 = vsel %vm2623, %v2577, 0
        %2627 = vmatprep.subr.mxu0 0.0
        %2628 = vmatpush1.msra.mxu0 %v2422
        %2629 = vmatprep.subr.mxu0 0.0
        %2630 = vmatpush1.msra.mxu0 %v2427
        %2631 = vmatprep.subr.mxu0 0.0
        %2632 = vmatpush1.msra.mxu0 %v2432
        %2633 = vmatprep.subr.mxu0 0.0
        %2634 = vmatpush1.msra.mxu0 %v2437
        %2635 = vmatprep.subr.mxu0 0.0
        %2636 = vmatpush1.msra.mxu0 %v2442
        %2637 = vmatprep.subr.mxu0 0.0
        %2638 = vmatpush1.msra.mxu0 %v2447
        %2639 = vmatprep.subr.mxu0 0.0
        %2640 = vmatpush1.msra.mxu0 %v2452
        %2641 = vmatprep.subr.mxu0 0.0
        %2642 = vmatpush1.msra.mxu0 %v2457
        %2643 = vmatprep.subr.mxu0 0.0
        %2644 = vmatpush1.msra.mxu0 %v2462
        %2645 = vmatprep.subr.mxu0 0.0
        %2646 = vmatpush1.msra.mxu0 %v2467
        %2647 = vmatprep.subr.mxu0 0.0
        %2648 = vmatpush1.msra.mxu0 %v2472
        %2649 = vmatprep.subr.mxu0 0.0
        %2650 = vmatpush1.msra.mxu0 %v2477
        %2651 = vmatprep.subr.mxu0 0.0
        %2652 = vmatpush1.msra.mxu0 %v2482
        %2653 = vmatprep.subr.mxu0 0.0
        %2654 = vmatpush1.msra.mxu0 %v2487
        %2655 = vmatprep.subr.mxu0 0.0
        %2656 = vmatpush1.msra.mxu0 %v2492
        %2657 = vmatprep.subr.mxu0 0.0
        %2658 = vmatpush1.msra.mxu0 %v2497
        %2659 = vmatprep.subr.mxu0 0.0
        %2660 = vmatpush1.msra.mxu0 %v2502
        %2661 = vmatprep.subr.mxu0 0.0
        %2662 = vmatpush1.msra.mxu0 %v2507
        %2663 = vmatprep.subr.mxu0 0.0
        %2664 = vmatpush1.msra.mxu0 %v2512
        %2665 = vmatprep.subr.mxu0 0.0
        %2666 = vmatpush1.msra.mxu0 %v2517
        %2667 = vmatprep.subr.mxu0 0.0
        %2668 = vmatpush1.msra.mxu0 %v2522
        %2669 = vmatprep.subr.mxu0 0.0
        %2670 = vmatpush1.msra.mxu0 %v2527
        %2671 = vmatprep.subr.mxu0 0.0
        %2672 = vmatpush1.msra.mxu0 %v2532
        %2673 = vmatprep.subr.mxu0 0.0
        %2674 = vmatpush1.msra.mxu0 %v2537
        %2675 = vmatprep.subr.mxu0 0.0
        %2676 = vmatpush1.msra.mxu0 %v2542
        %2677 = vmatprep.subr.mxu0 0.0
        %2678 = vmatpush1.msra.mxu0 %v2547
        %2679 = vmatprep.subr.mxu0 0.0
        %2680 = vmatpush1.msra.mxu0 %v2552
        %2681 = vmatprep.subr.mxu0 0.0
        %2682 = vmatpush1.msra.mxu0 %v2557
        %2683 = vmatprep.subr.mxu0 0.0
        %2684 = vmatpush1.msra.mxu0 %v2562
        %2685 = vmatprep.subr.mxu0 0.0
        %2686 = vmatpush1.msra.mxu0 %v2567
        %2687 = vmatprep.subr.mxu0 0.0
        %2688 = vmatpush1.msra.mxu0 %v2572
        %2689 = vmatprep.subr.mxu0 0.0
        %2690 = vmatpush1.msra.mxu0 %v2625
        %2691 = vmatprep.mubr.f32.mxu0 %v2582
        %2692 = vmatmul.mubr.f32.gmra.mrb[0].mxu0 %v2209
        %v2693 = vpop.f32.mrb[0].mxu0
        %v2694 = vadd.f32 0.0, %v2693
        %v2695 = vpop.f32.mrb[0].mxu0
        %2696 = vmatprep.mubr.f32.mxu0 %v2585
        %2697 = vmatmul.mubr.f32.gmra.mrb[0].mxu0 %v2211
        %v2698 = vpop.f32.mrb[0].mxu0
        %v2699 = vadd.f32 0.0, %v2698
        %v2700 = vpop.f32.mrb[0].mxu0
        %2701 = vmatprep.mubr.f32.mxu0 %v2588
        %2702 = vmatmul.mubr.f32.gmra.mrb[0].mxu0 %v2213
        %v2703 = vpop.f32.mrb[0].mxu0
        %v2704 = vadd.f32 0.0, %v2703
        %v2705 = vpop.f32.mrb[0].mxu0
        %2706 = vmatprep.mubr.f32.mxu0 %v2591
        %2707 = vmatmul.mubr.f32.gmra.mrb[0].mxu0 %v2215
        %v2708 = vpop.f32.mrb[0].mxu0
        %v2709 = vadd.f32 0.0, %v2708
        %v2710 = vpop.f32.mrb[0].mxu0
        %2711 = vmatprep.mubr.f32.mxu0 %v2594
        %2712 = vmatmul.mubr.f32.gmra.mrb[0].mxu0 %v2217
        %v2713 = vpop.f32.mrb[0].mxu0
        %v2714 = vadd.f32 0.0, %v2713
        %v2715 = vpop.f32.mrb[0].mxu0
        %2716 = vmatprep.mubr.f32.mxu0 %v2597
        %2717 = vmatmul.mubr.f32.gmra.mrb[0].mxu0 %v2219
        %v2718 = vpop.f32.mrb[0].mxu0
        %v2719 = vadd.f32 0.0, %v2718
        %v2720 = vpop.f32.mrb[0].mxu0
        %2721 = vmatprep.mubr.f32.mxu0 %v2600
        %2722 = vmatmul.mubr.f32.gmra.mrb[0].mxu0 %v2221
        %v2723 = vpop.f32.mrb[0].mxu0
        %v2724 = vadd.f32 0.0, %v2723
        %v2725 = vpop.f32.mrb[0].mxu0
        %2726 = vmatprep.mubr.f32.mxu0 %v2603
        %2727 = vmatmul.mubr.f32.gmra.mrb[0].mxu0 %v2223
        %v2728 = vpop.f32.mrb[0].mxu0
        %v2729 = vadd.f32 0.0, %v2728
        %v2730 = vpop.f32.mrb[0].mxu0
        %2731 = vmatprep.mubr.f32.mxu0 %v2606
        %2732 = vmatmul.mubr.f32.gmra.mrb[0].mxu0 %v2225
        %v2733 = vpop.f32.mrb[0].mxu0
        %v2734 = vadd.f32 0.0, %v2733
        %v2735 = vpop.f32.mrb[0].mxu0
        %2736 = vmatprep.mubr.f32.mxu0 %v2609
        %2737 = vmatmul.mubr.f32.gmra.mrb[0].mxu0 %v2227
        %v2738 = vpop.f32.mrb[0].mxu0
        %v2739 = vadd.f32 0.0, %v2738
        %v2740 = vpop.f32.mrb[0].mxu0
        %2741 = vmatprep.mubr.f32.mxu0 %v2612
        %2742 = vmatmul.mubr.f32.gmra.mrb[0].mxu0 %v2229
        %v2743 = vpop.f32.mrb[0].mxu0
        %v2744 = vadd.f32 0.0, %v2743
        %v2745 = vpop.f32.mrb[0].mxu0
        %2746 = vmatprep.mubr.f32.mxu0 %v2615
        %2747 = vmatmul.mubr.f32.gmra.mrb[0].mxu0 %v2231
        %v2748 = vpop.f32.mrb[0].mxu0
        %v2749 = vadd.f32 0.0, %v2748
        %v2750 = vpop.f32.mrb[0].mxu0
        %2751 = vmatprep.mubr.f32.mxu0 %v2618
        %2752 = vmatmul.mubr.f32.gmra.mrb[0].mxu0 %v2233
        %v2753 = vpop.f32.mrb[0].mxu0
        %v2754 = vadd.f32 0.0, %v2753
        %v2755 = vpop.f32.mrb[0].mxu0
        %2756 = vmatprep.mubr.f32.mxu0 %v2621
        %2757 = vmatmul.mubr.f32.gmra.mrb[0].mxu0 %v2235
        %v2758 = vpop.f32.mrb[0].mxu0
        %v2759 = vadd.f32 0.0, %v2758
        %v2760 = vpop.f32.mrb[0].mxu0
        %2761 = vdwg.mxu0
        %vm2762 = vcmask 687104
        %2763 = vst.msk [vmem:[#allocation5] sm:$0xff] %vm2762, %v2694
        %2764 = vst.msk [vmem:[#allocation5 + $0x8] sm:$0xff] %vm2762, %v2699
        %2765 = vst.msk [vmem:[#allocation5 + $0x10] sm:$0xff] %vm2762, %v2704
        %2766 = vst.msk [vmem:[#allocation5 + $0x18] sm:$0xff] %vm2762, %v2709
        %2767 = vst.msk [vmem:[#allocation5 + $0x20] sm:$0xff] %vm2762, %v2714
        %2768 = vst.msk [vmem:[#allocation5 + $0x28] sm:$0xff] %vm2762, %v2719
        %2769 = vst.msk [vmem:[#allocation5 + $0x30] sm:$0xff] %vm2762, %v2724
        %2770 = vst.msk [vmem:[#allocation5 + $0x38] sm:$0xff] %vm2762, %v2729
        %2771 = vst.msk [vmem:[#allocation5 + $0x40] sm:$0xff] %vm2762, %v2734
        %2772 = vst.msk [vmem:[#allocation5 + $0x48] sm:$0xff] %vm2762, %v2739
        %2773 = vst.msk [vmem:[#allocation5 + $0x50] sm:$0xff] %vm2762, %v2744
        %2774 = vst.msk [vmem:[#allocation5 + $0x58] sm:$0xff] %vm2762, %v2749
        %2775 = vst.msk [vmem:[#allocation5 + $0x60] sm:$0xff] %vm2762, %v2754
        %2776 = vst.msk [vmem:[#allocation5 + $0x68] sm:$0xff] %vm2762, %v2759
        %v2777 = vld [vmem:[#allocation5] sm:$0xff]
        %v2778 = vld [vmem:[#allocation5 + $0x8] sm:$0xff]
        %v2779 = vld [vmem:[#allocation5 + $0x10] sm:$0xff]
        %v2780 = vld [vmem:[#allocation5 + $0x18] sm:$0xff]
        %v2781 = vld [vmem:[#allocation5 + $0x20] sm:$0xff]
        %v2782 = vld [vmem:[#allocation5 + $0x28] sm:$0xff]
        %v2783 = vld [vmem:[#allocation5 + $0x30] sm:$0xff]
        %v2784 = vld [vmem:[#allocation5 + $0x38] sm:$0xff]
        %v2785 = vld [vmem:[#allocation5 + $0x40] sm:$0xff]
        %v2786 = vld [vmem:[#allocation5 + $0x48] sm:$0xff]
        %v2787 = vld [vmem:[#allocation5 + $0x50] sm:$0xff]
        %v2788 = vld [vmem:[#allocation5 + $0x58] sm:$0xff]
        %v2789 = vld [vmem:[#allocation5 + $0x60] sm:$0xff]
        %v2790 = vld [vmem:[#allocation5 + $0x68] sm:$0xf]
        %2791 = vst.msk [vmem:[#allocation3] sm:$0xff] %vm2762, %v2777
        %2792 = vst.msk [vmem:[#allocation3 + $0x20] sm:$0xff] %vm2762, %v2778
        %2793 = vst.msk [vmem:[#allocation3 + $0x40] sm:$0xff] %vm2762, %v2779
        %2794 = vst.msk [vmem:[#allocation3 + $0x60] sm:$0xff] %vm2762, %v2780
        %2795 = vst.msk [vmem:[#allocation3 + $0x80] sm:$0xff] %vm2762, %v2781
        %2796 = vst.msk [vmem:[#allocation3 + $0xa0] sm:$0xff] %vm2762, %v2782
        %2797 = vst.msk [vmem:[#allocation3 + $0xc0] sm:$0xff] %vm2762, %v2783
        %2798 = vst.msk [vmem:[#allocation3 + $0xe0] sm:$0xff] %vm2762, %v2784
        %2799 = vst.msk [vmem:[#allocation3 + $0x100] sm:$0xff] %vm2762, %v2785
        %2800 = vst.msk [vmem:[#allocation3 + $0x120] sm:$0xff] %vm2762, %v2786
        %2801 = vst.msk [vmem:[#allocation3 + $0x140] sm:$0xff] %vm2762, %v2787
        %2802 = vst.msk [vmem:[#allocation3 + $0x160] sm:$0xff] %vm2762, %v2788
        %2803 = vst.msk [vmem:[#allocation3 + $0x180] sm:$0xff] %vm2762, %v2789
        %vm2804 = vcmask 683008
        %2805 = vst.msk [vmem:[#allocation3 + $0x1a0] sm:$0xf] %vm2804, %v2790
        %v2806 = vld [vmem:[#allocation5 + $0x1] sm:$0xff]
        %v2807 = vld [vmem:[#allocation5 + $0x9] sm:$0xff]
        %v2808 = vld [vmem:[#allocation5 + $0x11] sm:$0xff]
        %v2809 = vld [vmem:[#allocation5 + $0x19] sm:$0xff]
        %v2810 = vld [vmem:[#allocation5 + $0x21] sm:$0xff]
        %v2811 = vld [vmem:[#allocation5 + $0x29] sm:$0xff]
        %v2812 = vld [vmem:[#allocation5 + $0x31] sm:$0xff]
        %v2813 = vld [vmem:[#allocation5 + $0x39] sm:$0xff]
        %v2814 = vld [vmem:[#allocation5 + $0x41] sm:$0xff]
        %v2815 = vld [vmem:[#allocation5 + $0x49] sm:$0xff]
        %v2816 = vld [vmem:[#allocation5 + $0x51] sm:$0xff]
        %v2817 = vld [vmem:[#allocation5 + $0x59] sm:$0xff]
        %v2818 = vld [vmem:[#allocation5 + $0x61] sm:$0xff]
        %v2819 = vld [vmem:[#allocation5 + $0x69] sm:$0xf]
        %2834 = vrot.lane.b32.xlu0 %v2806, 84
        %v2835 = vpop.permute.xlu0 %2834
        %2836 = vrot.lane.b32.xlu0 %v2807, 84
        %v2837 = vpop.permute.xlu0 %2836
        %2838 = vrot.lane.b32.xlu0 %v2808, 84
        %v2839 = vpop.permute.xlu0 %2838
        %2840 = vrot.lane.b32.xlu0 %v2809, 84
        %v2841 = vpop.permute.xlu0 %2840
        %2842 = vrot.lane.b32.xlu0 %v2810, 84
        %v2843 = vpop.permute.xlu0 %2842
        %2844 = vrot.lane.b32.xlu0 %v2811, 84
        %v2845 = vpop.permute.xlu0 %2844
        %2846 = vrot.lane.b32.xlu0 %v2812, 84
        %v2847 = vpop.permute.xlu0 %2846
        %2848 = vrot.lane.b32.xlu0 %v2813, 84
        %v2849 = vpop.permute.xlu0 %2848
        %2850 = vrot.lane.b32.xlu0 %v2814, 84
        %v2851 = vpop.permute.xlu0 %2850
        %2852 = vrot.lane.b32.xlu0 %v2815, 84
        %v2853 = vpop.permute.xlu0 %2852
        %2854 = vrot.lane.b32.xlu0 %v2816, 84
        %v2855 = vpop.permute.xlu0 %2854
        %2856 = vrot.lane.b32.xlu0 %v2817, 84
        %v2857 = vpop.permute.xlu0 %2856
        %2858 = vrot.lane.b32.xlu0 %v2818, 84
        %v2859 = vpop.permute.xlu0 %2858
        %2860 = vrot.lane.b32.xlu0 %v2819, 84
        %v2861 = vpop.permute.xlu0 %2860
        %vm2876 = vcmask 1048224
        %2877 = vst.msk [vmem:[#allocation3] sm:$0xff] %vm2876, %v2835
        %2878 = vst.msk [vmem:[#allocation3 + $0x8] sm:$0xff] %vm2258, %v2835
        %2879 = vst.msk [vmem:[#allocation3 + $0x20] sm:$0xff] %vm2876, %v2837
        %2880 = vst.msk [vmem:[#allocation3 + $0x28] sm:$0xff] %vm2258, %v2837
        %2881 = vst.msk [vmem:[#allocation3 + $0x40] sm:$0xff] %vm2876, %v2839
        %2882 = vst.msk [vmem:[#allocation3 + $0x48] sm:$0xff] %vm2258, %v2839
        %2883 = vst.msk [vmem:[#allocation3 + $0x60] sm:$0xff] %vm2876, %v2841
        %2884 = vst.msk [vmem:[#allocation3 + $0x68] sm:$0xff] %vm2258, %v2841
        %2885 = vst.msk [vmem:[#allocation3 + $0x80] sm:$0xff] %vm2876, %v2843
        %2886 = vst.msk [vmem:[#allocation3 + $0x88] sm:$0xff] %vm2258, %v2843
        %2887 = vst.msk [vmem:[#allocation3 + $0xa0] sm:$0xff] %vm2876, %v2845
        %2888 = vst.msk [vmem:[#allocation3 + $0xa8] sm:$0xff] %vm2258, %v2845
        %2889 = vst.msk [vmem:[#allocation3 + $0xc0] sm:$0xff] %vm2876, %v2847
        %2890 = vst.msk [vmem:[#allocation3 + $0xc8] sm:$0xff] %vm2258, %v2847
        %2891 = vst.msk [vmem:[#allocation3 + $0xe0] sm:$0xff] %vm2876, %v2849
        %2892 = vst.msk [vmem:[#allocation3 + $0xe8] sm:$0xff] %vm2258, %v2849
        %2893 = vst.msk [vmem:[#allocation3 + $0x100] sm:$0xff] %vm2876, %v2851
        %2894 = vst.msk [vmem:[#allocation3 + $0x108] sm:$0xff] %vm2258, %v2851
        %2895 = vst.msk [vmem:[#allocation3 + $0x120] sm:$0xff] %vm2876, %v2853
        %2896 = vst.msk [vmem:[#allocation3 + $0x128] sm:$0xff] %vm2258, %v2853
        %2897 = vst.msk [vmem:[#allocation3 + $0x140] sm:$0xff] %vm2876, %v2855
        %2898 = vst.msk [vmem:[#allocation3 + $0x148] sm:$0xff] %vm2258, %v2855
        %2899 = vst.msk [vmem:[#allocation3 + $0x160] sm:$0xff] %vm2876, %v2857
        %2900 = vst.msk [vmem:[#allocation3 + $0x168] sm:$0xff] %vm2258, %v2857
        %2901 = vst.msk [vmem:[#allocation3 + $0x180] sm:$0xff] %vm2876, %v2859
        %2902 = vst.msk [vmem:[#allocation3 + $0x188] sm:$0xff] %vm2258, %v2859
        %vm2903 = vcmask 1044128
        %2904 = vst.msk [vmem:[#allocation3 + $0x1a0] sm:$0xf] %vm2903, %v2861
        %vm2905 = vcmask 322560
        %2906 = vst.msk [vmem:[#allocation3 + $0x1a8] sm:$0xf] %vm2905, %v2861
        %v2907 = vld [vmem:[#allocation5 + $0x2] sm:$0xff]
        %v2908 = vld [vmem:[#allocation5 + $0xa] sm:$0xff]
        %v2909 = vld [vmem:[#allocation5 + $0x12] sm:$0xff]
        %v2910 = vld [vmem:[#allocation5 + $0x1a] sm:$0xff]
        %v2911 = vld [vmem:[#allocation5 + $0x22] sm:$0xff]
        %v2912 = vld [vmem:[#allocation5 + $0x2a] sm:$0xff]
        %v2913 = vld [vmem:[#allocation5 + $0x32] sm:$0xff]
        %v2914 = vld [vmem:[#allocation5 + $0x3a] sm:$0xff]
        %v2915 = vld [vmem:[#allocation5 + $0x42] sm:$0xff]
        %v2916 = vld [vmem:[#allocation5 + $0x4a] sm:$0xff]
        %v2917 = vld [vmem:[#allocation5 + $0x52] sm:$0xff]
        %v2918 = vld [vmem:[#allocation5 + $0x5a] sm:$0xff]
        %v2919 = vld [vmem:[#allocation5 + $0x62] sm:$0xff]
        %v2920 = vld [vmem:[#allocation5 + $0x6a] sm:$0xf]
        %2935 = vrot.lane.b32.xlu0 %v2907, 40
        %v2936 = vpop.permute.xlu0 %2935
        %2937 = vrot.lane.b32.xlu0 %v2908, 40
        %v2938 = vpop.permute.xlu0 %2937
        %2939 = vrot.lane.b32.xlu0 %v2909, 40
        %v2940 = vpop.permute.xlu0 %2939
        %2941 = vrot.lane.b32.xlu0 %v2910, 40
        %v2942 = vpop.permute.xlu0 %2941
        %2943 = vrot.lane.b32.xlu0 %v2911, 40
        %v2944 = vpop.permute.xlu0 %2943
        %2945 = vrot.lane.b32.xlu0 %v2912, 40
        %v2946 = vpop.permute.xlu0 %2945
        %2947 = vrot.lane.b32.xlu0 %v2913, 40
        %v2948 = vpop.permute.xlu0 %2947
        %2949 = vrot.lane.b32.xlu0 %v2914, 40
        %v2950 = vpop.permute.xlu0 %2949
        %2951 = vrot.lane.b32.xlu0 %v2915, 40
        %v2952 = vpop.permute.xlu0 %2951
        %2953 = vrot.lane.b32.xlu0 %v2916, 40
        %v2954 = vpop.permute.xlu0 %2953
        %2955 = vrot.lane.b32.xlu0 %v2917, 40
        %v2956 = vpop.permute.xlu0 %2955
        %2957 = vrot.lane.b32.xlu0 %v2918, 40
        %v2958 = vpop.permute.xlu0 %2957
        %2959 = vrot.lane.b32.xlu0 %v2919, 40
        %v2960 = vpop.permute.xlu0 %2959
        %2961 = vrot.lane.b32.xlu0 %v2920, 40
        %v2962 = vpop.permute.xlu0 %2961
        %vm2977 = vcmask 1015104
        %2978 = vst.msk [vmem:[#allocation3 + $0x8] sm:$0xff] %vm2977, %v2936
        %2979 = vst.msk [vmem:[#allocation3 + $0x28] sm:$0xff] %vm2977, %v2938
        %2980 = vst.msk [vmem:[#allocation3 + $0x48] sm:$0xff] %vm2977, %v2940
        %2981 = vst.msk [vmem:[#allocation3 + $0x68] sm:$0xff] %vm2977, %v2942
        %2982 = vst.msk [vmem:[#allocation3 + $0x88] sm:$0xff] %vm2977, %v2944
        %2983 = vst.msk [vmem:[#allocation3 + $0xa8] sm:$0xff] %vm2977, %v2946
        %2984 = vst.msk [vmem:[#allocation3 + $0xc8] sm:$0xff] %vm2977, %v2948
        %2985 = vst.msk [vmem:[#allocation3 + $0xe8] sm:$0xff] %vm2977, %v2950
        %2986 = vst.msk [vmem:[#allocation3 + $0x108] sm:$0xff] %vm2977, %v2952
        %2987 = vst.msk [vmem:[#allocation3 + $0x128] sm:$0xff] %vm2977, %v2954
        %2988 = vst.msk [vmem:[#allocation3 + $0x148] sm:$0xff] %vm2977, %v2956
        %2989 = vst.msk [vmem:[#allocation3 + $0x168] sm:$0xff] %vm2977, %v2958
        %2990 = vst.msk [vmem:[#allocation3 + $0x188] sm:$0xff] %vm2977, %v2960
        %vm2991 = vcmask 1011008
        %2992 = vst.msk [vmem:[#allocation3 + $0x1a8] sm:$0xf] %vm2991, %v2962
        %v2993 = vld [vmem:[#allocation5 + $0x3] sm:$0xff]
        %v2994 = vld [vmem:[#allocation5 + $0xb] sm:$0xff]
        %v2995 = vld [vmem:[#allocation5 + $0x13] sm:$0xff]
        %v2996 = vld [vmem:[#allocation5 + $0x1b] sm:$0xff]
        %v2997 = vld [vmem:[#allocation5 + $0x23] sm:$0xff]
        %v2998 = vld [vmem:[#allocation5 + $0x2b] sm:$0xff]
        %v2999 = vld [vmem:[#allocation5 + $0x33] sm:$0xff]
        %v3000 = vld [vmem:[#allocation5 + $0x3b] sm:$0xff]
        %v3001 = vld [vmem:[#allocation5 + $0x43] sm:$0xff]
        %v3002 = vld [vmem:[#allocation5 + $0x4b] sm:$0xff]
        %v3003 = vld [vmem:[#allocation5 + $0x53] sm:$0xff]
        %v3004 = vld [vmem:[#allocation5 + $0x5b] sm:$0xff]
        %v3005 = vld [vmem:[#allocation5 + $0x63] sm:$0xff]
        %v3006 = vld [vmem:[#allocation5 + $0x6b] sm:$0xf]
        %3021 = vrot.lane.b32.xlu0 %v2993, 124
        %v3022 = vpop.permute.xlu0 %3021
        %3023 = vrot.lane.b32.xlu0 %v2994, 124
        %v3024 = vpop.permute.xlu0 %3023
        %3025 = vrot.lane.b32.xlu0 %v2995, 124
        %v3026 = vpop.permute.xlu0 %3025
        %3027 = vrot.lane.b32.xlu0 %v2996, 124
        %v3028 = vpop.permute.xlu0 %3027
        %3029 = vrot.lane.b32.xlu0 %v2997, 124
        %v3030 = vpop.permute.xlu0 %3029
        %3031 = vrot.lane.b32.xlu0 %v2998, 124
        %v3032 = vpop.permute.xlu0 %3031
        %3033 = vrot.lane.b32.xlu0 %v2999, 124
        %v3034 = vpop.permute.xlu0 %3033
        %3035 = vrot.lane.b32.xlu0 %v3000, 124
        %v3036 = vpop.permute.xlu0 %3035
        %3037 = vrot.lane.b32.xlu0 %v3001, 124
        %v3038 = vpop.permute.xlu0 %3037
        %3039 = vrot.lane.b32.xlu0 %v3002, 124
        %v3040 = vpop.permute.xlu0 %3039
        %3041 = vrot.lane.b32.xlu0 %v3003, 124
        %v3042 = vpop.permute.xlu0 %3041
        %3043 = vrot.lane.b32.xlu0 %v3004, 124
        %v3044 = vpop.permute.xlu0 %3043
        %3045 = vrot.lane.b32.xlu0 %v3005, 124
        %v3046 = vpop.permute.xlu0 %3045
        %3047 = vrot.lane.b32.xlu0 %v3006, 124
        %v3048 = vpop.permute.xlu0 %3047
        %vm3063 = vcmask 1048544
        %3064 = vst.msk [vmem:[#allocation3 + $0x8] sm:$0xff] %vm3063, %v3022
        %vm3065 = vcmask 654336
        %3066 = vst.msk [vmem:[#allocation3 + $0x10] sm:$0xff] %vm3065, %v3022
        %3067 = vst.msk [vmem:[#allocation3 + $0x28] sm:$0xff] %vm3063, %v3024
        %3068 = vst.msk [vmem:[#allocation3 + $0x30] sm:$0xff] %vm3065, %v3024
        %3069 = vst.msk [vmem:[#allocation3 + $0x48] sm:$0xff] %vm3063, %v3026
        %3070 = vst.msk [vmem:[#allocation3 + $0x50] sm:$0xff] %vm3065, %v3026
        %3071 = vst.msk [vmem:[#allocation3 + $0x68] sm:$0xff] %vm3063, %v3028
        %3072 = vst.msk [vmem:[#allocation3 + $0x70] sm:$0xff] %vm3065, %v3028
        %3073 = vst.msk [vmem:[#allocation3 + $0x88] sm:$0xff] %vm3063, %v3030
        %3074 = vst.msk [vmem:[#allocation3 + $0x90] sm:$0xff] %vm3065, %v3030
        %3075 = vst.msk [vmem:[#allocation3 + $0xa8] sm:$0xff] %vm3063, %v3032
        %3076 = vst.msk [vmem:[#allocation3 + $0xb0] sm:$0xff] %vm3065, %v3032
        %3077 = vst.msk [vmem:[#allocation3 + $0xc8] sm:$0xff] %vm3063, %v3034
        %3078 = vst.msk [vmem:[#allocation3 + $0xd0] sm:$0xff] %vm3065, %v3034
        %3079 = vst.msk [vmem:[#allocation3 + $0xe8] sm:$0xff] %vm3063, %v3036
        %3080 = vst.msk [vmem:[#allocation3 + $0xf0] sm:$0xff] %vm3065, %v3036
        %3081 = vst.msk [vmem:[#allocation3 + $0x108] sm:$0xff] %vm3063, %v3038
        %3082 = vst.msk [vmem:[#allocation3 + $0x110] sm:$0xff] %vm3065, %v3038
        %3083 = vst.msk [vmem:[#allocation3 + $0x128] sm:$0xff] %vm3063, %v3040
        %3084 = vst.msk [vmem:[#allocation3 + $0x130] sm:$0xff] %vm3065, %v3040
        %3085 = vst.msk [vmem:[#allocation3 + $0x148] sm:$0xff] %vm3063, %v3042
        %3086 = vst.msk [vmem:[#allocation3 + $0x150] sm:$0xff] %vm3065, %v3042
        %3087 = vst.msk [vmem:[#allocation3 + $0x168] sm:$0xff] %vm3063, %v3044
        %3088 = vst.msk [vmem:[#allocation3 + $0x170] sm:$0xff] %vm3065, %v3044
        %3089 = vst.msk [vmem:[#allocation3 + $0x188] sm:$0xff] %vm3063, %v3046
        %3090 = vst.msk [vmem:[#allocation3 + $0x190] sm:$0xff] %vm3065, %v3046
        %vm3091 = vcmask 1044448
        %3092 = vst.msk [vmem:[#allocation3 + $0x1a8] sm:$0xf] %vm3091, %v3048
        %vm3093 = vcmask 650240
        %3094 = vst.msk [vmem:[#allocation3 + $0x1b0] sm:$0xf] %vm3093, %v3048
        %v3095 = vld [vmem:[#allocation5 + $0x4] sm:$0xff]
        %v3096 = vld [vmem:[#allocation5 + $0xc] sm:$0xff]
        %v3097 = vld [vmem:[#allocation5 + $0x14] sm:$0xff]
        %v3098 = vld [vmem:[#allocation5 + $0x1c] sm:$0xff]
        %v3099 = vld [vmem:[#allocation5 + $0x24] sm:$0xff]
        %v3100 = vld [vmem:[#allocation5 + $0x2c] sm:$0xff]
        %v3101 = vld [vmem:[#allocation5 + $0x34] sm:$0xff]
        %v3102 = vld [vmem:[#allocation5 + $0x3c] sm:$0xff]
        %v3103 = vld [vmem:[#allocation5 + $0x44] sm:$0xff]
        %v3104 = vld [vmem:[#allocation5 + $0x4c] sm:$0xff]
        %v3105 = vld [vmem:[#allocation5 + $0x54] sm:$0xff]
        %v3106 = vld [vmem:[#allocation5 + $0x5c] sm:$0xff]
        %v3107 = vld [vmem:[#allocation5 + $0x64] sm:$0xff]
        %v3108 = vld [vmem:[#allocation5 + $0x6c] sm:$0xf]
        %3123 = vrot.lane.b32.xlu0 %v3095, 80
        %v3124 = vpop.permute.xlu0 %3123
        %3125 = vrot.lane.b32.xlu0 %v3096, 80
        %v3126 = vpop.permute.xlu0 %3125
        %3127 = vrot.lane.b32.xlu0 %v3097, 80
        %v3128 = vpop.permute.xlu0 %3127
        %3129 = vrot.lane.b32.xlu0 %v3098, 80
        %v3130 = vpop.permute.xlu0 %3129
        %3131 = vrot.lane.b32.xlu0 %v3099, 80
        %v3132 = vpop.permute.xlu0 %3131
        %3133 = vrot.lane.b32.xlu0 %v3100, 80
        %v3134 = vpop.permute.xlu0 %3133
        %3135 = vrot.lane.b32.xlu0 %v3101, 80
        %v3136 = vpop.permute.xlu0 %3135
        %3137 = vrot.lane.b32.xlu0 %v3102, 80
        %v3138 = vpop.permute.xlu0 %3137
        %3139 = vrot.lane.b32.xlu0 %v3103, 80
        %v3140 = vpop.permute.xlu0 %3139
        %3141 = vrot.lane.b32.xlu0 %v3104, 80
        %v3142 = vpop.permute.xlu0 %3141
        %3143 = vrot.lane.b32.xlu0 %v3105, 80
        %v3144 = vpop.permute.xlu0 %3143
        %3145 = vrot.lane.b32.xlu0 %v3106, 80
        %v3146 = vpop.permute.xlu0 %3145
        %3147 = vrot.lane.b32.xlu0 %v3107, 80
        %v3148 = vpop.permute.xlu0 %3147
        %3149 = vrot.lane.b32.xlu0 %v3108, 80
        %v3150 = vpop.permute.xlu0 %3149
        %vm3165 = vcmask 1048192
        %3166 = vst.msk [vmem:[#allocation3 + $0x10] sm:$0xff] %vm3165, %v3124
        %vm3167 = vcmask 293888
        %3168 = vst.msk [vmem:[#allocation3 + $0x18] sm:$0xff] %vm3167, %v3124
        %3169 = vst.msk [vmem:[#allocation3 + $0x30] sm:$0xff] %vm3165, %v3126
        %3170 = vst.msk [vmem:[#allocation3 + $0x38] sm:$0xff] %vm3167, %v3126
        %3171 = vst.msk [vmem:[#allocation3 + $0x50] sm:$0xff] %vm3165, %v3128
        %3172 = vst.msk [vmem:[#allocation3 + $0x58] sm:$0xff] %vm3167, %v3128
        %3173 = vst.msk [vmem:[#allocation3 + $0x70] sm:$0xff] %vm3165, %v3130
        %3174 = vst.msk [vmem:[#allocation3 + $0x78] sm:$0xff] %vm3167, %v3130
        %3175 = vst.msk [vmem:[#allocation3 + $0x90] sm:$0xff] %vm3165, %v3132
        %3176 = vst.msk [vmem:[#allocation3 + $0x98] sm:$0xff] %vm3167, %v3132
        %3177 = vst.msk [vmem:[#allocation3 + $0xb0] sm:$0xff] %vm3165, %v3134
        %3178 = vst.msk [vmem:[#allocation3 + $0xb8] sm:$0xff] %vm3167, %v3134
        %3179 = vst.msk [vmem:[#allocation3 + $0xd0] sm:$0xff] %vm3165, %v3136
        %3180 = vst.msk [vmem:[#allocation3 + $0xd8] sm:$0xff] %vm3167, %v3136
        %3181 = vst.msk [vmem:[#allocation3 + $0xf0] sm:$0xff] %vm3165, %v3138
        %3182 = vst.msk [vmem:[#allocation3 + $0xf8] sm:$0xff] %vm3167, %v3138
        %3183 = vst.msk [vmem:[#allocation3 + $0x110] sm:$0xff] %vm3165, %v3140
        %3184 = vst.msk [vmem:[#allocation3 + $0x118] sm:$0xff] %vm3167, %v3140
        %3185 = vst.msk [vmem:[#allocation3 + $0x130] sm:$0xff] %vm3165, %v3142
        %3186 = vst.msk [vmem:[#allocation3 + $0x138] sm:$0xff] %vm3167, %v3142
        %3187 = vst.msk [vmem:[#allocation3 + $0x150] sm:$0xff] %vm3165, %v3144
        %3188 = vst.msk [vmem:[#allocation3 + $0x158] sm:$0xff] %vm3167, %v3144
        %3189 = vst.msk [vmem:[#allocation3 + $0x170] sm:$0xff] %vm3165, %v3146
        %3190 = vst.msk [vmem:[#allocation3 + $0x178] sm:$0xff] %vm3167, %v3146
        %3191 = vst.msk [vmem:[#allocation3 + $0x190] sm:$0xff] %vm3165, %v3148
        %3192 = vst.msk [vmem:[#allocation3 + $0x198] sm:$0xff] %vm3167, %v3148
        %vm3193 = vcmask 1044096
        %3194 = vst.msk [vmem:[#allocation3 + $0x1b0] sm:$0xf] %vm3193, %v3150
        %vm3195 = vcmask 289792
        %3196 = vst.msk [vmem:[#allocation3 + $0x1b8] sm:$0xf] %vm3195, %v3150
        %v3197 = vld [vmem:[#allocation3] sm:$0xff]
        %v3198 = vld [vmem:[#allocation3 + $0x8] sm:$0xff]
        %v3199 = vld [vmem:[#allocation3 + $0x10] sm:$0xff]
        %v3200 = vld [vmem:[#allocation3 + $0x18] sm:$0xff]
        %v3201 = vld [vmem:[#allocation3 + $0x20] sm:$0xff]
        %v3202 = vld [vmem:[#allocation3 + $0x28] sm:$0xff]
        %v3203 = vld [vmem:[#allocation3 + $0x30] sm:$0xff]
        %v3204 = vld [vmem:[#allocation3 + $0x38] sm:$0xff]
        %v3205 = vld [vmem:[#allocation3 + $0x40] sm:$0xff]
        %v3206 = vld [vmem:[#allocation3 + $0x48] sm:$0xff]
        %v3207 = vld [vmem:[#allocation3 + $0x50] sm:$0xff]
        %v3208 = vld [vmem:[#allocation3 + $0x58] sm:$0xff]
        %v3209 = vld [vmem:[#allocation3 + $0x60] sm:$0xff]
        %v3210 = vld [vmem:[#allocation3 + $0x68] sm:$0xff]
        %v3211 = vld [vmem:[#allocation3 + $0x70] sm:$0xff]
        %v3212 = vld [vmem:[#allocation3 + $0x78] sm:$0xff]
        %v3213 = vld [vmem:[#allocation3 + $0x80] sm:$0xff]
        %v3214 = vld [vmem:[#allocation3 + $0x88] sm:$0xff]
        %v3215 = vld [vmem:[#allocation3 + $0x90] sm:$0xff]
        %v3216 = vld [vmem:[#allocation3 + $0x98] sm:$0xff]
        %v3217 = vld [vmem:[#allocation3 + $0xa0] sm:$0xff]
        %v3218 = vld [vmem:[#allocation3 + $0xa8] sm:$0xff]
        %v3219 = vld [vmem:[#allocation3 + $0xb0] sm:$0xff]
        %v3220 = vld [vmem:[#allocation3 + $0xb8] sm:$0xff]
        %v3221 = vld [vmem:[#allocation3 + $0xc0] sm:$0xff]
        %v3222 = vld [vmem:[#allocation3 + $0xc8] sm:$0xff]
        %v3223 = vld [vmem:[#allocation3 + $0xd0] sm:$0xff]
        %v3224 = vld [vmem:[#allocation3 + $0xd8] sm:$0xff]
        %v3225 = vld [vmem:[#allocation3 + $0xe0] sm:$0xff]
        %v3226 = vld [vmem:[#allocation3 + $0xe8] sm:$0xff]
        %v3227 = vld [vmem:[#allocation3 + $0xf0] sm:$0xff]
        %v3228 = vld [vmem:[#allocation3 + $0xf8] sm:$0xff]
        %v3229 = vld [vmem:[#allocation3 + $0x100] sm:$0xff]
        %v3230 = vld [vmem:[#allocation3 + $0x108] sm:$0xff]
        %v3231 = vld [vmem:[#allocation3 + $0x110] sm:$0xff]
        %v3232 = vld [vmem:[#allocation3 + $0x118] sm:$0xff]
        %v3233 = vld [vmem:[#allocation3 + $0x120] sm:$0xff]
        %v3234 = vld [vmem:[#allocation3 + $0x128] sm:$0xff]
        %v3235 = vld [vmem:[#allocation3 + $0x130] sm:$0xff]
        %v3236 = vld [vmem:[#allocation3 + $0x138] sm:$0xff]
        %v3237 = vld [vmem:[#allocation3 + $0x140] sm:$0xff]
        %v3238 = vld [vmem:[#allocation3 + $0x148] sm:$0xff]
        %v3239 = vld [vmem:[#allocation3 + $0x150] sm:$0xff]
        %v3240 = vld [vmem:[#allocation3 + $0x158] sm:$0xff]
        %v3241 = vld [vmem:[#allocation3 + $0x160] sm:$0xff]
        %v3242 = vld [vmem:[#allocation3 + $0x168] sm:$0xff]
        %v3243 = vld [vmem:[#allocation3 + $0x170] sm:$0xff]
        %v3244 = vld [vmem:[#allocation3 + $0x178] sm:$0xff]
        %v3245 = vld [vmem:[#allocation3 + $0x180] sm:$0xff]
        %v3246 = vld [vmem:[#allocation3 + $0x188] sm:$0xff]
        %v3247 = vld [vmem:[#allocation3 + $0x190] sm:$0xff]
        %v3248 = vld [vmem:[#allocation3 + $0x198] sm:$0xff]
        %v3249 = vld [vmem:[#allocation3 + $0x1a0] sm:$0xf]
        %v3250 = vld [vmem:[#allocation3 + $0x1a8] sm:$0xf]
        %v3251 = vld [vmem:[#allocation3 + $0x1b0] sm:$0xf]
        %v3252 = vld [vmem:[#allocation3 + $0x1b8] sm:$0xf]
        %v3253 = vld [vmem:[%s5] sm:$0xff]
        %v3254 = vld [vmem:[%s5 + $0x8] sm:$0xff]
        %v3255 = vld [vmem:[%s5 + $0x10] sm:$0xff]
        %v3256 = vld [vmem:[%s5 + $0x18] sm:$0xff]
        %v3257 = vld [vmem:[%s5 + $0x20] sm:$0xff]
        %v3258 = vld [vmem:[%s5 + $0x28] sm:$0xff]
        %v3259 = vld [vmem:[%s5 + $0x30] sm:$0xff]
        %v3260 = vld [vmem:[%s5 + $0x38] sm:$0xff]
        %v3261 = vld [vmem:[%s5 + $0x40] sm:$0xff]
        %v3262 = vld [vmem:[%s5 + $0x48] sm:$0xff]
        %v3263 = vld [vmem:[%s5 + $0x50] sm:$0xff]
        %v3264 = vld [vmem:[%s5 + $0x58] sm:$0xff]
        %v3265 = vld [vmem:[%s5 + $0x60] sm:$0xff]
        %v3266 = vld [vmem:[%s5 + $0x68] sm:$0xff]
        %v3267 = vld [vmem:[%s5 + $0x70] sm:$0xff]
        %v3268 = vld [vmem:[%s5 + $0x78] sm:$0xff]
        %v3269 = vld [vmem:[%s5 + $0x80] sm:$0xff]
        %v3270 = vld [vmem:[%s5 + $0x88] sm:$0xff]
        %v3271 = vld [vmem:[%s5 + $0x90] sm:$0xff]
        %v3272 = vld [vmem:[%s5 + $0x98] sm:$0xff]
        %v3273 = vld [vmem:[%s5 + $0xa0] sm:$0xff]
        %v3274 = vld [vmem:[%s5 + $0xa8] sm:$0xff]
        %v3275 = vld [vmem:[%s5 + $0xb0] sm:$0xff]
        %v3276 = vld [vmem:[%s5 + $0xb8] sm:$0xff]
        %v3277 = vld [vmem:[%s5 + $0xc0] sm:$0xff]
        %v3278 = vld [vmem:[%s5 + $0xc8] sm:$0xff]
        %v3279 = vld [vmem:[%s5 + $0xd0] sm:$0xff]
        %v3280 = vld [vmem:[%s5 + $0xd8] sm:$0xff]
        %v3281 = vld [vmem:[%s5 + $0xe0] sm:$0xff]
        %v3282 = vld [vmem:[%s5 + $0xe8] sm:$0xff]
        %v3283 = vld [vmem:[%s5 + $0xf0] sm:$0xff]
        %v3284 = vld [vmem:[%s5 + $0xf8] sm:$0xff]
        %v3285 = vld [vmem:[%s5 + $0x100] sm:$0xff]
        %v3286 = vld [vmem:[%s5 + $0x108] sm:$0xff]
        %v3287 = vld [vmem:[%s5 + $0x110] sm:$0xff]
        %v3288 = vld [vmem:[%s5 + $0x118] sm:$0xff]
        %v3289 = vld [vmem:[%s5 + $0x120] sm:$0xff]
        %v3290 = vld [vmem:[%s5 + $0x128] sm:$0xff]
        %v3291 = vld [vmem:[%s5 + $0x130] sm:$0xff]
        %v3292 = vld [vmem:[%s5 + $0x138] sm:$0xff]
        %v3293 = vld [vmem:[%s5 + $0x140] sm:$0xff]
        %v3294 = vld [vmem:[%s5 + $0x148] sm:$0xff]
        %v3295 = vld [vmem:[%s5 + $0x150] sm:$0xff]
        %v3296 = vld [vmem:[%s5 + $0x158] sm:$0xff]
        %v3297 = vld [vmem:[%s5 + $0x160] sm:$0xff]
        %v3298 = vld [vmem:[%s5 + $0x168] sm:$0xff]
        %v3299 = vld [vmem:[%s5 + $0x170] sm:$0xff]
        %v3300 = vld [vmem:[%s5 + $0x178] sm:$0xff]
        %v3301 = vld [vmem:[%s5 + $0x180] sm:$0xff]
        %v3302 = vld [vmem:[%s5 + $0x188] sm:$0xff]
        %v3303 = vld [vmem:[%s5 + $0x190] sm:$0xff]
        %v3304 = vld [vmem:[%s5 + $0x198] sm:$0xff]
        %v3305 = vld [vmem:[%s5 + $0x1a0] sm:$0xff]
        %v3306 = vld [vmem:[%s5 + $0x1a8] sm:$0xff]
        %v3307 = vld [vmem:[%s5 + $0x1b0] sm:$0xff]
        %v3308 = vld [vmem:[%s5 + $0x1b8] sm:$0xff]
        %v3309 = vld [vmem:[%s5 + $0x1c0] sm:$0xff]
        %v3310 = vld [vmem:[%s5 + $0x1c8] sm:$0xff]
        %v3311 = vld [vmem:[%s5 + $0x1d0] sm:$0xff]
        %v3312 = vld [vmem:[%s5 + $0x1d8] sm:$0xff]
        %v3313 = vld [vmem:[%s5 + $0x1e0] sm:$0xff]
        %v3314 = vld [vmem:[%s5 + $0x1e8] sm:$0xff]
        %v3315 = vld [vmem:[%s5 + $0x1f0] sm:$0xff]
        %v3316 = vld [vmem:[%s5 + $0x1f8] sm:$0xff]
        %v3317 = vld [vmem:[%s5 + $0x200] sm:$0xff]
        %v3318 = vld [vmem:[%s5 + $0x208] sm:$0xff]
        %v3319 = vld [vmem:[%s5 + $0x210] sm:$0xff]
        %v3320 = vld [vmem:[%s5 + $0x218] sm:$0xff]
        %v3321 = vld [vmem:[%s5 + $0x220] sm:$0xff]
        %v3322 = vld [vmem:[%s5 + $0x228] sm:$0xff]
        %v3323 = vld [vmem:[%s5 + $0x230] sm:$0xff]
        %v3324 = vld [vmem:[%s5 + $0x238] sm:$0xff]
        %v3325 = vld [vmem:[%s5 + $0x240] sm:$0xff]
        %v3326 = vld [vmem:[%s5 + $0x248] sm:$0xff]
        %v3327 = vld [vmem:[%s5 + $0x250] sm:$0xff]
        %v3328 = vld [vmem:[%s5 + $0x258] sm:$0xff]
        %v3329 = vld [vmem:[%s5 + $0x260] sm:$0xff]
        %v3330 = vld [vmem:[%s5 + $0x268] sm:$0xff]
        %v3331 = vld [vmem:[%s5 + $0x270] sm:$0xff]
        %v3332 = vld [vmem:[%s5 + $0x278] sm:$0xff]
        %v3333 = vld [vmem:[%s5 + $0x280] sm:$0xff]
        %v3334 = vld [vmem:[%s5 + $0x288] sm:$0xff]
        %v3335 = vld [vmem:[%s5 + $0x290] sm:$0xff]
        %v3336 = vld [vmem:[%s5 + $0x298] sm:$0xff]
        %v3337 = vld [vmem:[%s5 + $0x2a0] sm:$0xff]
        %v3338 = vld [vmem:[%s5 + $0x2a8] sm:$0xff]
        %v3339 = vld [vmem:[%s5 + $0x2b0] sm:$0xff]
        %v3340 = vld [vmem:[%s5 + $0x2b8] sm:$0xff]
        %v3341 = vld [vmem:[%s5 + $0x2c0] sm:$0xff]
        %v3342 = vld [vmem:[%s5 + $0x2c8] sm:$0xff]
        %v3343 = vld [vmem:[%s5 + $0x2d0] sm:$0xff]
        %v3344 = vld [vmem:[%s5 + $0x2d8] sm:$0xff]
        %v3345 = vld [vmem:[%s5 + $0x2e0] sm:$0xff]
        %v3346 = vld [vmem:[%s5 + $0x2e8] sm:$0xff]
        %v3347 = vld [vmem:[%s5 + $0x2f0] sm:$0xff]
        %v3348 = vld [vmem:[%s5 + $0x2f8] sm:$0xff]
        %v3349 = vld [vmem:[%s5 + $0x300] sm:$0xff]
        %v3350 = vld [vmem:[%s5 + $0x308] sm:$0xff]
        %v3351 = vld [vmem:[%s5 + $0x310] sm:$0xff]
        %v3352 = vld [vmem:[%s5 + $0x318] sm:$0xff]
        %v3353 = vld [vmem:[%s5 + $0x320] sm:$0xff]
        %v3354 = vld [vmem:[%s5 + $0x328] sm:$0xff]
        %v3355 = vld [vmem:[%s5 + $0x330] sm:$0xff]
        %v3356 = vld [vmem:[%s5 + $0x338] sm:$0xff]
        %v3357 = vld [vmem:[%s5 + $0x340] sm:$0xf]
        %v3358 = vld [vmem:[%s5 + $0x348] sm:$0xf]
        %v3359 = vld [vmem:[%s6] sm:$0x3]
        %v3361 = vlaneseq
        %v3362 = vshrl.u32 %v3361, 7
        %v3363 = vsub.s32 0, %v3362
        %v3364 = vrot.slane %v3359, %v3363
        %v3365 = vlaneseq
        %v3366 = vshrl.u32 %v3365, 7
        %v3367 = vsub.s32 1, %v3366
        %v3368 = vrot.slane %v3359, %v3367
        %v3372 = vsel %vm3167, %v3200, 0
        %v3375 = vsel %vm3167, %v3204, 0
        %v3378 = vsel %vm3167, %v3208, 0
        %v3381 = vsel %vm3167, %v3212, 0
        %v3384 = vsel %vm3167, %v3216, 0
        %v3387 = vsel %vm3167, %v3220, 0
        %v3390 = vsel %vm3167, %v3224, 0
        %v3393 = vsel %vm3167, %v3228, 0
        %v3396 = vsel %vm3167, %v3232, 0
        %v3399 = vsel %vm3167, %v3236, 0
        %v3402 = vsel %vm3167, %v3240, 0
        %v3405 = vsel %vm3167, %v3244, 0
        %v3408 = vsel %vm3167, %v3248, 0
        %v3411 = vsel %vm3167, %v3252, 0
        %v3414 = vsel %vm2623, %v3357, 0
        %v3417 = vsel %vm2623, %v3358, 0
        %3419 = vmatprep.subr.mxu0 %v3254
        %3420 = vmatpush1.msra.mxu0 %v3253
        %3421 = vmatprep.subr.mxu0 %v3256
        %3422 = vmatpush1.msra.mxu0 %v3255
        %3423 = vmatprep.subr.mxu0 %v3258
        %3424 = vmatpush1.msra.mxu0 %v3257
        %3425 = vmatprep.subr.mxu0 %v3260
        %3426 = vmatpush1.msra.mxu0 %v3259
        %3427 = vmatprep.subr.mxu0 %v3262
        %3428 = vmatpush1.msra.mxu0 %v3261
        %3429 = vmatprep.subr.mxu0 %v3264
        %3430 = vmatpush1.msra.mxu0 %v3263
        %3431 = vmatprep.subr.mxu0 %v3266
        %3432 = vmatpush1.msra.mxu0 %v3265
        %3433 = vmatprep.subr.mxu0 %v3268
        %3434 = vmatpush1.msra.mxu0 %v3267
        %3435 = vmatprep.subr.mxu0 %v3270
        %3436 = vmatpush1.msra.mxu0 %v3269
        %3437 = vmatprep.subr.mxu0 %v3272
        %3438 = vmatpush1.msra.mxu0 %v3271
        %3439 = vmatprep.subr.mxu0 %v3274
        %3440 = vmatpush1.msra.mxu0 %v3273
        %3441 = vmatprep.subr.mxu0 %v3276
        %3442 = vmatpush1.msra.mxu0 %v3275
        %3443 = vmatprep.subr.mxu0 %v3278
        %3444 = vmatpush1.msra.mxu0 %v3277
        %3445 = vmatprep.subr.mxu0 %v3280
        %3446 = vmatpush1.msra.mxu0 %v3279
        %3447 = vmatprep.subr.mxu0 %v3282
        %3448 = vmatpush1.msra.mxu0 %v3281
        %3449 = vmatprep.subr.mxu0 %v3284
        %3450 = vmatpush1.msra.mxu0 %v3283
        %3451 = vmatprep.subr.mxu0 %v3286
        %3452 = vmatpush1.msra.mxu0 %v3285
        %3453 = vmatprep.subr.mxu0 %v3288
        %3454 = vmatpush1.msra.mxu0 %v3287
        %3455 = vmatprep.subr.mxu0 %v3290
        %3456 = vmatpush1.msra.mxu0 %v3289
        %3457 = vmatprep.subr.mxu0 %v3292
        %3458 = vmatpush1.msra.mxu0 %v3291
        %3459 = vmatprep.subr.mxu0 %v3294
        %3460 = vmatpush1.msra.mxu0 %v3293
        %3461 = vmatprep.subr.mxu0 %v3296
        %3462 = vmatpush1.msra.mxu0 %v3295
        %3463 = vmatprep.subr.mxu0 %v3298
        %3464 = vmatpush1.msra.mxu0 %v3297
        %3465 = vmatprep.subr.mxu0 %v3300
        %3466 = vmatpush1.msra.mxu0 %v3299
        %3467 = vmatprep.subr.mxu0 %v3302
        %3468 = vmatpush1.msra.mxu0 %v3301
        %3469 = vmatprep.subr.mxu0 %v3304
        %3470 = vmatpush1.msra.mxu0 %v3303
        %3471 = vmatprep.subr.mxu0 %v3306
        %3472 = vmatpush1.msra.mxu0 %v3305
        %3473 = vmatprep.subr.mxu0 %v3308
        %3474 = vmatpush1.msra.mxu0 %v3307
        %3475 = vmatprep.subr.mxu0 %v3310
        %3476 = vmatpush1.msra.mxu0 %v3309
        %3477 = vmatprep.subr.mxu0 %v3312
        %3478 = vmatpush1.msra.mxu0 %v3311
        %3479 = vmatprep.subr.mxu0 %v3314
        %3480 = vmatpush1.msra.mxu0 %v3313
        %3481 = vmatprep.subr.mxu0 %v3316
        %3482 = vmatpush1.msra.mxu0 %v3315
        %3483 = vmatprep.mubr.f32.mxu0 %v3198
        %3484 = vmatmul.mubr.f32.gmra.mrb[0].mxu0 %v3197
        %v3485 = vpop.f32.mrb[0].mxu0
        %v3486 = vadd.f32 %v3364, %v3485
        %v3487 = vpop.f32.mrb[0].mxu0
        %v3488 = vadd.f32 %v3368, %v3487
        %3489 = vmatprep.mubr.f32.mxu0 %v3202
        %3490 = vmatmul.mubr.f32.gmra.mrb[0].mxu0 %v3201
        %v3491 = vpop.f32.mrb[0].mxu0
        %v3492 = vadd.f32 %v3364, %v3491
        %v3493 = vpop.f32.mrb[0].mxu0
        %v3494 = vadd.f32 %v3368, %v3493
        %3495 = vmatprep.mubr.f32.mxu0 %v3206
        %3496 = vmatmul.mubr.f32.gmra.mrb[0].mxu0 %v3205
        %v3497 = vpop.f32.mrb[0].mxu0
        %v3498 = vadd.f32 %v3364, %v3497
        %v3499 = vpop.f32.mrb[0].mxu0
        %v3500 = vadd.f32 %v3368, %v3499
        %3501 = vmatprep.mubr.f32.mxu0 %v3210
        %3502 = vmatmul.mubr.f32.gmra.mrb[0].mxu0 %v3209
        %v3503 = vpop.f32.mrb[0].mxu0
        %v3504 = vadd.f32 %v3364, %v3503
        %v3505 = vpop.f32.mrb[0].mxu0
        %v3506 = vadd.f32 %v3368, %v3505
        %3507 = vmatprep.mubr.f32.mxu0 %v3214
        %3508 = vmatmul.mubr.f32.gmra.mrb[0].mxu0 %v3213
        %v3509 = vpop.f32.mrb[0].mxu0
        %v3510 = vadd.f32 %v3364, %v3509
        %v3511 = vpop.f32.mrb[0].mxu0
        %v3512 = vadd.f32 %v3368, %v3511
        %3513 = vmatprep.mubr.f32.mxu0 %v3218
        %3514 = vmatmul.mubr.f32.gmra.mrb[0].mxu0 %v3217
        %v3515 = vpop.f32.mrb[0].mxu0
        %v3516 = vadd.f32 %v3364, %v3515
        %v3517 = vpop.f32.mrb[0].mxu0
        %v3518 = vadd.f32 %v3368, %v3517
        %3519 = vmatprep.mubr.f32.mxu0 %v3222
        %3520 = vmatmul.mubr.f32.gmra.mrb[0].mxu0 %v3221
        %v3521 = vpop.f32.mrb[0].mxu0
        %v3522 = vadd.f32 %v3364, %v3521
        %v3523 = vpop.f32.mrb[0].mxu0
        %v3524 = vadd.f32 %v3368, %v3523
        %3525 = vmatprep.mubr.f32.mxu0 %v3226
        %3526 = vmatmul.mubr.f32.gmra.mrb[0].mxu0 %v3225
        %v3527 = vpop.f32.mrb[0].mxu0
        %v3528 = vadd.f32 %v3364, %v3527
        %v3529 = vpop.f32.mrb[0].mxu0
        %v3530 = vadd.f32 %v3368, %v3529
        %3531 = vmatprep.mubr.f32.mxu0 %v3230
        %3532 = vmatmul.mubr.f32.gmra.mrb[0].mxu0 %v3229
        %v3533 = vpop.f32.mrb[0].mxu0
        %v3534 = vadd.f32 %v3364, %v3533
        %v3535 = vpop.f32.mrb[0].mxu0
        %v3536 = vadd.f32 %v3368, %v3535
        %3537 = vmatprep.mubr.f32.mxu0 %v3234
        %3538 = vmatmul.mubr.f32.gmra.mrb[0].mxu0 %v3233
        %v3539 = vpop.f32.mrb[0].mxu0
        %v3540 = vadd.f32 %v3364, %v3539
        %v3541 = vpop.f32.mrb[0].mxu0
        %v3542 = vadd.f32 %v3368, %v3541
        %3543 = vmatprep.mubr.f32.mxu0 %v3238
        %3544 = vmatmul.mubr.f32.gmra.mrb[0].mxu0 %v3237
        %v3545 = vpop.f32.mrb[0].mxu0
        %v3546 = vadd.f32 %v3364, %v3545
        %v3547 = vpop.f32.mrb[0].mxu0
        %v3548 = vadd.f32 %v3368, %v3547
        %3549 = vmatprep.mubr.f32.mxu0 %v3242
        %3550 = vmatmul.mubr.f32.gmra.mrb[0].mxu0 %v3241
        %v3551 = vpop.f32.mrb[0].mxu0
        %v3552 = vadd.f32 %v3364, %v3551
        %v3553 = vpop.f32.mrb[0].mxu0
        %v3554 = vadd.f32 %v3368, %v3553
        %3555 = vmatprep.mubr.f32.mxu0 %v3246
        %3556 = vmatmul.mubr.f32.gmra.mrb[0].mxu0 %v3245
        %v3557 = vpop.f32.mrb[0].mxu0
        %v3558 = vadd.f32 %v3364, %v3557
        %v3559 = vpop.f32.mrb[0].mxu0
        %v3560 = vadd.f32 %v3368, %v3559
        %3561 = vmatprep.mubr.f32.mxu0 %v3250
        %3562 = vmatmul.mubr.f32.gmra.mrb[0].mxu0 %v3249
        %v3563 = vpop.f32.mrb[0].mxu0
        %v3564 = vadd.f32 %v3364, %v3563
        %v3565 = vpop.f32.mrb[0].mxu0
        %v3566 = vadd.f32 %v3368, %v3565
        %3567 = vdwg.mxu0
        %3568 = vmatprep.subr.mxu0 %v3318
        %3569 = vmatpush1.msra.mxu0 %v3317
        %3570 = vmatprep.subr.mxu0 %v3320
        %3571 = vmatpush1.msra.mxu0 %v3319
        %3572 = vmatprep.subr.mxu0 %v3322
        %3573 = vmatpush1.msra.mxu0 %v3321
        %3574 = vmatprep.subr.mxu0 %v3324
        %3575 = vmatpush1.msra.mxu0 %v3323
        %3576 = vmatprep.subr.mxu0 %v3326
        %3577 = vmatpush1.msra.mxu0 %v3325
        %3578 = vmatprep.subr.mxu0 %v3328
        %3579 = vmatpush1.msra.mxu0 %v3327
        %3580 = vmatprep.subr.mxu0 %v3330
        %3581 = vmatpush1.msra.mxu0 %v3329
        %3582 = vmatprep.subr.mxu0 %v3332
        %3583 = vmatpush1.msra.mxu0 %v3331
        %3584 = vmatprep.subr.mxu0 %v3334
        %3585 = vmatpush1.msra.mxu0 %v3333
        %3586 = vmatprep.subr.mxu0 %v3336
        %3587 = vmatpush1.msra.mxu0 %v3335
        %3588 = vmatprep.subr.mxu0 %v3338
        %3589 = vmatpush1.msra.mxu0 %v3337
        %3590 = vmatprep.subr.mxu0 %v3340
        %3591 = vmatpush1.msra.mxu0 %v3339
        %3592 = vmatprep.subr.mxu0 %v3342
        %3593 = vmatpush1.msra.mxu0 %v3341
        %3594 = vmatprep.subr.mxu0 %v3344
        %3595 = vmatpush1.msra.mxu0 %v3343
        %3596 = vmatprep.subr.mxu0 %v3346
        %3597 = vmatpush1.msra.mxu0 %v3345
        %3598 = vmatprep.subr.mxu0 %v3348
        %3599 = vmatpush1.msra.mxu0 %v3347
        %3600 = vmatprep.subr.mxu0 %v3350
        %3601 = vmatpush1.msra.mxu0 %v3349
        %3602 = vmatprep.subr.mxu0 %v3352
        %3603 = vmatpush1.msra.mxu0 %v3351
        %3604 = vmatprep.subr.mxu0 %v3354
        %3605 = vmatpush1.msra.mxu0 %v3353
        %3606 = vmatprep.subr.mxu0 %v3356
        %3607 = vmatpush1.msra.mxu0 %v3355
        %3608 = vmatprep.subr.mxu0 %v3417
        %3609 = vmatpush1.msra.mxu0 %v3414
        %3610 = vmatprep.subr.mxu0 0.0
        %3611 = vmatpush1.msra.mxu0 0.0
        %3612 = vmatprep.subr.mxu0 0.0
        %3613 = vmatpush1.msra.mxu0 0.0
        %3614 = vmatprep.subr.mxu0 0.0
        %3615 = vmatpush1.msra.mxu0 0.0
        %3616 = vmatprep.subr.mxu0 0.0
        %3617 = vmatpush1.msra.mxu0 0.0
        %3618 = vmatprep.subr.mxu0 0.0
        %3619 = vmatpush1.msra.mxu0 0.0
        %3620 = vmatprep.subr.mxu0 0.0
        %3621 = vmatpush1.msra.mxu0 0.0
        %3622 = vmatprep.subr.mxu0 0.0
        %3623 = vmatpush1.msra.mxu0 0.0
        %3624 = vmatprep.subr.mxu0 0.0
        %3625 = vmatpush1.msra.mxu0 0.0
        %3626 = vmatprep.subr.mxu0 0.0
        %3627 = vmatpush1.msra.mxu0 0.0
        %3628 = vmatprep.subr.mxu0 0.0
        %3629 = vmatpush1.msra.mxu0 0.0
        %3630 = vmatprep.subr.mxu0 0.0
        %3631 = vmatpush1.msra.mxu0 0.0
        %3632 = vmatprep.mubr.f32.mxu0 %v3372
        %3633 = vmatmul.mubr.f32.gmra.mrb[0].mxu0 %v3199
        %v3634 = vpop.f32.mrb[0].mxu0
        %v3635 = vadd.f32 %v3486, %v3634
        %v3636 = vpop.f32.mrb[0].mxu0
        %v3637 = vadd.f32 %v3488, %v3636
        %3638 = vmatprep.mubr.f32.mxu0 %v3375
        %3639 = vmatmul.mubr.f32.gmra.mrb[0].mxu0 %v3203
        %v3640 = vpop.f32.mrb[0].mxu0
        %v3641 = vadd.f32 %v3492, %v3640
        %v3642 = vpop.f32.mrb[0].mxu0
        %v3643 = vadd.f32 %v3494, %v3642
        %3644 = vmatprep.mubr.f32.mxu0 %v3378
        %3645 = vmatmul.mubr.f32.gmra.mrb[0].mxu0 %v3207
        %v3646 = vpop.f32.mrb[0].mxu0
        %v3647 = vadd.f32 %v3498, %v3646
        %v3648 = vpop.f32.mrb[0].mxu0
        %v3649 = vadd.f32 %v3500, %v3648
        %3650 = vmatprep.mubr.f32.mxu0 %v3381
        %3651 = vmatmul.mubr.f32.gmra.mrb[0].mxu0 %v3211
        %v3652 = vpop.f32.mrb[0].mxu0
        %v3653 = vadd.f32 %v3504, %v3652
        %v3654 = vpop.f32.mrb[0].mxu0
        %v3655 = vadd.f32 %v3506, %v3654
        %3656 = vmatprep.mubr.f32.mxu0 %v3384
        %3657 = vmatmul.mubr.f32.gmra.mrb[0].mxu0 %v3215
        %v3658 = vpop.f32.mrb[0].mxu0
        %v3659 = vadd.f32 %v3510, %v3658
        %v3660 = vpop.f32.mrb[0].mxu0
        %v3661 = vadd.f32 %v3512, %v3660
        %3662 = vmatprep.mubr.f32.mxu0 %v3387
        %3663 = vmatmul.mubr.f32.gmra.mrb[0].mxu0 %v3219
        %v3664 = vpop.f32.mrb[0].mxu0
        %v3665 = vadd.f32 %v3516, %v3664
        %v3666 = vpop.f32.mrb[0].mxu0
        %v3667 = vadd.f32 %v3518, %v3666
        %3668 = vmatprep.mubr.f32.mxu0 %v3390
        %3669 = vmatmul.mubr.f32.gmra.mrb[0].mxu0 %v3223
        %v3670 = vpop.f32.mrb[0].mxu0
        %v3671 = vadd.f32 %v3522, %v3670
        %v3672 = vpop.f32.mrb[0].mxu0
        %v3673 = vadd.f32 %v3524, %v3672
        %3674 = vmatprep.mubr.f32.mxu0 %v3393
        %3675 = vmatmul.mubr.f32.gmra.mrb[0].mxu0 %v3227
        %v3676 = vpop.f32.mrb[0].mxu0
        %v3677 = vadd.f32 %v3528, %v3676
        %v3678 = vpop.f32.mrb[0].mxu0
        %v3679 = vadd.f32 %v3530, %v3678
        %3680 = vmatprep.mubr.f32.mxu0 %v3396
        %3681 = vmatmul.mubr.f32.gmra.mrb[0].mxu0 %v3231
        %v3682 = vpop.f32.mrb[0].mxu0
        %v3683 = vadd.f32 %v3534, %v3682
        %v3684 = vpop.f32.mrb[0].mxu0
        %v3685 = vadd.f32 %v3536, %v3684
        %3686 = vmatprep.mubr.f32.mxu0 %v3399
        %3687 = vmatmul.mubr.f32.gmra.mrb[0].mxu0 %v3235
        %v3688 = vpop.f32.mrb[0].mxu0
        %v3689 = vadd.f32 %v3540, %v3688
        %v3690 = vpop.f32.mrb[0].mxu0
        %v3691 = vadd.f32 %v3542, %v3690
        %3692 = vmatprep.mubr.f32.mxu0 %v3402
        %3693 = vmatmul.mubr.f32.gmra.mrb[0].mxu0 %v3239
        %v3694 = vpop.f32.mrb[0].mxu0
        %v3695 = vadd.f32 %v3546, %v3694
        %v3696 = vpop.f32.mrb[0].mxu0
        %v3697 = vadd.f32 %v3548, %v3696
        %3698 = vmatprep.mubr.f32.mxu0 %v3405
        %3699 = vmatmul.mubr.f32.gmra.mrb[0].mxu0 %v3243
        %v3700 = vpop.f32.mrb[0].mxu0
        %v3701 = vadd.f32 %v3552, %v3700
        %v3702 = vpop.f32.mrb[0].mxu0
        %v3703 = vadd.f32 %v3554, %v3702
        %3704 = vmatprep.mubr.f32.mxu0 %v3408
        %3705 = vmatmul.mubr.f32.gmra.mrb[0].mxu0 %v3247
        %v3706 = vpop.f32.mrb[0].mxu0
        %v3707 = vadd.f32 %v3558, %v3706
        %v3708 = vpop.f32.mrb[0].mxu0
        %v3709 = vadd.f32 %v3560, %v3708
        %3710 = vmatprep.mubr.f32.mxu0 %v3411
        %3711 = vmatmul.mubr.f32.gmra.mrb[0].mxu0 %v3251
        %v3712 = vpop.f32.mrb[0].mxu0
        %v3713 = vadd.f32 %v3564, %v3712
        %v3714 = vpop.f32.mrb[0].mxu0
        %v3715 = vadd.f32 %v3566, %v3714
        %3716 = vdwg.mxu0
        %v3717 = vtanh.pop %v3635
        %v3718 = vtanh.pop %v3637
        %v3719 = vtanh.pop %v3641
        %v3720 = vtanh.pop %v3643
        %v3721 = vtanh.pop %v3647
        %v3722 = vtanh.pop %v3649
        %v3723 = vtanh.pop %v3653
        %v3724 = vtanh.pop %v3655
        %v3725 = vtanh.pop %v3659
        %v3726 = vtanh.pop %v3661
        %v3727 = vtanh.pop %v3665
        %v3728 = vtanh.pop %v3667
        %v3729 = vtanh.pop %v3671
        %v3730 = vtanh.pop %v3673
        %v3731 = vtanh.pop %v3677
        %v3732 = vtanh.pop %v3679
        %v3733 = vtanh.pop %v3683
        %v3734 = vtanh.pop %v3685
        %v3735 = vtanh.pop %v3689
        %v3736 = vtanh.pop %v3691
        %v3737 = vtanh.pop %v3695
        %v3738 = vtanh.pop %v3697
        %v3739 = vtanh.pop %v3701
        %v3740 = vtanh.pop %v3703
        %v3741 = vtanh.pop %v3707
        %v3742 = vtanh.pop %v3709
        %v3743 = vtanh.pop %v3713
        %v3744 = vtanh.pop %v3715
        %v3745 = vld [vmem:[%s8] sm:$0xff]
        %v3746 = vld [vmem:[%s8 + $0x8] sm:$0xff]
        %v3747 = vld [vmem:[%s8 + $0x10] sm:$0xff]
        %v3748 = vld [vmem:[%s8 + $0x18] sm:$0xff]
        %v3749 = vld [vmem:[%s8 + $0x20] sm:$0xff]
        %v3750 = vld [vmem:[%s7] sm:$0xff]
        %v3751 = vld [vmem:[%s7 + $0x8] sm:$0xff]
        %v3752 = vld [vmem:[%s7 + $0x10] sm:$0xff]
        %v3753 = vld [vmem:[%s7 + $0x18] sm:$0xff]
        %v3754 = vld [vmem:[%s7 + $0x20] sm:$0xff]
        %v3755 = vld [vmem:[%s7 + $0x28] sm:$0xff]
        %v3756 = vld [vmem:[%s7 + $0x30] sm:$0xff]
        %v3757 = vld [vmem:[%s7 + $0x38] sm:$0xff]
        %v3758 = vld [vmem:[%s7 + $0x40] sm:$0xff]
        %v3759 = vld [vmem:[%s7 + $0x48] sm:$0xff]
        %v3760 = vld [vmem:[%s7 + $0x50] sm:$0xff]
        %v3761 = vld [vmem:[%s7 + $0x58] sm:$0xff]
        %v3762 = vld [vmem:[%s7 + $0x60] sm:$0xff]
        %v3763 = vld [vmem:[%s7 + $0x68] sm:$0xff]
        %v3764 = vld [vmem:[%s7 + $0x70] sm:$0xff]
        %v3765 = vld [vmem:[%s7 + $0x78] sm:$0xff]
        %v3766 = vld [vmem:[%s7 + $0x80] sm:$0xff]
        %v3767 = vld [vmem:[%s7 + $0x88] sm:$0xff]
        %v3768 = vld [vmem:[%s7 + $0x90] sm:$0xff]
        %v3769 = vld [vmem:[%s7 + $0x98] sm:$0xff]
        %v3771 = vsel %vm951, %v3718, 0
        %v3774 = vsel %vm951, %v3720, 0
        %v3777 = vsel %vm951, %v3722, 0
        %v3780 = vsel %vm951, %v3724, 0
        %v3783 = vsel %vm951, %v3726, 0
        %v3786 = vsel %vm951, %v3728, 0
        %v3789 = vsel %vm951, %v3730, 0
        %v3792 = vsel %vm951, %v3732, 0
        %v3795 = vsel %vm951, %v3734, 0
        %v3798 = vsel %vm951, %v3736, 0
        %v3801 = vsel %vm951, %v3738, 0
        %v3804 = vsel %vm951, %v3740, 0
        %v3807 = vsel %vm951, %v3742, 0
        %v3810 = vsel %vm951, %v3744, 0
        %3812 = vmatprep.subr.mxu0 0.0
        %3813 = vmatpush1.msra.mxu0 %v3750
        %3814 = vmatprep.subr.mxu0 0.0
        %3815 = vmatpush1.msra.mxu0 %v3751
        %3816 = vmatprep.subr.mxu0 0.0
        %3817 = vmatpush1.msra.mxu0 %v3752
        %3818 = vmatprep.subr.mxu0 0.0
        %3819 = vmatpush1.msra.mxu0 %v3753
        %3820 = vmatprep.subr.mxu0 0.0
        %3821 = vmatpush1.msra.mxu0 %v3754
        %3822 = vmatprep.subr.mxu0 0.0
        %3823 = vmatpush1.msra.mxu0 %v3755
        %3824 = vmatprep.subr.mxu0 0.0
        %3825 = vmatpush1.msra.mxu0 %v3756
        %3826 = vmatprep.subr.mxu0 0.0
        %3827 = vmatpush1.msra.mxu0 %v3757
        %3828 = vmatprep.subr.mxu0 0.0
        %3829 = vmatpush1.msra.mxu0 %v3758
        %3830 = vmatprep.subr.mxu0 0.0
        %3831 = vmatpush1.msra.mxu0 %v3759
        %3832 = vmatprep.subr.mxu0 0.0
        %3833 = vmatpush1.msra.mxu0 %v3760
        %3834 = vmatprep.subr.mxu0 0.0
        %3835 = vmatpush1.msra.mxu0 %v3761
        %3836 = vmatprep.subr.mxu0 0.0
        %3837 = vmatpush1.msra.mxu0 %v3762
        %3838 = vmatprep.subr.mxu0 0.0
        %3839 = vmatpush1.msra.mxu0 %v3763
        %3840 = vmatprep.subr.mxu0 0.0
        %3841 = vmatpush1.msra.mxu0 %v3764
        %3842 = vmatprep.subr.mxu0 0.0
        %3843 = vmatpush1.msra.mxu0 %v3765
        %3844 = vmatprep.subr.mxu0 0.0
        %3845 = vmatpush1.msra.mxu0 %v3766
        %3846 = vmatprep.subr.mxu0 0.0
        %3847 = vmatpush1.msra.mxu0 %v3767
        %3848 = vmatprep.subr.mxu0 0.0
        %3849 = vmatpush1.msra.mxu0 %v3768
        %3850 = vmatprep.subr.mxu0 0.0
        %3851 = vmatpush1.msra.mxu0 %v3769
        %3852 = vmatprep.subr.mxu0 0.0
        %3853 = vmatpush1.msra.mxu0 0.0
        %3854 = vmatprep.subr.mxu0 0.0
        %3855 = vmatpush1.msra.mxu0 0.0
        %3856 = vmatprep.subr.mxu0 0.0
        %3857 = vmatpush1.msra.mxu0 0.0
        %3858 = vmatprep.subr.mxu0 0.0
        %3859 = vmatpush1.msra.mxu0 0.0
        %3860 = vmatprep.subr.mxu0 0.0
        %3861 = vmatpush1.msra.mxu0 0.0
        %3862 = vmatprep.subr.mxu0 0.0
        %3863 = vmatpush1.msra.mxu0 0.0
        %3864 = vmatprep.subr.mxu0 0.0
        %3865 = vmatpush1.msra.mxu0 0.0
        %3866 = vmatprep.subr.mxu0 0.0
        %3867 = vmatpush1.msra.mxu0 0.0
        %3868 = vmatprep.subr.mxu0 0.0
        %3869 = vmatpush1.msra.mxu0 0.0
        %3870 = vmatprep.subr.mxu0 0.0
        %3871 = vmatpush1.msra.mxu0 0.0
        %3872 = vmatprep.subr.mxu0 0.0
        %3873 = vmatpush1.msra.mxu0 0.0
        %3874 = vmatprep.subr.mxu0 0.0
        %3875 = vmatpush1.msra.mxu0 0.0
        %3876 = vmatprep.mubr.f32.mxu0 %v3771
        %3877 = vmatmul.mubr.f32.gmra.mrb[0].mxu0 %v3717
        %v3878 = vpop.f32.mrb[0].mxu0
        %v3879 = vadd.f32 0.0, %v3878
        %v3880 = vpop.f32.mrb[0].mxu0
        %3881 = vmatprep.mubr.f32.mxu0 %v3774
        %3882 = vmatmul.mubr.f32.gmra.mrb[0].mxu0 %v3719
        %v3883 = vpop.f32.mrb[0].mxu0
        %v3884 = vadd.f32 0.0, %v3883
        %v3885 = vpop.f32.mrb[0].mxu0
        %3886 = vmatprep.mubr.f32.mxu0 %v3777
        %3887 = vmatmul.mubr.f32.gmra.mrb[0].mxu0 %v3721
        %v3888 = vpop.f32.mrb[0].mxu0
        %v3889 = vadd.f32 0.0, %v3888
        %v3890 = vpop.f32.mrb[0].mxu0
        %3891 = vmatprep.mubr.f32.mxu0 %v3780
        %3892 = vmatmul.mubr.f32.gmra.mrb[0].mxu0 %v3723
        %v3893 = vpop.f32.mrb[0].mxu0
        %v3894 = vadd.f32 0.0, %v3893
        %v3895 = vpop.f32.mrb[0].mxu0
        %3896 = vmatprep.mubr.f32.mxu0 %v3783
        %3897 = vmatmul.mubr.f32.gmra.mrb[0].mxu0 %v3725
        %v3898 = vpop.f32.mrb[0].mxu0
        %v3899 = vadd.f32 0.0, %v3898
        %v3900 = vpop.f32.mrb[0].mxu0
        %3901 = vmatprep.mubr.f32.mxu0 %v3786
        %3902 = vmatmul.mubr.f32.gmra.mrb[0].mxu0 %v3727
        %v3903 = vpop.f32.mrb[0].mxu0
        %v3904 = vadd.f32 0.0, %v3903
        %v3905 = vpop.f32.mrb[0].mxu0
        %3906 = vmatprep.mubr.f32.mxu0 %v3789
        %3907 = vmatmul.mubr.f32.gmra.mrb[0].mxu0 %v3729
        %v3908 = vpop.f32.mrb[0].mxu0
        %v3909 = vadd.f32 0.0, %v3908
        %v3910 = vpop.f32.mrb[0].mxu0
        %3911 = vmatprep.mubr.f32.mxu0 %v3792
        %3912 = vmatmul.mubr.f32.gmra.mrb[0].mxu0 %v3731
        %v3913 = vpop.f32.mrb[0].mxu0
        %v3914 = vadd.f32 0.0, %v3913
        %v3915 = vpop.f32.mrb[0].mxu0
        %3916 = vmatprep.mubr.f32.mxu0 %v3795
        %3917 = vmatmul.mubr.f32.gmra.mrb[0].mxu0 %v3733
        %v3918 = vpop.f32.mrb[0].mxu0
        %v3919 = vadd.f32 0.0, %v3918
        %v3920 = vpop.f32.mrb[0].mxu0
        %3921 = vmatprep.mubr.f32.mxu0 %v3798
        %3922 = vmatmul.mubr.f32.gmra.mrb[0].mxu0 %v3735
        %v3923 = vpop.f32.mrb[0].mxu0
        %v3924 = vadd.f32 0.0, %v3923
        %v3925 = vpop.f32.mrb[0].mxu0
        %3926 = vmatprep.mubr.f32.mxu0 %v3801
        %3927 = vmatmul.mubr.f32.gmra.mrb[0].mxu0 %v3737
        %v3928 = vpop.f32.mrb[0].mxu0
        %v3929 = vadd.f32 0.0, %v3928
        %v3930 = vpop.f32.mrb[0].mxu0
        %3931 = vmatprep.mubr.f32.mxu0 %v3804
        %3932 = vmatmul.mubr.f32.gmra.mrb[0].mxu0 %v3739
        %v3933 = vpop.f32.mrb[0].mxu0
        %v3934 = vadd.f32 0.0, %v3933
        %v3935 = vpop.f32.mrb[0].mxu0
        %3936 = vmatprep.mubr.f32.mxu0 %v3807
        %3937 = vmatmul.mubr.f32.gmra.mrb[0].mxu0 %v3741
        %v3938 = vpop.f32.mrb[0].mxu0
        %v3939 = vadd.f32 0.0, %v3938
        %v3940 = vpop.f32.mrb[0].mxu0
        %3941 = vmatprep.mubr.f32.mxu0 %v3810
        %3942 = vmatmul.mubr.f32.gmra.mrb[0].mxu0 %v3743
        %v3943 = vpop.f32.mrb[0].mxu0
        %v3944 = vadd.f32 0.0, %v3943
        %v3945 = vpop.f32.mrb[0].mxu0
        %3946 = vdwg.mxu0
        %vm3947 = vcmask 883712
        %v3949 = vsel %vm3947, %v3745, 0
        %v3952 = vsel %vm3947, %v3746, 0
        %v3955 = vsel %vm3947, %v3747, 0
        %v3958 = vsel %vm3947, %v3748, 0
        %v3961 = vsel %vm3947, %v3749, 0
        %v3964 = vsel %vm2623, %v3944, 0
        %3966 = vmatprep.subr.mxu0 0.0
        %3967 = vmatpush1.msra.mxu0 %v3879
        %3968 = vmatprep.subr.mxu0 0.0
        %3969 = vmatpush1.msra.mxu0 %v3884
        %3970 = vmatprep.subr.mxu0 0.0
        %3971 = vmatpush1.msra.mxu0 %v3889
        %3972 = vmatprep.subr.mxu0 0.0
        %3973 = vmatpush1.msra.mxu0 %v3894
        %3974 = vmatprep.subr.mxu0 0.0
        %3975 = vmatpush1.msra.mxu0 %v3899
        %3976 = vmatprep.subr.mxu0 0.0
        %3977 = vmatpush1.msra.mxu0 %v3904
        %3978 = vmatprep.subr.mxu0 0.0
        %3979 = vmatpush1.msra.mxu0 %v3909
        %3980 = vmatprep.subr.mxu0 0.0
        %3981 = vmatpush1.msra.mxu0 %v3914
        %3982 = vmatprep.subr.mxu0 0.0
        %3983 = vmatpush1.msra.mxu0 %v3919
        %3984 = vmatprep.subr.mxu0 0.0
        %3985 = vmatpush1.msra.mxu0 %v3924
        %3986 = vmatprep.subr.mxu0 0.0
        %3987 = vmatpush1.msra.mxu0 %v3929
        %3988 = vmatprep.subr.mxu0 0.0
        %3989 = vmatpush1.msra.mxu0 %v3934
        %3990 = vmatprep.subr.mxu0 0.0
        %3991 = vmatpush1.msra.mxu0 %v3939
        %3992 = vmatprep.subr.mxu0 0.0
        %3993 = vmatpush1.msra.mxu0 %v3964
        %3994 = vmatprep.subr.mxu0 0.0
        %3995 = vmatpush1.msra.mxu0 0.0
        %3996 = vmatprep.subr.mxu0 0.0
        %3997 = vmatpush1.msra.mxu0 0.0
        %3998 = vmatprep.subr.mxu0 0.0
        %3999 = vmatpush1.msra.mxu0 0.0
        %4000 = vmatprep.subr.mxu0 0.0
        %4001 = vmatpush1.msra.mxu0 0.0
        %4002 = vmatprep.subr.mxu0 0.0
        %4003 = vmatpush1.msra.mxu0 0.0
        %4004 = vmatprep.subr.mxu0 0.0
        %4005 = vmatpush1.msra.mxu0 0.0
        %4006 = vmatprep.subr.mxu0 0.0
        %4007 = vmatpush1.msra.mxu0 0.0
        %4008 = vmatprep.subr.mxu0 0.0
        %4009 = vmatpush1.msra.mxu0 0.0
        %4010 = vmatprep.subr.mxu0 0.0
        %4011 = vmatpush1.msra.mxu0 0.0
        %4012 = vmatprep.subr.mxu0 0.0
        %4013 = vmatpush1.msra.mxu0 0.0
        %4014 = vmatprep.subr.mxu0 0.0
        %4015 = vmatpush1.msra.mxu0 0.0
        %4016 = vmatprep.subr.mxu0 0.0
        %4017 = vmatpush1.msra.mxu0 0.0
        %4018 = vmatprep.subr.mxu0 0.0
        %4019 = vmatpush1.msra.mxu0 0.0
        %4020 = vmatprep.subr.mxu0 0.0
        %4021 = vmatpush1.msra.mxu0 0.0
        %4022 = vmatprep.subr.mxu0 0.0
        %4023 = vmatpush1.msra.mxu0 0.0
        %4024 = vmatprep.subr.mxu0 0.0
        %4025 = vmatpush1.msra.mxu0 0.0
        %4026 = vmatprep.subr.mxu0 0.0
        %4027 = vmatpush1.msra.mxu0 0.0
        %4028 = vmatprep.subr.mxu0 0.0
        %4029 = vmatpush1.msra.mxu0 0.0
        %4030 = vmatprep.mubr.f32.mxu0 0.0
        %4031 = vmatmul.mubr.f32.gmra.mrb[0].mxu0 %v3949
        %v4032 = vpop.f32.mrb[0].mxu0
        %v4033 = vadd.f32 0.0, %v4032
        %v4034 = vpop.f32.mrb[0].mxu0
        %4035 = vmatprep.mubr.f32.mxu0 0.0
        %4036 = vmatmul.mubr.f32.gmra.mrb[0].mxu0 %v3952
        %v4037 = vpop.f32.mrb[0].mxu0
        %v4038 = vadd.f32 0.0, %v4037
        %v4039 = vpop.f32.mrb[0].mxu0
        %4040 = vmatprep.mubr.f32.mxu0 0.0
        %4041 = vmatmul.mubr.f32.gmra.mrb[0].mxu0 %v3955
        %v4042 = vpop.f32.mrb[0].mxu0
        %v4043 = vadd.f32 0.0, %v4042
        %v4044 = vpop.f32.mrb[0].mxu0
        %4045 = vmatprep.mubr.f32.mxu0 0.0
        %4046 = vmatmul.mubr.f32.gmra.mrb[0].mxu0 %v3958
        %v4047 = vpop.f32.mrb[0].mxu0
        %v4048 = vadd.f32 0.0, %v4047
        %v4049 = vpop.f32.mrb[0].mxu0
        %4050 = vmatprep.mubr.f32.mxu0 0.0
        %4051 = vmatmul.mubr.f32.gmra.mrb[0].mxu0 %v3961
        %v4052 = vpop.f32.mrb[0].mxu0
        %v4053 = vadd.f32 0.0, %v4052
        %v4054 = vpop.f32.mrb[0].mxu0
        %4055 = vdwg.mxu0
        %4056 = vst.msk [vmem:[#allocation6] sm:$0xff] %vm3065, %v4033
        %4057 = vst.msk [vmem:[#allocation6 + $0x8] sm:$0xff] %vm3065, %v4038
        %4058 = vst.msk [vmem:[#allocation6 + $0x10] sm:$0xff] %vm3065, %v4043
        %4059 = vst.msk [vmem:[#allocation6 + $0x18] sm:$0xff] %vm3065, %v4048
        %4060 = vst.msk [vmem:[#allocation6 + $0x20] sm:$0xff] %vm3065, %v4053
        %v4061 = vld [vmem:[#allocation6] sm:$0xff]
        %4062 = vst.msk [vmem:[#allocation4] sm:$0xff] %vm3065, %v4061
        %v4063 = vld [vmem:[#allocation6 + $0x8] sm:$0xff]
        %4065 = vrot.lane.b32.xlu0 %v4063, 80
        %v4066 = vpop.permute.xlu0 %4065
        %4068 = vst.msk [vmem:[#allocation4] sm:$0xff] %vm3165, %v4066
        %4069 = vst.msk [vmem:[#allocation4 + $0x8] sm:$0xff] %vm951, %v4066
        %v4070 = vld [vmem:[#allocation6 + $0x10] sm:$0xff]
        %4072 = vrot.lane.b32.xlu0 %v4070, 32
        %v4073 = vpop.permute.xlu0 %4072
        %vm4075 = vcmask 916736
        %4076 = vst.msk [vmem:[#allocation4 + $0x8] sm:$0xff] %vm4075, %v4073
        %v4077 = vld [vmem:[#allocation6 + $0x18] sm:$0xff]
        %4079 = vrot.lane.b32.xlu0 %v4077, 112
        %v4080 = vpop.permute.xlu0 %4079
        %vm4082 = vcmask 1048448
        %4083 = vst.msk [vmem:[#allocation4 + $0x8] sm:$0xff] %vm4082, %v4080
        %4084 = vst.msk [vmem:[#allocation4 + $0x10] sm:$0xff] %vm723, %v4080
        %v4085 = vld [vmem:[#allocation6 + $0x20] sm:$0xff]
        %4087 = vrot.lane.b32.xlu0 %v4085, 64
        %v4088 = vpop.permute.xlu0 %4087
        %4090 = vst.msk [vmem:[#allocation4 + $0x10] sm:$0xff] %vm949, %v4088
        %vm4091 = vcmask 130048
        %4092 = vst.msk [vmem:[#allocation4 + $0x18] sm:$0xff] %vm4091, %v4088
        %v4093 = vld [vmem:[#allocation4] sm:$0xff]
        %v4094 = vld [vmem:[#allocation4 + $0x8] sm:$0xff]
        %v4095 = vld [vmem:[#allocation4 + $0x10] sm:$0xff]
        %v4096 = vld [vmem:[#allocation4 + $0x18] sm:$0xff]
        %v4097 = vld [vmem:[%s9] sm:$0xff]
        %v4098 = vld [vmem:[%s9 + $0x8] sm:$0xff]
        %v4099 = vld [vmem:[%s9 + $0x10] sm:$0xff]
        %v4100 = vld [vmem:[%s9 + $0x18] sm:$0xff]
        %v4101 = vld [vmem:[%s9 + $0x20] sm:$0xff]
        %v4102 = vld [vmem:[%s9 + $0x28] sm:$0xff]
        %v4103 = vld [vmem:[%s9 + $0x30] sm:$0xff]
        %v4104 = vld [vmem:[%s9 + $0x38] sm:$0xff]
        %v4105 = vld [vmem:[%s9 + $0x40] sm:$0xff]
        %v4106 = vld [vmem:[%s9 + $0x48] sm:$0xff]
        %v4107 = vld [vmem:[%s9 + $0x50] sm:$0xff]
        %v4108 = vld [vmem:[%s9 + $0x58] sm:$0xff]
        %v4109 = vld [vmem:[%s9 + $0x60] sm:$0xff]
        %v4110 = vld [vmem:[%s9 + $0x68] sm:$0xff]
        %v4111 = vld [vmem:[%s9 + $0x70] sm:$0xff]
        %v4112 = vld [vmem:[%s9 + $0x78] sm:$0xff]
        %v4113 = vld [vmem:[%s9 + $0x80] sm:$0xff]
        %v4114 = vld [vmem:[%s9 + $0x88] sm:$0xff]
        %v4115 = vld [vmem:[%s9 + $0x90] sm:$0xff]
        %v4116 = vld [vmem:[%s9 + $0x98] sm:$0xff]
        %v4117 = vld [vmem:[%s9 + $0xa0] sm:$0xff]
        %v4118 = vld [vmem:[%s9 + $0xa8] sm:$0xff]
        %v4119 = vld [vmem:[%s9 + $0xb0] sm:$0xff]
        %v4120 = vld [vmem:[%s9 + $0xb8] sm:$0xff]
        %v4121 = vld [vmem:[%s9 + $0xc0] sm:$0xff]
        %v4122 = vld [vmem:[%s9 + $0xc8] sm:$0xff]
        %v4123 = vld [vmem:[%s9 + $0xd0] sm:$0xff]
        %v4124 = vld [vmem:[%s9 + $0xd8] sm:$0xff]
        %v4125 = vld [vmem:[%s9 + $0xe0] sm:$0xff]
        %v4126 = vld [vmem:[%s9 + $0xe8] sm:$0xff]
        %v4127 = vld [vmem:[%s9 + $0xf0] sm:$0xff]
        %v4128 = vld [vmem:[%s9 + $0xf8] sm:$0xff]
        %v4129 = vld [vmem:[%s9 + $0x100] sm:$0xff]
        %v4130 = vld [vmem:[%s9 + $0x108] sm:$0xff]
        %v4131 = vld [vmem:[%s9 + $0x110] sm:$0xff]
        %v4132 = vld [vmem:[%s9 + $0x118] sm:$0xff]
        %v4133 = vld [vmem:[%s9 + $0x120] sm:$0xff]
        %v4134 = vld [vmem:[%s9 + $0x128] sm:$0xff]
        %v4135 = vld [vmem:[%s9 + $0x130] sm:$0xff]
        %v4136 = vld [vmem:[%s9 + $0x138] sm:$0xff]
        %v4137 = vld [vmem:[%s9 + $0x140] sm:$0xff]
        %v4138 = vld [vmem:[%s9 + $0x148] sm:$0xff]
        %v4139 = vld [vmem:[%s9 + $0x150] sm:$0xff]
        %v4140 = vld [vmem:[%s9 + $0x158] sm:$0xff]
        %v4141 = vld [vmem:[%s9 + $0x160] sm:$0xff]
        %v4142 = vld [vmem:[%s9 + $0x168] sm:$0xff]
        %v4143 = vld [vmem:[%s9 + $0x170] sm:$0xff]
        %v4144 = vld [vmem:[%s9 + $0x178] sm:$0xff]
        %v4145 = vld [vmem:[%s9 + $0x180] sm:$0xff]
        %v4146 = vld [vmem:[%s9 + $0x188] sm:$0xff]
        %v4147 = vld [vmem:[%s10] sm:$0x1]
        %v4149 = vlaneseq
        %v4150 = vshrl.u32 %v4149, 7
        %v4151 = vsub.s32 0, %v4150
        %v4152 = vrot.slane %v4147, %v4151
        %v4155 = vsel %vm4091, %v4096, 0
        %4157 = vmatprep.subr.mxu0 0.0
        %4158 = vmatpush1.msra.mxu0 %v4097
        %4159 = vmatprep.subr.mxu0 0.0
        %4160 = vmatpush1.msra.mxu0 %v4098
        %4161 = vmatprep.subr.mxu0 0.0
        %4162 = vmatpush1.msra.mxu0 %v4099
        %4163 = vmatprep.subr.mxu0 0.0
        %4164 = vmatpush1.msra.mxu0 %v4100
        %4165 = vmatprep.subr.mxu0 0.0
        %4166 = vmatpush1.msra.mxu0 %v4101
        %4167 = vmatprep.subr.mxu0 0.0
        %4168 = vmatpush1.msra.mxu0 %v4102
        %4169 = vmatprep.subr.mxu0 0.0
        %4170 = vmatpush1.msra.mxu0 %v4103
        %4171 = vmatprep.subr.mxu0 0.0
        %4172 = vmatpush1.msra.mxu0 %v4104
        %4173 = vmatprep.subr.mxu0 0.0
        %4174 = vmatpush1.msra.mxu0 %v4105
        %4175 = vmatprep.subr.mxu0 0.0
        %4176 = vmatpush1.msra.mxu0 %v4106
        %4177 = vmatprep.subr.mxu0 0.0
        %4178 = vmatpush1.msra.mxu0 %v4107
        %4179 = vmatprep.subr.mxu0 0.0
        %4180 = vmatpush1.msra.mxu0 %v4108
        %4181 = vmatprep.subr.mxu0 0.0
        %4182 = vmatpush1.msra.mxu0 %v4109
        %4183 = vmatprep.subr.mxu0 0.0
        %4184 = vmatpush1.msra.mxu0 %v4110
        %4185 = vmatprep.subr.mxu0 0.0
        %4186 = vmatpush1.msra.mxu0 %v4111
        %4187 = vmatprep.subr.mxu0 0.0
        %4188 = vmatpush1.msra.mxu0 %v4112
        %4189 = vmatprep.subr.mxu0 0.0
        %4190 = vmatpush1.msra.mxu0 %v4113
        %4191 = vmatprep.subr.mxu0 0.0
        %4192 = vmatpush1.msra.mxu0 %v4114
        %4193 = vmatprep.subr.mxu0 0.0
        %4194 = vmatpush1.msra.mxu0 %v4115
        %4195 = vmatprep.subr.mxu0 0.0
        %4196 = vmatpush1.msra.mxu0 %v4116
        %4197 = vmatprep.subr.mxu0 0.0
        %4198 = vmatpush1.msra.mxu0 %v4117
        %4199 = vmatprep.subr.mxu0 0.0
        %4200 = vmatpush1.msra.mxu0 %v4118
        %4201 = vmatprep.subr.mxu0 0.0
        %4202 = vmatpush1.msra.mxu0 %v4119
        %4203 = vmatprep.subr.mxu0 0.0
        %4204 = vmatpush1.msra.mxu0 %v4120
        %4205 = vmatprep.subr.mxu0 0.0
        %4206 = vmatpush1.msra.mxu0 %v4121
        %4207 = vmatprep.subr.mxu0 0.0
        %4208 = vmatpush1.msra.mxu0 %v4122
        %4209 = vmatprep.subr.mxu0 0.0
        %4210 = vmatpush1.msra.mxu0 %v4123
        %4211 = vmatprep.subr.mxu0 0.0
        %4212 = vmatpush1.msra.mxu0 %v4124
        %4213 = vmatprep.subr.mxu0 0.0
        %4214 = vmatpush1.msra.mxu0 %v4125
        %4215 = vmatprep.subr.mxu0 0.0
        %4216 = vmatpush1.msra.mxu0 %v4126
        %4217 = vmatprep.subr.mxu0 0.0
        %4218 = vmatpush1.msra.mxu0 %v4127
        %4219 = vmatprep.subr.mxu0 0.0
        %4220 = vmatpush1.msra.mxu0 %v4128
        %4221 = vmatprep.mubr.f32.mxu0 %v4094
        %4222 = vmatmul.mubr.f32.gmra.mrb[0].mxu0 %v4093
        %v4223 = vpop.f32.mrb[0].mxu0
        %v4224 = vadd.f32 %v4152, %v4223
        %v4225 = vpop.f32.mrb[0].mxu0
        %4226 = vdwg.mxu0
        %4227 = vmatprep.subr.mxu0 0.0
        %4228 = vmatpush1.msra.mxu0 %v4129
        %4229 = vmatprep.subr.mxu0 0.0
        %4230 = vmatpush1.msra.mxu0 %v4130
        %4231 = vmatprep.subr.mxu0 0.0
        %4232 = vmatpush1.msra.mxu0 %v4131
        %4233 = vmatprep.subr.mxu0 0.0
        %4234 = vmatpush1.msra.mxu0 %v4132
        %4235 = vmatprep.subr.mxu0 0.0
        %4236 = vmatpush1.msra.mxu0 %v4133
        %4237 = vmatprep.subr.mxu0 0.0
        %4238 = vmatpush1.msra.mxu0 %v4134
        %4239 = vmatprep.subr.mxu0 0.0
        %4240 = vmatpush1.msra.mxu0 %v4135
        %4241 = vmatprep.subr.mxu0 0.0
        %4242 = vmatpush1.msra.mxu0 %v4136
        %4243 = vmatprep.subr.mxu0 0.0
        %4244 = vmatpush1.msra.mxu0 %v4137
        %4245 = vmatprep.subr.mxu0 0.0
        %4246 = vmatpush1.msra.mxu0 %v4138
        %4247 = vmatprep.subr.mxu0 0.0
        %4248 = vmatpush1.msra.mxu0 %v4139
        %4249 = vmatprep.subr.mxu0 0.0
        %4250 = vmatpush1.msra.mxu0 %v4140
        %4251 = vmatprep.subr.mxu0 0.0
        %4252 = vmatpush1.msra.mxu0 %v4141
        %4253 = vmatprep.subr.mxu0 0.0
        %4254 = vmatpush1.msra.mxu0 %v4142
        %4255 = vmatprep.subr.mxu0 0.0
        %4256 = vmatpush1.msra.mxu0 %v4143
        %4257 = vmatprep.subr.mxu0 0.0
        %4258 = vmatpush1.msra.mxu0 %v4144
        %4259 = vmatprep.subr.mxu0 0.0
        %4260 = vmatpush1.msra.mxu0 %v4145
        %4261 = vmatprep.subr.mxu0 0.0
        %4262 = vmatpush1.msra.mxu0 %v4146
        %4263 = vmatprep.subr.mxu0 0.0
        %4264 = vmatpush1.msra.mxu0 0.0
        %4265 = vmatprep.subr.mxu0 0.0
        %4266 = vmatpush1.msra.mxu0 0.0
        %4267 = vmatprep.subr.mxu0 0.0
        %4268 = vmatpush1.msra.mxu0 0.0
        %4269 = vmatprep.subr.mxu0 0.0
        %4270 = vmatpush1.msra.mxu0 0.0
        %4271 = vmatprep.subr.mxu0 0.0
        %4272 = vmatpush1.msra.mxu0 0.0
        %4273 = vmatprep.subr.mxu0 0.0
        %4274 = vmatpush1.msra.mxu0 0.0
        %4275 = vmatprep.subr.mxu0 0.0
        %4276 = vmatpush1.msra.mxu0 0.0
        %4277 = vmatprep.subr.mxu0 0.0
        %4278 = vmatpush1.msra.mxu0 0.0
        %4279 = vmatprep.subr.mxu0 0.0
        %4280 = vmatpush1.msra.mxu0 0.0
        %4281 = vmatprep.subr.mxu0 0.0
        %4282 = vmatpush1.msra.mxu0 0.0
        %4283 = vmatprep.subr.mxu0 0.0
        %4284 = vmatpush1.msra.mxu0 0.0
        %4285 = vmatprep.subr.mxu0 0.0
        %4286 = vmatpush1.msra.mxu0 0.0
        %4287 = vmatprep.subr.mxu0 0.0
        %4288 = vmatpush1.msra.mxu0 0.0
        %4289 = vmatprep.subr.mxu0 0.0
        %4290 = vmatpush1.msra.mxu0 0.0
        %4291 = vmatprep.mubr.f32.mxu0 %v4155
        %4292 = vmatmul.mubr.f32.gmra.mrb[0].mxu0 %v4095
        %v4293 = vpop.f32.mrb[0].mxu0
        %v4294 = vadd.f32 %v4224, %v4293
        %v4295 = vpop.f32.mrb[0].mxu0
        %4296 = vdwg.mxu0
        %v4297 = vtanh.pop %v4294
        %v4298 = vld [vmem:[%s11] sm:$0xff]
        %v4299 = vld [vmem:[%s11 + $0x8] sm:$0xff]
        %v4300 = vld [vmem:[%s11 + $0x10] sm:$0xff]
        %v4301 = vld [vmem:[%s11 + $0x18] sm:$0xff]
        %v4302 = vld [vmem:[%s11 + $0x20] sm:$0xff]
        %v4303 = vld [vmem:[%s11 + $0x28] sm:$0xff]
        %v4304 = vld [vmem:[%s11 + $0x30] sm:$0xff]
        %v4305 = vld [vmem:[%s11 + $0x38] sm:$0xff]
        %v4306 = vld [vmem:[%s11 + $0x40] sm:$0xff]
        %v4307 = vld [vmem:[%s11 + $0x48] sm:$0xff]
        %v4308 = vld [vmem:[%s11 + $0x50] sm:$0xff]
        %v4309 = vld [vmem:[%s11 + $0x58] sm:$0xff]
        %v4310 = vld [vmem:[%s11 + $0x60] sm:$0xff]
        %v4311 = vld [vmem:[%s11 + $0x68] sm:$0xff]
        %v4312 = vld [vmem:[%s11 + $0x70] sm:$0xff]
        %v4313 = vld [vmem:[%s12] sm:$0x1]
        %v4315 = vlaneseq
        %v4316 = vshrl.u32 %v4315, 7
        %v4317 = vsub.s32 0, %v4316
        %v4318 = vrot.slane %v4313, %v4317
        %vm4320 = vcmask 982016
        %v4322 = vsel %vm4320, %v4297, 0
        %4324 = vmatprep.subr.mxu0 0.0
        %4325 = vmatpush1.msra.mxu0 %v4298
        %4326 = vmatprep.subr.mxu0 0.0
        %4327 = vmatpush1.msra.mxu0 %v4299
        %4328 = vmatprep.subr.mxu0 0.0
        %4329 = vmatpush1.msra.mxu0 %v4300
        %4330 = vmatprep.subr.mxu0 0.0
        %4331 = vmatpush1.msra.mxu0 %v4301
        %4332 = vmatprep.subr.mxu0 0.0
        %4333 = vmatpush1.msra.mxu0 %v4302
        %4334 = vmatprep.subr.mxu0 0.0
        %4335 = vmatpush1.msra.mxu0 %v4303
        %4336 = vmatprep.subr.mxu0 0.0
        %4337 = vmatpush1.msra.mxu0 %v4304
        %4338 = vmatprep.subr.mxu0 0.0
        %4339 = vmatpush1.msra.mxu0 %v4305
        %4340 = vmatprep.subr.mxu0 0.0
        %4341 = vmatpush1.msra.mxu0 %v4306
        %4342 = vmatprep.subr.mxu0 0.0
        %4343 = vmatpush1.msra.mxu0 %v4307
        %4344 = vmatprep.subr.mxu0 0.0
        %4345 = vmatpush1.msra.mxu0 %v4308
        %4346 = vmatprep.subr.mxu0 0.0
        %4347 = vmatpush1.msra.mxu0 %v4309
        %4348 = vmatprep.subr.mxu0 0.0
        %4349 = vmatpush1.msra.mxu0 %v4310
        %4350 = vmatprep.subr.mxu0 0.0
        %4351 = vmatpush1.msra.mxu0 %v4311
        %4352 = vmatprep.subr.mxu0 0.0
        %4353 = vmatpush1.msra.mxu0 %v4312
        %4354 = vmatprep.subr.mxu0 0.0
        %4355 = vmatpush1.msra.mxu0 0.0
        %4356 = vmatprep.subr.mxu0 0.0
        %4357 = vmatpush1.msra.mxu0 0.0
        %4358 = vmatprep.subr.mxu0 0.0
        %4359 = vmatpush1.msra.mxu0 0.0
        %4360 = vmatprep.subr.mxu0 0.0
        %4361 = vmatpush1.msra.mxu0 0.0
        %4362 = vmatprep.subr.mxu0 0.0
        %4363 = vmatpush1.msra.mxu0 0.0
        %4364 = vmatprep.subr.mxu0 0.0
        %4365 = vmatpush1.msra.mxu0 0.0
        %4366 = vmatprep.subr.mxu0 0.0
        %4367 = vmatpush1.msra.mxu0 0.0
        %4368 = vmatprep.subr.mxu0 0.0
        %4369 = vmatpush1.msra.mxu0 0.0
        %4370 = vmatprep.subr.mxu0 0.0
        %4371 = vmatpush1.msra.mxu0 0.0
        %4372 = vmatprep.subr.mxu0 0.0
        %4373 = vmatpush1.msra.mxu0 0.0
        %4374 = vmatprep.subr.mxu0 0.0
        %4375 = vmatpush1.msra.mxu0 0.0
        %4376 = vmatprep.subr.mxu0 0.0
        %4377 = vmatpush1.msra.mxu0 0.0
        %4378 = vmatprep.subr.mxu0 0.0
        %4379 = vmatpush1.msra.mxu0 0.0
        %4380 = vmatprep.subr.mxu0 0.0
        %4381 = vmatpush1.msra.mxu0 0.0
        %4382 = vmatprep.subr.mxu0 0.0
        %4383 = vmatpush1.msra.mxu0 0.0
        %4384 = vmatprep.subr.mxu0 0.0
        %4385 = vmatpush1.msra.mxu0 0.0
        %4386 = vmatprep.subr.mxu0 0.0
        %4387 = vmatpush1.msra.mxu0 0.0
        %4388 = vmatprep.mubr.f32.mxu0 0.0
        %4389 = vmatmul.mubr.f32.gmra.mrb[0].mxu0 %v4322
        %v4390 = vpop.f32.mrb[0].mxu0
        %v4391 = vadd.f32 %v4318, %v4390
        %v4392 = vpop.f32.mrb[0].mxu0
        %4393 = vdwg.mxu0
        %v4394 = vtanh.pop %v4391
        %v4395 = vld [vmem:[%s13] sm:$0xff]
        %v4396 = vld [vmem:[%s13 + $0x8] sm:$0xff]
        %v4397 = vld [vmem:[%s13 + $0x10] sm:$0xff]
        %v4398 = vld [vmem:[%s13 + $0x18] sm:$0xff]
        %v4399 = vld [vmem:[%s13 + $0x20] sm:$0xff]
        %v4400 = vld [vmem:[%s13 + $0x28] sm:$0xff]
        %v4401 = vld [vmem:[%s13 + $0x30] sm:$0xff]
        %v4402 = vld [vmem:[%s13 + $0x38] sm:$0xff]
        %v4403 = vld [vmem:[%s13 + $0x40] sm:$0xff]
        %v4404 = vld [vmem:[%s13 + $0x48] sm:$0xff]
        %v4405 = vld [vmem:[%s13 + $0x50] sm:$0xf]
        %v4406 = vld [vmem:[%s14] sm:$0x1]
        %v4408 = vlaneseq
        %v4409 = vshrl.u32 %v4408, 7
        %v4410 = vsub.s32 0, %v4409
        %v4411 = vrot.slane %v4406, %v4410
        %v4414 = vsel %vm2762, %v4394, 0
        %v4417 = vsel %vm2623, %v4405, 0
        %4419 = vmatprep.subr.mxu0 0.0
        %4420 = vmatpush1.msra.mxu0 %v4395
        %4421 = vmatprep.subr.mxu0 0.0
        %4422 = vmatpush1.msra.mxu0 %v4396
        %4423 = vmatprep.subr.mxu0 0.0
        %4424 = vmatpush1.msra.mxu0 %v4397
        %4425 = vmatprep.subr.mxu0 0.0
        %4426 = vmatpush1.msra.mxu0 %v4398
        %4427 = vmatprep.subr.mxu0 0.0
        %4428 = vmatpush1.msra.mxu0 %v4399
        %4429 = vmatprep.subr.mxu0 0.0
        %4430 = vmatpush1.msra.mxu0 %v4400
        %4431 = vmatprep.subr.mxu0 0.0
        %4432 = vmatpush1.msra.mxu0 %v4401
        %4433 = vmatprep.subr.mxu0 0.0
        %4434 = vmatpush1.msra.mxu0 %v4402
        %4435 = vmatprep.subr.mxu0 0.0
        %4436 = vmatpush1.msra.mxu0 %v4403
        %4437 = vmatprep.subr.mxu0 0.0
        %4438 = vmatpush1.msra.mxu0 %v4404
        %4439 = vmatprep.subr.mxu0 0.0
        %4440 = vmatpush1.msra.mxu0 %v4417
        %4441 = vmatprep.subr.mxu0 0.0
        %4442 = vmatpush1.msra.mxu0 0.0
        %4443 = vmatprep.subr.mxu0 0.0
        %4444 = vmatpush1.msra.mxu0 0.0
        %4445 = vmatprep.subr.mxu0 0.0
        %4446 = vmatpush1.msra.mxu0 0.0
        %4447 = vmatprep.subr.mxu0 0.0
        %4448 = vmatpush1.msra.mxu0 0.0
        %4449 = vmatprep.subr.mxu0 0.0
        %4450 = vmatpush1.msra.mxu0 0.0
        %4451 = vmatprep.subr.mxu0 0.0
        %4452 = vmatpush1.msra.mxu0 0.0
        %4453 = vmatprep.subr.mxu0 0.0
        %4454 = vmatpush1.msra.mxu0 0.0
        %4455 = vmatprep.subr.mxu0 0.0
        %4456 = vmatpush1.msra.mxu0 0.0
        %4457 = vmatprep.subr.mxu0 0.0
        %4458 = vmatpush1.msra.mxu0 0.0
        %4459 = vmatprep.subr.mxu0 0.0
        %4460 = vmatpush1.msra.mxu0 0.0
        %4461 = vmatprep.subr.mxu0 0.0
        %4462 = vmatpush1.msra.mxu0 0.0
        %4463 = vmatprep.subr.mxu0 0.0
        %4464 = vmatpush1.msra.mxu0 0.0
        %4465 = vmatprep.subr.mxu0 0.0
        %4466 = vmatpush1.msra.mxu0 0.0
        %4467 = vmatprep.subr.mxu0 0.0
        %4468 = vmatpush1.msra.mxu0 0.0
        %4469 = vmatprep.subr.mxu0 0.0
        %4470 = vmatpush1.msra.mxu0 0.0
        %4471 = vmatprep.subr.mxu0 0.0
        %4472 = vmatpush1.msra.mxu0 0.0
        %4473 = vmatprep.subr.mxu0 0.0
        %4474 = vmatpush1.msra.mxu0 0.0
        %4475 = vmatprep.subr.mxu0 0.0
        %4476 = vmatpush1.msra.mxu0 0.0
        %4477 = vmatprep.subr.mxu0 0.0
        %4478 = vmatpush1.msra.mxu0 0.0
        %4479 = vmatprep.subr.mxu0 0.0
        %4480 = vmatpush1.msra.mxu0 0.0
        %4481 = vmatprep.subr.mxu0 0.0
        %4482 = vmatpush1.msra.mxu0 0.0
        %4483 = vmatprep.mubr.f32.mxu0 0.0
        %4484 = vmatmul.mubr.f32.gmra.mrb[0].mxu0 %v4414
        %v4485 = vpop.f32.mrb[0].mxu0
        %v4486 = vadd.f32 %v4411, %v4485
        %v4487 = vpop.f32.mrb[0].mxu0
        %4488 = vdwg.mxu0
        %vm4489 = vcmask 80896
        %4490 = vst.msk [vmem:[%s488] sm:$0xff] %vm4489, %v4486
        %s4491 = sand.u32 %s357, 1
        %s4492 = scalar_lea.sflag [#allocation8], %s4491
        %s4493 = sand.u32 %s357, 1
        %s4494 = smul.addr %s4493, 8
        %s4495 = scalar_lea.vmem [#allocation7], %s4494
        // Predicated region
        $region81: #{lenet5_forward.1} parent=79 // pred_check
          %p4496 = pneg %p367
        $region82: #{lenet5_forward.1} parent=79 // pred_check_branch
          %4498 = sbr.rel (%p4496) target = $region84
        $region83: #{lenet5_forward.1} parent=79 // pred_region
          %s4500 = ssub.s32 128, 128
          %4501 = vsyncadd %s4492, %s4500
          %s4502 = smul.addr %s29, 128
          %s4503 = scalar_lea.hbm %s15, %s4502
          %s4505 = sshll.u32 %s4495, 4
          %s4506 = int_to_ptr.vmem [resolvable:$true] %s4505
          %4508 = dma.vmem_to_hbm [thread:$0]  %s4506, 128, %s4503, %s4492
        $region84: #{lenet5_forward.1} parent=79 // pred_fallthru
          _
      $region80: #{lenet5_forward.1} parent=5 // pred_fallthru
        _
      %p4509 = scmp.le.s32.totalorder 2, %s24
      // Predicated region
      $region85: #{lenet5_forward.1} parent=5 // pred_check
        %p4510 = pneg %p4509
      $region86: #{lenet5_forward.1} parent=5 // pred_check_branch
        %4512 = sbr.rel (%p4510) target = $region88
      $region87: #{lenet5_forward.1} parent=5 // pred_region
        %s4513 = ssub.s32 %s24, 2
        // Predicated region
        $region89: #{lenet5_forward.1} parent=87 // pred_check
          %p4514 = pneg %p373
        $region90: #{lenet5_forward.1} parent=87 // pred_check_branch
          %4516 = sbr.rel (%p4514) target = $region92
        $region91: #{lenet5_forward.1} parent=87 // pred_region
          %s4517 = sand.u32 %s358, 1
          %s4518 = scalar_lea.sflag [#allocation8], %s4517
          %s4519 = sand.u32 %s358, 1
          %s4520 = smul.addr %s4519, 8
          %s4521 = scalar_lea.vmem [#allocation7], %s4520
          %4522 = dma.done %s4518, 128
        $region92: #{lenet5_forward.1} parent=87 // pred_fallthru
          _
      $region88: #{lenet5_forward.1} parent=5 // pred_fallthru
        _
    $region6: #{lenet5_forward.1} parent=1 // loop_footer
      %s28 = sadd.s32 1, %s24
    $region7: #{lenet5_forward.1} parent=1 // loop_footer_branch
      %23 = sbr.rel target = $region3
    $region8: #{lenet5_forward.1} parent=1 // loop_exit
      _
    %4523 = vsyncpa [#allocation8], 1
    %s4524 = scalar_lea.sflag [#allocation8], 1
    %4525 = vsyncpa %s4524, 1

</llo_original>
